<compile_context>
chip_gen: v7x
topology: tpu7x:2x2x1
jax: 0.10.0
libtpu: 0.0.40
codegen_flags: <defaults>
</compile_context>

<pallas_src>
import numpy as np
import jax
import jax.numpy as jnp
from jax.experimental import pallas as pl
from jax.experimental.pallas import tpu as pltpu

N_MAP = 128        # config['n_map'] (real LaneGCN value; lane-friendly)
NUM_NODES = 64     # small synthetic graph
NUM_SCALES = 2     # config['num_scales'] (small)
NUM_FUSE = 4       # fixed in the module (for i in range(4))
EDGES_PER_KEY = 96


# -----------------------------------------------------------------------------
# Pallas kernel: one fuse layer per grid step; encoders under pl.when(i == 0).
# -----------------------------------------------------------------------------
def mapnet_kernel(xy_ref, encvec_ref, wenc_ref, adj_ref, pmat_ref,
                  wall_ref, gnp_ref, out_ref):
    f32, bf16 = jnp.float32, jnp.bfloat16
    eps = jnp.float32(1e-5)
    n_edge = adj_ref.shape[0]

    def row(ref, r):                 # one [1, c] per-channel vector
        return ref[r:r + 1, :]

    def mmb(a, w_bf16):              # bf16 MXU matmul, f32 accumulate
        return jnp.dot(a.astype(bf16), w_bf16, preferred_element_type=f32)

    def gn1(x, w, b):                # GroupNorm(1, c): per node, biased var
        mean = jnp.mean(x, axis=-1, keepdims=True)
        xc = x - mean
        var = jnp.mean(xc * xc, axis=-1, keepdims=True)
        return xc * jax.lax.rsqrt(var + eps) * w + b

    def gn_grouped(x, w, b):         # GroupNorm(16, c) via bf16 averaging proj P
        p = pmat_ref[...]            # [c, c] bf16, block-diagonal 1/group_size
        mean = mmb(x, p)
        xc = x - mean
        var = mmb(xc * xc, p)
        return xc * jax.lax.rsqrt(var + eps) * w + b

    # ---- encoders: only on the first grid step; result seeds the resident
    #      output block which doubles as the feat/res carry across layers.
    @pl.when(pl.program_id(0) == 0)
    def _encode():
        xy = xy_ref[...]             # [n, 4] = [ctr_x, ctr_y, feat_x, feat_y]
        h = jnp.maximum(xy[:, 0:1] * row(encvec_ref, 6)
                        + xy[:, 1:2] * row(encvec_ref, 7)
                        + row(encvec_ref, 0), 0.0)
        h = gn1(mmb(h, wenc_ref[0]), row(encvec_ref, 1), row(encvec_ref, 2))
        s = jnp.maximum(xy[:, 2:3] * row(encvec_ref, 8)
                        + xy[:, 3:4] * row(encvec_ref, 9)
                        + row(encvec_ref, 3), 0.0)
        s = gn1(mmb(s, wenc_ref[1]), row(encvec_ref, 4), row(encvec_ref, 5))
        out_ref[...] = jnp.maximum(h + s, 0.0)   # feat = relu(input + seg)

    # ---- one fuse layer (weights for this layer streamed via wall_ref/gnp_ref)
    res = out_ref[...]               # feat entering the layer == residual
    feat_bf = res.astype(bf16)

    # fuse['ctr'][i](feat)
    temp = jnp.dot(feat_bf, wall_ref[0], preferred_element_type=f32)
    # index_add over each edge key == dense adjacency matmul, accumulated
    for e in range(n_edge):
        fw = jnp.dot(feat_bf, wall_ref[1 + e], preferred_element_type=f32)
        temp = temp + jnp.dot(adj_ref[e], fw.astype(bf16),
                              preferred_element_type=f32)

    # fuse['norm'][i]: GroupNorm(16, c) -> ReLU
    x = jnp.maximum(gn_grouped(temp, row(gnp_ref, 0), row(gnp_ref, 1)), 0.0)
    # fuse['ctr2'][i]: Linear(no bias) + GroupNorm(1, c), no activation
    x = gn1(mmb(x, wall_ref[1 + n_edge]), row(gnp_ref, 2), row(gnp_ref, 3))
    out_ref[...] = jnp.maximum(x + res, 0.0)


# -----------------------------------------------------------------------------
# One-time packing (hoisted out of the forward path).
# -----------------------------------------------------------------------------
def pack_params(p, nf, n_edge):
    f32, bf16 = jnp.float32, jnp.bfloat16
    # encoder vectors: 0 b_in1, 1 gn_in_w, 2 gn_in_b, 3 b_seg1, 4 gn_seg_w,
    #                  5 gn_seg_b, 6-7 w_in1 rows, 8-9 w_seg1 rows
    encvec = jnp.concatenate([
        p['b_in1'], p['gn_in_w'], p['gn_in_b'],
        p['b_seg1'], p['gn_seg_w'], p['gn_seg_b'],
        p['w_in1'], p['w_seg1'],
    ], axis=0).astype(f32)                                     # [10, c]
    wenc = jnp.stack([p['w_in2'], p['w_seg2']]).astype(bf16)   # [2, c, c]
    # per layer: [W_ctr, W_e0..W_e5, W_ctr2] stacked -> streamed per grid step
    wall = jnp.stack([
        jnp.stack([p['w_ctr'][i]]
                  + [p['w_edge'][i * n_edge + e] for e in range(n_edge)]
                  + [p['w_ctr2'][i]])
        for i in range(nf)]).astype(bf16)                      # [nf, 2+n_edge, c, c]
    gnp = jnp.stack([
        jnp.concatenate([p['gn_w'][i], p['gn_b'][i],
                         p['gn2_w'][i], p['gn2_b'][i]], axis=0)
        for i in range(nf)]).astype(f32)                       # [nf, 4, c]
    pmat = p['pmat'].astype(bf16)                              # [c, c]
    return dict(encvec=encvec, wenc=wenc, wall=wall, gnp=gnp, pmat=pmat)


def pack_graph(ctrs, feats, adj_dense):
    """Pad nodes only to the sublane/packing requirement (16) and cast the
    dense adjacency to bf16 (small integer counts are exact)."""
    n = ctrs.shape[0]
    n_edge = adj_dense.shape[0]
    n_pad = ((n + 15) // 16) * 16
    xy = (jnp.zeros((n_pad, 4), jnp.float32)
          .at[:n, 0:2].set(ctrs).at[:n, 2:4].set(feats))
    # TODO(synk): dense O(N^2) adjacency blows VMEM for real LaneGCN graphs
    # (v7x's 64 MiB first); switch to scalar-prefetch CSR row-gather /
    # block-sparse node-row tiling with a 'parallel' row-tile grid axis (which
    # also engages the second v7x TensorCore).
    adjp = (jnp.zeros((n_edge, n_pad, n_pad), jnp.float32)
            .at[:, :n, :n].set(adj_dense)).astype(jnp.bfloat16)
    return xy, adjp


# -----------------------------------------------------------------------------
# Jitted forward: a single pallas_call with a 1-D grid over the fuse layers.
# -----------------------------------------------------------------------------
@jax.jit
def mapnet_pallas(xy, adjp, pk):
    n_pad = xy.shape[0]
    c = pk['encvec'].shape[1]
    n_enc = pk['encvec'].shape[0]
    n_edge = adjp.shape[0]
    nf = pk['wall'].shape[0]
    grid_spec = pltpu.PrefetchScalarGridSpec(
        num_scalar_prefetch=0,
        grid=(nf,),
        in_specs=[
            pl.BlockSpec((n_pad, 4), lambda i: (0, 0)),                # xy (once)
            pl.BlockSpec((n_enc, c), lambda i: (0, 0)),                # encvec (once)
            pl.BlockSpec((2, c, c), lambda i: (0, 0, 0)),              # wenc (once)
            pl.BlockSpec((n_edge, n_pad, n_pad), lambda i: (0, 0, 0)), # adjacency (once)
            pl.BlockSpec((c, c), lambda i: (0, 0)),                    # pmat (once)
            pl.BlockSpec((None, 2 + n_edge, c, c),
                         lambda i: (i, 0, 0, 0)),                      # wall[i] streamed
            pl.BlockSpec((None, 4, c), lambda i: (i, 0, 0)),           # gnp[i] streamed
        ],
        out_specs=pl.BlockSpec((n_pad, c), lambda i: (0, 0)),          # resident feat/res
    )
    return pl.pallas_call(
        mapnet_kernel,
        out_shape=jax.ShapeDtypeStruct((n_pad, c), jnp.float32),
        grid_spec=grid_spec,
        compiler_params=pltpu.CompilerParams(
            dimension_semantics=("arbitrary",)),
    )(xy, pk['encvec'], pk['wenc'], adjp, pk['pmat'], pk['wall'], pk['gnp'])


def mapnet_forward(ctrs, xy, adjp, packed):
    n = ctrs.shape[0]
    feat = mapnet_pallas(xy, adjp, packed)[:n]
    # Module also returns (node_idcs, node_ctrs) as pure pass-through.
    # TODO(synk): the empty-graph early-return branch of the module (dynamic,
    # data-dependent shapes) is handled by the caller, not the kernel.
    node_idcs = [jnp.arange(n, dtype=jnp.int32)]
    return feat, node_idcs, ctrs


# -----------------------------------------------------------------------------
# Deterministic parameter init (shapes from MapNet.__init__).
# -----------------------------------------------------------------------------
def init_params(key, n_map, num_scales, num_fuse):
    n_edge = 2 * num_scales + 2
    keys = iter(jax.random.split(key, 128))
    nk = lambda: next(keys)

    def lin(k, n_in, n_out):  # PyTorch-style uniform(-1/sqrt(in), 1/sqrt(in)), stored [in, out]
        lim = 1.0 / np.sqrt(n_in)
        return jax.random.uniform(k, (n_in, n_out), jnp.float32, -lim, lim)

    def gn_pair(k, shape):
        k1, k2 = jax.random.split(k)
        w = 1.0 + 0.1 * jax.random.normal(k1, shape, jnp.float32)
        b = 0.1 * jax.random.normal(k2, shape, jnp.float32)
        return w, b

    p = {}
    lim2 = 1.0 / np.sqrt(2.0)
    p['w_in1'] = lin(nk(), 2, n_map)
    p['b_in1'] = jax.random.uniform(nk(), (1, n_map), jnp.float32, -lim2, lim2)
    p['w_in2'] = lin(nk(), n_map, n_map)
    p['gn_in_w'], p['gn_in_b'] = gn_pair(nk(), (1, n_map))
    p['w_seg1'] = lin(nk(), 2, n_map)
    p['b_seg1'] = jax.random.uniform(nk(), (1, n_map), jnp.float32, -lim2, lim2)
    p['w_seg2'] = lin(nk(), n_map, n_map)
    p['gn_seg_w'], p['gn_seg_b'] = gn_pair(nk(), (1, n_map))

    p['w_ctr'] = jnp.stack([lin(nk(), n_map, n_map) for _ in range(num_fuse)])
    p['w_edge'] = jnp.stack([lin(nk(), n_map, n_map) for _ in range(num_fuse * n_edge)])
    gnw, gnb = zip(*[gn_pair(nk(), (1, n_map)) for _ in range(num_fuse)])
    p['gn_w'], p['gn_b'] = jnp.stack(gnw), jnp.stack(gnb)
    p['w_ctr2'] = jnp.stack([lin(nk(), n_map, n_map) for _ in range(num_fuse)])
    g2w, g2b = zip(*[gn_pair(nk(), (1, n_map)) for _ in range(num_fuse)])
    p['gn2_w'], p['gn2_b'] = jnp.stack(g2w), jnp.stack(g2b)

    # Fuse 'norm' GroupNorm group count (spec: 16 if n_map % 16 == 0 else 1).
    groups = 16 if n_map % 16 == 0 else 1
    gsz = n_map // groups
    pmat = np.zeros((n_map, n_map), np.float32)   # block-diag group-averaging projection
    for g in range(groups):
        pmat[g * gsz:(g + 1) * gsz, g * gsz:(g + 1) * gsz] = 1.0 / gsz
    p['pmat'] = jnp.asarray(pmat)
    return p, groups


# -----------------------------------------------------------------------------
# Pure-JAX references (real gather + index_add semantics) for validation.
# bf16_matmul=True applies the same operand rounding as the kernel (including
# the bf16 GroupNorm averaging projection).
# -----------------------------------------------------------------------------
def group_norm_ref(x, w, b, groups, eps=1e-5):
    n, c = x.shape
    xg = x.reshape(n, groups, c // groups)
    mean = xg.mean(axis=-1, keepdims=True)
    var = ((xg - mean) ** 2).mean(axis=-1, keepdims=True)
    xn = ((xg - mean) * jax.lax.rsqrt(var + eps)).reshape(n, c)
    return xn * w.reshape(1, c) + b.reshape(1, c)


def group_norm_proj_bf16_ref(x, pmat, w, b, eps=1e-5):
    # mirrors the kernel's bf16-operand averaging-projection grouped GroupNorm
    f32, bf16 = jnp.float32, jnp.bfloat16
    pb = pmat.astype(bf16)
    mean = jnp.dot(x.astype(bf16), pb, preferred_element_type=f32)
    xc = x - mean
    var = jnp.dot((xc * xc).astype(bf16), pb, preferred_element_type=f32)
    return xc * jax.lax.rsqrt(var + eps) * w.reshape(1, -1) + b.reshape(1, -1)


def mapnet_ref(ctrs, feats, edges_uv, p, groups_fuse, *, bf16_matmul=False):
    f32, bf16 = jnp.float32, jnp.bfloat16

    def mm(a, b):
        if bf16_matmul:
            return jnp.dot(a.astype(bf16), b.astype(bf16), preferred_element_type=f32)
        return jnp.dot(a, b, preferred_element_type=f32)

    def gn_fuse(x, w, b):
        if bf16_matmul:
            return group_norm_proj_bf16_ref(x, p['pmat'], w, b)
        return group_norm_ref(x, w, b, groups_fuse)

    # K=2 encoder layers stay f32 (the kernel computes them on the VPU in f32).
    h = jax.nn.relu(ctrs @ p['w_in1'] + p['b_in1'])
    h = group_norm_ref(mm(h, p['w_in2']), p['gn_in_w'], p['gn_in_b'], 1)
    s = jax.nn.relu(feats @ p['w_seg1'] + p['b_seg1'])
    s = group_norm_ref(mm(s, p['w_seg2']), p['gn_seg_w'], p['gn_seg_b'], 1)
    feat = jax.nn.relu(h + s)
    res = feat
    n_edge = len(edges_uv)
    for i in range(NUM_FUSE):
        temp = mm(feat, p['w_ctr'][i])
        for e, (u, v) in enumerate(edges_uv):
            fw = mm(feat, p['w_edge'][i * n_edge + e])
            if bf16_matmul:
                # kernel requantizes the per-edge transform to bf16 before the
                # adjacency matmul
                fw = fw.astype(bf16).astype(f32)
            temp = temp.at[u].add(fw[v])
        feat = jax.nn.relu(gn_fuse(temp, p['gn_w'][i], p['gn_b'][i]))
        feat = group_norm_ref(mm(feat, p['w_ctr2'][i]), p['gn2_w'][i], p['gn2_b'][i], 1)
        feat = jax.nn.relu(feat + res)
        res = feat
    return feat


if __name__ == "__main__":
    key = jax.random.PRNGKey(0)
    k_ctr, k_feat, k_edge, k_param = jax.random.split(key, 4)

    # graph['ctrs'], graph['feats']: [num_nodes, 2]
    ctrs = jax.random.normal(k_ctr, (NUM_NODES, 2), jnp.float32)
    feats = jax.random.normal(k_feat, (NUM_NODES, 2), jnp.float32)

    # Edge keys in the same order the PyTorch dict iterates: pre/suc per scale,
    # then left, right.
    edge_keys = []
    for i in range(NUM_SCALES):
        edge_keys += [f"pre{i}", f"suc{i}"]
    edge_keys += ["left", "right"]
    n_edge = len(edge_keys)

    k_edges = jax.random.split(k_edge, 2 * n_edge)
    adj_np = np.zeros((n_edge, NUM_NODES, NUM_NODES), np.float32)
    edges_uv = []
    for e in range(n_edge):
        u = np.asarray(jax.random.randint(k_edges[2 * e], (EDGES_PER_KEY,), 0, NUM_NODES))
        v = np.asarray(jax.random.randint(k_edges[2 * e + 1], (EDGES_PER_KEY,), 0, NUM_NODES))
        np.add.at(adj_np[e], (u, v), 1.0)
        edges_uv.append((jnp.asarray(u), jnp.asarray(v)))
    assert adj_np.max() <= 256, "bf16 adjacency counts exact only up to 256 duplicates"
    adj = jnp.asarray(adj_np)

    params, groups_fuse = init_params(k_param, N_MAP, NUM_SCALES, NUM_FUSE)

    # One-time packing (hoisted out of the forward path).
    packed = pack_params(params, NUM_FUSE, n_edge)
    xy, adjp = pack_graph(ctrs, feats, adj)

    # Run the Pallas kernel.
    feat_out, node_idcs, node_ctrs = mapnet_forward(ctrs, xy, adjp, packed)
    feat_out = jax.block_until_ready(feat_out)
    out = np.asarray(feat_out)

    assert out.shape == (NUM_NODES, N_MAP)
    assert np.all(np.isfinite(out))

    # (1) Tight check vs. a JAX reference that applies the same bf16 operand
    #     rounding (weights, per-edge requantization, GN projection) ->
    #     verifies the kernel computes the intended math.  Tolerance leaves
    #     margin only for accumulation-order / rounding-boundary differences.
    ref_bf16 = np.asarray(mapnet_ref(ctrs, feats, edges_uv, params, groups_fuse,
                                     bf16_matmul=True))
    assert np.allclose(out, ref_bf16, rtol=1e-2, atol=1e-2), (
        f"bf16-ref max abs err {np.max(np.abs(out - ref_bf16))}")

    # (2) Fidelity check vs. the pure-f32 module semantics (bf16 MXU quantization
    #     noise only).
    ref_f32 = np.asarray(mapnet_ref(ctrs, feats, edges_uv, params, groups_fuse,
                                    bf16_matmul=False))
    rel_fro = np.linalg.norm(out - ref_f32) / np.linalg.norm(ref_f32)
    assert rel_fro < 3e-2, f"relative Frobenius error {rel_fro}"
    assert np.mean(np.abs(out - ref_f32)) < 3e-2

    print("KERNEL_OK")
</pallas_src>

<mosaic_0001>
module attributes {stable_mosaic.version = 11 : i64} {
  func.func @mapnet_kernel(%arg0: i32, %arg1: memref<64x4xf32, #tpu.memory_space<vmem>>, %arg2: memref<10x128xf32, #tpu.memory_space<vmem>>, %arg3: memref<2x128x128xbf16, #tpu.memory_space<vmem>>, %arg4: memref<6x64x64xbf16, #tpu.memory_space<vmem>>, %arg5: memref<128x128xbf16, #tpu.memory_space<vmem>>, %arg6: memref<1x8x128x128xbf16, #tpu.memory_space<vmem>>, %arg7: memref<1x4x128xf32, #tpu.memory_space<vmem>>, %arg8: memref<64x128xf32, #tpu.memory_space<vmem>>) attributes {dimension_semantics = [#tpu.dimension_semantics<arbitrary>], iteration_bounds = array<i64: 4>, scalar_prefetch = 0 : i64, scratch_operands = 0 : i64, tpu.core_type = #tpu.core_type<tc>, window_params = [{pipeline_mode = #tpu.pipeline_mode<synchronous>, transform_indices = @transform_0, window_bounds = array<i64: 64, 4>}, {pipeline_mode = #tpu.pipeline_mode<synchronous>, transform_indices = @transform_1, window_bounds = array<i64: 10, 128>}, {pipeline_mode = #tpu.pipeline_mode<synchronous>, transform_indices = @transform_2, window_bounds = array<i64: 2, 128, 128>}, {pipeline_mode = #tpu.pipeline_mode<synchronous>, transform_indices = @transform_3, window_bounds = array<i64: 6, 64, 64>}, {pipeline_mode = #tpu.pipeline_mode<synchronous>, transform_indices = @transform_4, window_bounds = array<i64: 128, 128>}, {transform_indices = @transform_5, window_bounds = array<i64: 1, 8, 128, 128>}, {transform_indices = @transform_6, window_bounds = array<i64: 1, 4, 128>}, {pipeline_mode = #tpu.pipeline_mode<synchronous>, transform_indices = @transform_7, window_bounds = array<i64: 64, 128>}]} {
    %c0_i32 = arith.constant 0 : i32
    %0 = arith.cmpi eq, %arg0, %c0_i32 : i32
    %1 = arith.extui %0 : i1 to i32
    %cst = arith.constant 9.99999974E-6 : f32
    %c0_i32_0 = arith.constant 0 : i32
    %2 = arith.cmpi ne, %1, %c0_i32_0 : i32
    scf.if %2 {
      %c0_85 = arith.constant 0 : index
      %c0_86 = arith.constant 0 : index
      %109 = vector.load %arg1[%c0_85, %c0_86] : memref<64x4xf32, #tpu.memory_space<vmem>>, vector<64x4xf32>
      %110 = vector.extract_strided_slice %109 {offsets = [0, 0], sizes = [64, 1], strides = [1, 1]} : vector<64x4xf32> to vector<64x1xf32>
      %c6_87 = arith.constant 6 : index
      %c0_88 = arith.constant 0 : index
      %111 = vector.load %arg2[%c6_87, %c0_88] : memref<10x128xf32, #tpu.memory_space<vmem>>, vector<1x128xf32>
      %112 = vector.broadcast %110 : vector<64x1xf32> to vector<64x128xf32>
      %113 = vector.broadcast %111 : vector<1x128xf32> to vector<64x128xf32>
      %114 = arith.mulf %112, %113 : vector<64x128xf32>
      %115 = vector.extract_strided_slice %109 {offsets = [0, 1], sizes = [64, 1], strides = [1, 1]} : vector<64x4xf32> to vector<64x1xf32>
      %c7_89 = arith.constant 7 : index
      %c0_90 = arith.constant 0 : index
      %116 = vector.load %arg2[%c7_89, %c0_90] : memref<10x128xf32, #tpu.memory_space<vmem>>, vector<1x128xf32>
      %117 = vector.broadcast %115 : vector<64x1xf32> to vector<64x128xf32>
      %118 = vector.broadcast %116 : vector<1x128xf32> to vector<64x128xf32>
      %119 = arith.mulf %117, %118 : vector<64x128xf32>
      %120 = arith.addf %114, %119 : vector<64x128xf32>
      %c0_91 = arith.constant 0 : index
      %c0_92 = arith.constant 0 : index
      %121 = vector.load %arg2[%c0_91, %c0_92] : memref<10x128xf32, #tpu.memory_space<vmem>>, vector<1x128xf32>
      %122 = vector.broadcast %121 : vector<1x128xf32> to vector<64x128xf32>
      %123 = arith.addf %120, %122 : vector<64x128xf32>
      %cst_93 = arith.constant 0.000000e+00 : f32
      %124 = vector.broadcast %cst_93 : f32 to vector<64x128xf32>
      %125 = arith.maximumf %123, %124 : vector<64x128xf32>
      %c0_94 = arith.constant 0 : index
      %c0_95 = arith.constant 0 : index
      %c0_96 = arith.constant 0 : index
      %126 = vector.load %arg3[%c0_94, %c0_95, %c0_96] : memref<2x128x128xbf16, #tpu.memory_space<vmem>>, vector<1x128x128xbf16>
      %127 = vector.shape_cast %126 : vector<1x128x128xbf16> to vector<128x128xbf16>
      %128 = arith.truncf %125 : vector<64x128xf32> to vector<64x128xbf16>
      %cst_97 = arith.constant dense<0.000000e+00> : vector<64x128xf32>
      %129 = tpu.matmul %128, %127, %cst_97 {dimension_numbers = #tpu.dot_dimension_numbers<[1], [0], [0], [1], [0, 0, 1, 1], [], []>} : vector<64x128xbf16>, vector<128x128xbf16>, vector<64x128xf32> -> vector<64x128xf32>
      %c1_98 = arith.constant 1 : index
      %c0_99 = arith.constant 0 : index
      %130 = vector.load %arg2[%c1_98, %c0_99] : memref<10x128xf32, #tpu.memory_space<vmem>>, vector<1x128xf32>
      %c2_100 = arith.constant 2 : index
      %c0_101 = arith.constant 0 : index
      %131 = vector.load %arg2[%c2_100, %c0_101] : memref<10x128xf32, #tpu.memory_space<vmem>>, vector<1x128xf32>
      %cst_102 = arith.constant dense<0.000000e+00> : vector<64xf32>
      %132 = vector.multi_reduction <add>, %129, %cst_102 [1] : vector<64x128xf32> to vector<64xf32>
      %133 = vector.shape_cast %132 : vector<64xf32> to vector<64x1xf32>
      %cst_103 = arith.constant 1.280000e+02 : f32
      %134 = vector.broadcast %cst_103 : f32 to vector<64x1xf32>
      %135 = arith.divf %133, %134 : vector<64x1xf32>
      %136 = vector.broadcast %135 : vector<64x1xf32> to vector<64x128xf32>
      %137 = arith.subf %129, %136 : vector<64x128xf32>
      %138 = arith.mulf %137, %137 : vector<64x128xf32>
      %cst_104 = arith.constant dense<0.000000e+00> : vector<64xf32>
      %139 = vector.multi_reduction <add>, %138, %cst_104 [1] : vector<64x128xf32> to vector<64xf32>
      %140 = vector.shape_cast %139 : vector<64xf32> to vector<64x1xf32>
      %cst_105 = arith.constant 1.280000e+02 : f32
      %141 = vector.broadcast %cst_105 : f32 to vector<64x1xf32>
      %142 = arith.divf %140, %141 : vector<64x1xf32>
      %143 = vector.broadcast %cst : f32 to vector<64x1xf32>
      %144 = arith.addf %142, %143 : vector<64x1xf32>
      %145 = math.rsqrt %144 : vector<64x1xf32>
      %146 = vector.broadcast %145 : vector<64x1xf32> to vector<64x128xf32>
      %147 = arith.mulf %137, %146 : vector<64x128xf32>
      %148 = vector.broadcast %130 : vector<1x128xf32> to vector<64x128xf32>
      %149 = arith.mulf %147, %148 : vector<64x128xf32>
      %150 = vector.broadcast %131 : vector<1x128xf32> to vector<64x128xf32>
      %151 = arith.addf %149, %150 : vector<64x128xf32>
      %152 = vector.extract_strided_slice %109 {offsets = [0, 2], sizes = [64, 1], strides = [1, 1]} : vector<64x4xf32> to vector<64x1xf32>
      %c8 = arith.constant 8 : index
      %c0_106 = arith.constant 0 : index
      %153 = vector.load %arg2[%c8, %c0_106] : memref<10x128xf32, #tpu.memory_space<vmem>>, vector<1x128xf32>
      %154 = vector.broadcast %152 : vector<64x1xf32> to vector<64x128xf32>
      %155 = vector.broadcast %153 : vector<1x128xf32> to vector<64x128xf32>
      %156 = arith.mulf %154, %155 : vector<64x128xf32>
      %157 = vector.extract_strided_slice %109 {offsets = [0, 3], sizes = [64, 1], strides = [1, 1]} : vector<64x4xf32> to vector<64x1xf32>
      %c9 = arith.constant 9 : index
      %c0_107 = arith.constant 0 : index
      %158 = vector.load %arg2[%c9, %c0_107] : memref<10x128xf32, #tpu.memory_space<vmem>>, vector<1x128xf32>
      %159 = vector.broadcast %157 : vector<64x1xf32> to vector<64x128xf32>
      %160 = vector.broadcast %158 : vector<1x128xf32> to vector<64x128xf32>
      %161 = arith.mulf %159, %160 : vector<64x128xf32>
      %162 = arith.addf %156, %161 : vector<64x128xf32>
      %c3_108 = arith.constant 3 : index
      %c0_109 = arith.constant 0 : index
      %163 = vector.load %arg2[%c3_108, %c0_109] : memref<10x128xf32, #tpu.memory_space<vmem>>, vector<1x128xf32>
      %164 = vector.broadcast %163 : vector<1x128xf32> to vector<64x128xf32>
      %165 = arith.addf %162, %164 : vector<64x128xf32>
      %cst_110 = arith.constant 0.000000e+00 : f32
      %166 = vector.broadcast %cst_110 : f32 to vector<64x128xf32>
      %167 = arith.maximumf %165, %166 : vector<64x128xf32>
      %c1_111 = arith.constant 1 : index
      %c0_112 = arith.constant 0 : index
      %c0_113 = arith.constant 0 : index
      %168 = vector.load %arg3[%c1_111, %c0_112, %c0_113] : memref<2x128x128xbf16, #tpu.memory_space<vmem>>, vector<1x128x128xbf16>
      %169 = vector.shape_cast %168 : vector<1x128x128xbf16> to vector<128x128xbf16>
      %170 = arith.truncf %167 : vector<64x128xf32> to vector<64x128xbf16>
      %cst_114 = arith.constant dense<0.000000e+00> : vector<64x128xf32>
      %171 = tpu.matmul %170, %169, %cst_114 {dimension_numbers = #tpu.dot_dimension_numbers<[1], [0], [0], [1], [0, 0, 1, 1], [], []>} : vector<64x128xbf16>, vector<128x128xbf16>, vector<64x128xf32> -> vector<64x128xf32>
      %c4_115 = arith.constant 4 : index
      %c0_116 = arith.constant 0 : index
      %172 = vector.load %arg2[%c4_115, %c0_116] : memref<10x128xf32, #tpu.memory_space<vmem>>, vector<1x128xf32>
      %c5_117 = arith.constant 5 : index
      %c0_118 = arith.constant 0 : index
      %173 = vector.load %arg2[%c5_117, %c0_118] : memref<10x128xf32, #tpu.memory_space<vmem>>, vector<1x128xf32>
      %cst_119 = arith.constant dense<0.000000e+00> : vector<64xf32>
      %174 = vector.multi_reduction <add>, %171, %cst_119 [1] : vector<64x128xf32> to vector<64xf32>
      %175 = vector.shape_cast %174 : vector<64xf32> to vector<64x1xf32>
      %cst_120 = arith.constant 1.280000e+02 : f32
      %176 = vector.broadcast %cst_120 : f32 to vector<64x1xf32>
      %177 = arith.divf %175, %176 : vector<64x1xf32>
      %178 = vector.broadcast %177 : vector<64x1xf32> to vector<64x128xf32>
      %179 = arith.subf %171, %178 : vector<64x128xf32>
      %180 = arith.mulf %179, %179 : vector<64x128xf32>
      %cst_121 = arith.constant dense<0.000000e+00> : vector<64xf32>
      %181 = vector.multi_reduction <add>, %180, %cst_121 [1] : vector<64x128xf32> to vector<64xf32>
      %182 = vector.shape_cast %181 : vector<64xf32> to vector<64x1xf32>
      %cst_122 = arith.constant 1.280000e+02 : f32
      %183 = vector.broadcast %cst_122 : f32 to vector<64x1xf32>
      %184 = arith.divf %182, %183 : vector<64x1xf32>
      %185 = vector.broadcast %cst : f32 to vector<64x1xf32>
      %186 = arith.addf %184, %185 : vector<64x1xf32>
      %187 = math.rsqrt %186 : vector<64x1xf32>
      %188 = vector.broadcast %187 : vector<64x1xf32> to vector<64x128xf32>
      %189 = arith.mulf %179, %188 : vector<64x128xf32>
      %190 = vector.broadcast %172 : vector<1x128xf32> to vector<64x128xf32>
      %191 = arith.mulf %189, %190 : vector<64x128xf32>
      %192 = vector.broadcast %173 : vector<1x128xf32> to vector<64x128xf32>
      %193 = arith.addf %191, %192 : vector<64x128xf32>
      %194 = arith.addf %151, %193 : vector<64x128xf32>
      %cst_123 = arith.constant 0.000000e+00 : f32
      %195 = vector.broadcast %cst_123 : f32 to vector<64x128xf32>
      %196 = arith.maximumf %194, %195 : vector<64x128xf32>
      %c0_124 = arith.constant 0 : index
      %c0_125 = arith.constant 0 : index
      %197 = vector.load %arg8[%c0_124, %c0_125] : memref<64x128xf32, #tpu.memory_space<vmem>>, vector<64x128xf32>
      tpu.vector_store %arg8[%c0_124, %c0_125], %196 {strides = array<i32>} : memref<64x128xf32, #tpu.memory_space<vmem>>, vector<64x128xf32>,
    } else {
    }
    %c0 = arith.constant 0 : index
    %c0_1 = arith.constant 0 : index
    %3 = vector.load %arg8[%c0, %c0_1] : memref<64x128xf32, #tpu.memory_space<vmem>>, vector<64x128xf32>
    %4 = arith.truncf %3 : vector<64x128xf32> to vector<64x128xbf16>
    %c0_2 = arith.constant 0 : index
    %c0_3 = arith.constant 0 : index
    %c0_4 = arith.constant 0 : index
    %c0_5 = arith.constant 0 : index
    %5 = vector.load %arg6[%c0_2, %c0_3, %c0_4, %c0_5] : memref<1x8x128x128xbf16, #tpu.memory_space<vmem>>, vector<1x1x128x128xbf16>
    %6 = vector.shape_cast %5 : vector<1x1x128x128xbf16> to vector<128x128xbf16>
    %cst_6 = arith.constant dense<0.000000e+00> : vector<64x128xf32>
    %7 = tpu.matmul %4, %6, %cst_6 {dimension_numbers = #tpu.dot_dimension_numbers<[1], [0], [0], [1], [0, 0, 1, 1], [], []>} : vector<64x128xbf16>, vector<128x128xbf16>, vector<64x128xf32> -> vector<64x128xf32>
    %c0_7 = arith.constant 0 : index
    %c1 = arith.constant 1 : index
    %c0_8 = arith.constant 0 : index
    %c0_9 = arith.constant 0 : index
    %8 = vector.load %arg6[%c0_7, %c1, %c0_8, %c0_9] : memref<1x8x128x128xbf16, #tpu.memory_space<vmem>>, vector<1x1x128x128xbf16>
    %9 = vector.shape_cast %8 : vector<1x1x128x128xbf16> to vector<128x128xbf16>
    %cst_10 = arith.constant dense<0.000000e+00> : vector<64x128xf32>
    %10 = tpu.matmul %4, %9, %cst_10 {dimension_numbers = #tpu.dot_dimension_numbers<[1], [0], [0], [1], [0, 0, 1, 1], [], []>} : vector<64x128xbf16>, vector<128x128xbf16>, vector<64x128xf32> -> vector<64x128xf32>
    %c0_11 = arith.constant 0 : index
    %c0_12 = arith.constant 0 : index
    %c0_13 = arith.constant 0 : index
    %11 = vector.load %arg4[%c0_11, %c0_12, %c0_13] : memref<6x64x64xbf16, #tpu.memory_space<vmem>>, vector<1x64x64xbf16>
    %12 = vector.shape_cast %11 : vector<1x64x64xbf16> to vector<64x64xbf16>
    %13 = arith.truncf %10 : vector<64x128xf32> to vector<64x128xbf16>
    %cst_14 = arith.constant dense<0.000000e+00> : vector<64x128xf32>
    %14 = tpu.matmul %12, %13, %cst_14 {dimension_numbers = #tpu.dot_dimension_numbers<[1], [0], [0], [1], [0, 0, 1, 1], [], []>} : vector<64x64xbf16>, vector<64x128xbf16>, vector<64x128xf32> -> vector<64x128xf32>
    %15 = arith.addf %7, %14 : vector<64x128xf32>
    %c0_15 = arith.constant 0 : index
    %c2 = arith.constant 2 : index
    %c0_16 = arith.constant 0 : index
    %c0_17 = arith.constant 0 : index
    %16 = vector.load %arg6[%c0_15, %c2, %c0_16, %c0_17] : memref<1x8x128x128xbf16, #tpu.memory_space<vmem>>, vector<1x1x128x128xbf16>
    %17 = vector.shape_cast %16 : vector<1x1x128x128xbf16> to vector<128x128xbf16>
    %cst_18 = arith.constant dense<0.000000e+00> : vector<64x128xf32>
    %18 = tpu.matmul %4, %17, %cst_18 {dimension_numbers = #tpu.dot_dimension_numbers<[1], [0], [0], [1], [0, 0, 1, 1], [], []>} : vector<64x128xbf16>, vector<128x128xbf16>, vector<64x128xf32> -> vector<64x128xf32>
    %c1_19 = arith.constant 1 : index
    %c0_20 = arith.constant 0 : index
    %c0_21 = arith.constant 0 : index
    %19 = vector.load %arg4[%c1_19, %c0_20, %c0_21] : memref<6x64x64xbf16, #tpu.memory_space<vmem>>, vector<1x64x64xbf16>
    %20 = vector.shape_cast %19 : vector<1x64x64xbf16> to vector<64x64xbf16>
    %21 = arith.truncf %18 : vector<64x128xf32> to vector<64x128xbf16>
    %cst_22 = arith.constant dense<0.000000e+00> : vector<64x128xf32>
    %22 = tpu.matmul %20, %21, %cst_22 {dimension_numbers = #tpu.dot_dimension_numbers<[1], [0], [0], [1], [0, 0, 1, 1], [], []>} : vector<64x64xbf16>, vector<64x128xbf16>, vector<64x128xf32> -> vector<64x128xf32>
    %23 = arith.addf %15, %22 : vector<64x128xf32>
    %c0_23 = arith.constant 0 : index
    %c3 = arith.constant 3 : index
    %c0_24 = arith.constant 0 : index
    %c0_25 = arith.constant 0 : index
    %24 = vector.load %arg6[%c0_23, %c3, %c0_24, %c0_25] : memref<1x8x128x128xbf16, #tpu.memory_space<vmem>>, vector<1x1x128x128xbf16>
    %25 = vector.shape_cast %24 : vector<1x1x128x128xbf16> to vector<128x128xbf16>
    %cst_26 = arith.constant dense<0.000000e+00> : vector<64x128xf32>
    %26 = tpu.matmul %4, %25, %cst_26 {dimension_numbers = #tpu.dot_dimension_numbers<[1], [0], [0], [1], [0, 0, 1, 1], [], []>} : vector<64x128xbf16>, vector<128x128xbf16>, vector<64x128xf32> -> vector<64x128xf32>
    %c2_27 = arith.constant 2 : index
    %c0_28 = arith.constant 0 : index
    %c0_29 = arith.constant 0 : index
    %27 = vector.load %arg4[%c2_27, %c0_28, %c0_29] : memref<6x64x64xbf16, #tpu.memory_space<vmem>>, vector<1x64x64xbf16>
    %28 = vector.shape_cast %27 : vector<1x64x64xbf16> to vector<64x64xbf16>
    %29 = arith.truncf %26 : vector<64x128xf32> to vector<64x128xbf16>
    %cst_30 = arith.constant dense<0.000000e+00> : vector<64x128xf32>
    %30 = tpu.matmul %28, %29, %cst_30 {dimension_numbers = #tpu.dot_dimension_numbers<[1], [0], [0], [1], [0, 0, 1, 1], [], []>} : vector<64x64xbf16>, vector<64x128xbf16>, vector<64x128xf32> -> vector<64x128xf32>
    %31 = arith.addf %23, %30 : vector<64x128xf32>
    %c0_31 = arith.constant 0 : index
    %c4 = arith.constant 4 : index
    %c0_32 = arith.constant 0 : index
    %c0_33 = arith.constant 0 : index
    %32 = vector.load %arg6[%c0_31, %c4, %c0_32, %c0_33] : memref<1x8x128x128xbf16, #tpu.memory_space<vmem>>, vector<1x1x128x128xbf16>
    %33 = vector.shape_cast %32 : vector<1x1x128x128xbf16> to vector<128x128xbf16>
    %cst_34 = arith.constant dense<0.000000e+00> : vector<64x128xf32>
    %34 = tpu.matmul %4, %33, %cst_34 {dimension_numbers = #tpu.dot_dimension_numbers<[1], [0], [0], [1], [0, 0, 1, 1], [], []>} : vector<64x128xbf16>, vector<128x128xbf16>, vector<64x128xf32> -> vector<64x128xf32>
    %c3_35 = arith.constant 3 : index
    %c0_36 = arith.constant 0 : index
    %c0_37 = arith.constant 0 : index
    %35 = vector.load %arg4[%c3_35, %c0_36, %c0_37] : memref<6x64x64xbf16, #tpu.memory_space<vmem>>, vector<1x64x64xbf16>
    %36 = vector.shape_cast %35 : vector<1x64x64xbf16> to vector<64x64xbf16>
    %37 = arith.truncf %34 : vector<64x128xf32> to vector<64x128xbf16>
    %cst_38 = arith.constant dense<0.000000e+00> : vector<64x128xf32>
    %38 = tpu.matmul %36, %37, %cst_38 {dimension_numbers = #tpu.dot_dimension_numbers<[1], [0], [0], [1], [0, 0, 1, 1], [], []>} : vector<64x64xbf16>, vector<64x128xbf16>, vector<64x128xf32> -> vector<64x128xf32>
    %39 = arith.addf %31, %38 : vector<64x128xf32>
    %c0_39 = arith.constant 0 : index
    %c5 = arith.constant 5 : index
    %c0_40 = arith.constant 0 : index
    %c0_41 = arith.constant 0 : index
    %40 = vector.load %arg6[%c0_39, %c5, %c0_40, %c0_41] : memref<1x8x128x128xbf16, #tpu.memory_space<vmem>>, vector<1x1x128x128xbf16>
    %41 = vector.shape_cast %40 : vector<1x1x128x128xbf16> to vector<128x128xbf16>
    %cst_42 = arith.constant dense<0.000000e+00> : vector<64x128xf32>
    %42 = tpu.matmul %4, %41, %cst_42 {dimension_numbers = #tpu.dot_dimension_numbers<[1], [0], [0], [1], [0, 0, 1, 1], [], []>} : vector<64x128xbf16>, vector<128x128xbf16>, vector<64x128xf32> -> vector<64x128xf32>
    %c4_43 = arith.constant 4 : index
    %c0_44 = arith.constant 0 : index
    %c0_45 = arith.constant 0 : index
    %43 = vector.load %arg4[%c4_43, %c0_44, %c0_45] : memref<6x64x64xbf16, #tpu.memory_space<vmem>>, vector<1x64x64xbf16>
    %44 = vector.shape_cast %43 : vector<1x64x64xbf16> to vector<64x64xbf16>
    %45 = arith.truncf %42 : vector<64x128xf32> to vector<64x128xbf16>
    %cst_46 = arith.constant dense<0.000000e+00> : vector<64x128xf32>
    %46 = tpu.matmul %44, %45, %cst_46 {dimension_numbers = #tpu.dot_dimension_numbers<[1], [0], [0], [1], [0, 0, 1, 1], [], []>} : vector<64x64xbf16>, vector<64x128xbf16>, vector<64x128xf32> -> vector<64x128xf32>
    %47 = arith.addf %39, %46 : vector<64x128xf32>
    %c0_47 = arith.constant 0 : index
    %c6 = arith.constant 6 : index
    %c0_48 = arith.constant 0 : index
    %c0_49 = arith.constant 0 : index
    %48 = vector.load %arg6[%c0_47, %c6, %c0_48, %c0_49] : memref<1x8x128x128xbf16, #tpu.memory_space<vmem>>, vector<1x1x128x128xbf16>
    %49 = vector.shape_cast %48 : vector<1x1x128x128xbf16> to vector<128x128xbf16>
    %cst_50 = arith.constant dense<0.000000e+00> : vector<64x128xf32>
    %50 = tpu.matmul %4, %49, %cst_50 {dimension_numbers = #tpu.dot_dimension_numbers<[1], [0], [0], [1], [0, 0, 1, 1], [], []>} : vector<64x128xbf16>, vector<128x128xbf16>, vector<64x128xf32> -> vector<64x128xf32>
    %c5_51 = arith.constant 5 : index
    %c0_52 = arith.constant 0 : index
    %c0_53 = arith.constant 0 : index
    %51 = vector.load %arg4[%c5_51, %c0_52, %c0_53] : memref<6x64x64xbf16, #tpu.memory_space<vmem>>, vector<1x64x64xbf16>
    %52 = vector.shape_cast %51 : vector<1x64x64xbf16> to vector<64x64xbf16>
    %53 = arith.truncf %50 : vector<64x128xf32> to vector<64x128xbf16>
    %cst_54 = arith.constant dense<0.000000e+00> : vector<64x128xf32>
    %54 = tpu.matmul %52, %53, %cst_54 {dimension_numbers = #tpu.dot_dimension_numbers<[1], [0], [0], [1], [0, 0, 1, 1], [], []>} : vector<64x64xbf16>, vector<64x128xbf16>, vector<64x128xf32> -> vector<64x128xf32>
    %55 = arith.addf %47, %54 : vector<64x128xf32>
    %c0_55 = arith.constant 0 : index
    %c0_56 = arith.constant 0 : index
    %c0_57 = arith.constant 0 : index
    %56 = vector.load %arg7[%c0_55, %c0_56, %c0_57] : memref<1x4x128xf32, #tpu.memory_space<vmem>>, vector<1x1x128xf32>
    %57 = vector.shape_cast %56 : vector<1x1x128xf32> to vector<1x128xf32>
    %c0_58 = arith.constant 0 : index
    %c1_59 = arith.constant 1 : index
    %c0_60 = arith.constant 0 : index
    %58 = vector.load %arg7[%c0_58, %c1_59, %c0_60] : memref<1x4x128xf32, #tpu.memory_space<vmem>>, vector<1x1x128xf32>
    %59 = vector.shape_cast %58 : vector<1x1x128xf32> to vector<1x128xf32>
    %c0_61 = arith.constant 0 : index
    %c0_62 = arith.constant 0 : index
    %60 = vector.load %arg5[%c0_61, %c0_62] : memref<128x128xbf16, #tpu.memory_space<vmem>>, vector<128x128xbf16>
    %61 = arith.truncf %55 : vector<64x128xf32> to vector<64x128xbf16>
    %cst_63 = arith.constant dense<0.000000e+00> : vector<64x128xf32>
    %62 = tpu.matmul %61, %60, %cst_63 {dimension_numbers = #tpu.dot_dimension_numbers<[1], [0], [0], [1], [0, 0, 1, 1], [], []>} : vector<64x128xbf16>, vector<128x128xbf16>, vector<64x128xf32> -> vector<64x128xf32>
    %63 = arith.subf %55, %62 : vector<64x128xf32>
    %64 = arith.mulf %63, %63 : vector<64x128xf32>
    %65 = arith.truncf %64 : vector<64x128xf32> to vector<64x128xbf16>
    %cst_64 = arith.constant dense<0.000000e+00> : vector<64x128xf32>
    %66 = tpu.matmul %65, %60, %cst_64 {dimension_numbers = #tpu.dot_dimension_numbers<[1], [0], [0], [1], [0, 0, 1, 1], [], []>} : vector<64x128xbf16>, vector<128x128xbf16>, vector<64x128xf32> -> vector<64x128xf32>
    %cst_65 = arith.constant 9.99999974E-6 : f32
    %67 = vector.broadcast %cst_65 : f32 to vector<64x128xf32>
    %68 = arith.addf %66, %67 : vector<64x128xf32>
    %69 = math.rsqrt %68 : vector<64x128xf32>
    %70 = arith.mulf %63, %69 : vector<64x128xf32>
    %71 = vector.broadcast %57 : vector<1x128xf32> to vector<64x128xf32>
    %72 = arith.mulf %70, %71 : vector<64x128xf32>
    %73 = vector.broadcast %59 : vector<1x128xf32> to vector<64x128xf32>
    %74 = arith.addf %72, %73 : vector<64x128xf32>
    %cst_66 = arith.constant 0.000000e+00 : f32
    %75 = vector.broadcast %cst_66 : f32 to vector<64x128xf32>
    %76 = arith.maximumf %74, %75 : vector<64x128xf32>
    %c0_67 = arith.constant 0 : index
    %c7 = arith.constant 7 : index
    %c0_68 = arith.constant 0 : index
    %c0_69 = arith.constant 0 : index
    %77 = vector.load %arg6[%c0_67, %c7, %c0_68, %c0_69] : memref<1x8x128x128xbf16, #tpu.memory_space<vmem>>, vector<1x1x128x128xbf16>
    %78 = vector.shape_cast %77 : vector<1x1x128x128xbf16> to vector<128x128xbf16>
    %79 = arith.truncf %76 : vector<64x128xf32> to vector<64x128xbf16>
    %cst_70 = arith.constant dense<0.000000e+00> : vector<64x128xf32>
    %80 = tpu.matmul %79, %78, %cst_70 {dimension_numbers = #tpu.dot_dimension_numbers<[1], [0], [0], [1], [0, 0, 1, 1], [], []>} : vector<64x128xbf16>, vector<128x128xbf16>, vector<64x128xf32> -> vector<64x128xf32>
    %c0_71 = arith.constant 0 : index
    %c2_72 = arith.constant 2 : index
    %c0_73 = arith.constant 0 : index
    %81 = vector.load %arg7[%c0_71, %c2_72, %c0_73] : memref<1x4x128xf32, #tpu.memory_space<vmem>>, vector<1x1x128xf32>
    %82 = vector.shape_cast %81 : vector<1x1x128xf32> to vector<1x128xf32>
    %c0_74 = arith.constant 0 : index
    %c3_75 = arith.constant 3 : index
    %c0_76 = arith.constant 0 : index
    %83 = vector.load %arg7[%c0_74, %c3_75, %c0_76] : memref<1x4x128xf32, #tpu.memory_space<vmem>>, vector<1x1x128xf32>
    %84 = vector.shape_cast %83 : vector<1x1x128xf32> to vector<1x128xf32>
    %cst_77 = arith.constant dense<0.000000e+00> : vector<64xf32>
    %85 = vector.multi_reduction <add>, %80, %cst_77 [1] : vector<64x128xf32> to vector<64xf32>
    %86 = vector.shape_cast %85 : vector<64xf32> to vector<64x1xf32>
    %cst_78 = arith.constant 1.280000e+02 : f32
    %87 = vector.broadcast %cst_78 : f32 to vector<64x1xf32>
    %88 = arith.divf %86, %87 : vector<64x1xf32>
    %89 = vector.broadcast %88 : vector<64x1xf32> to vector<64x128xf32>
    %90 = arith.subf %80, %89 : vector<64x128xf32>
    %91 = arith.mulf %90, %90 : vector<64x128xf32>
    %cst_79 = arith.constant dense<0.000000e+00> : vector<64xf32>
    %92 = vector.multi_reduction <add>, %91, %cst_79 [1] : vector<64x128xf32> to vector<64xf32>
    %93 = vector.shape_cast %92 : vector<64xf32> to vector<64x1xf32>
    %cst_80 = arith.constant 1.280000e+02 : f32
    %94 = vector.broadcast %cst_80 : f32 to vector<64x1xf32>
    %95 = arith.divf %93, %94 : vector<64x1xf32>
    %cst_81 = arith.constant 9.99999974E-6 : f32
    %96 = vector.broadcast %cst_81 : f32 to vector<64x1xf32>
    %97 = arith.addf %95, %96 : vector<64x1xf32>
    %98 = math.rsqrt %97 : vector<64x1xf32>
    %99 = vector.broadcast %98 : vector<64x1xf32> to vector<64x128xf32>
    %100 = arith.mulf %90, %99 : vector<64x128xf32>
    %101 = vector.broadcast %82 : vector<1x128xf32> to vector<64x128xf32>
    %102 = arith.mulf %100, %101 : vector<64x128xf32>
    %103 = vector.broadcast %84 : vector<1x128xf32> to vector<64x128xf32>
    %104 = arith.addf %102, %103 : vector<64x128xf32>
    %105 = arith.addf %104, %3 : vector<64x128xf32>
    %cst_82 = arith.constant 0.000000e+00 : f32
    %106 = vector.broadcast %cst_82 : f32 to vector<64x128xf32>
    %107 = arith.maximumf %105, %106 : vector<64x128xf32>
    %c0_83 = arith.constant 0 : index
    %c0_84 = arith.constant 0 : index
    %108 = vector.load %arg8[%c0_83, %c0_84] : memref<64x128xf32, #tpu.memory_space<vmem>>, vector<64x128xf32>
    tpu.vector_store %arg8[%c0_83, %c0_84], %107 {strides = array<i32>} : memref<64x128xf32, #tpu.memory_space<vmem>>, vector<64x128xf32>,
    return
  }
  func.func @transform_0(%arg0: i32) -> (i32, i32) {
    %c0_i32 = arith.constant 0 : i32
    %c0_i32_0 = arith.constant 0 : i32
    %c0_i32_1 = arith.constant 0 : i32
    return %c0_i32, %c0_i32_0 : i32, i32
  }
  func.func @transform_1(%arg0: i32) -> (i32, i32) {
    %c0_i32 = arith.constant 0 : i32
    %c0_i32_0 = arith.constant 0 : i32
    %c0_i32_1 = arith.constant 0 : i32
    return %c0_i32, %c0_i32_0 : i32, i32
  }
  func.func @transform_2(%arg0: i32) -> (i32, i32, i32) {
    %c0_i32 = arith.constant 0 : i32
    %c0_i32_0 = arith.constant 0 : i32
    %c0_i32_1 = arith.constant 0 : i32
    %c0_i32_2 = arith.constant 0 : i32
    return %c0_i32, %c0_i32_0, %c0_i32_1 : i32, i32, i32
  }
  func.func @transform_3(%arg0: i32) -> (i32, i32, i32) {
    %c0_i32 = arith.constant 0 : i32
    %c0_i32_0 = arith.constant 0 : i32
    %c0_i32_1 = arith.constant 0 : i32
    %c0_i32_2 = arith.constant 0 : i32
    return %c0_i32, %c0_i32_0, %c0_i32_1 : i32, i32, i32
  }
  func.func @transform_4(%arg0: i32) -> (i32, i32) {
    %c0_i32 = arith.constant 0 : i32
    %c0_i32_0 = arith.constant 0 : i32
    %c0_i32_1 = arith.constant 0 : i32
    return %c0_i32, %c0_i32_0 : i32, i32
  }
  func.func @transform_5(%arg0: i32) -> (i32, i32, i32, i32) {
    %c0_i32 = arith.constant 0 : i32
    %c0_i32_0 = arith.constant 0 : i32
    %c0_i32_1 = arith.constant 0 : i32
    %c0_i32_2 = arith.constant 0 : i32
    return %arg0, %c0_i32, %c0_i32_0, %c0_i32_1 : i32, i32, i32, i32
  }
  func.func @transform_6(%arg0: i32) -> (i32, i32, i32) {
    %c0_i32 = arith.constant 0 : i32
    %c0_i32_0 = arith.constant 0 : i32
    %c0_i32_1 = arith.constant 0 : i32
    return %arg0, %c0_i32, %c0_i32_0 : i32, i32, i32
  }
  func.func @transform_7(%arg0: i32) -> (i32, i32) {
    %c0_i32 = arith.constant 0 : i32
    %c0_i32_0 = arith.constant 0 : i32
    %c0_i32_1 = arith.constant 0 : i32
    return %c0_i32, %c0_i32_0 : i32, i32
  }
}

</mosaic_0001>

<llo_original>
// kernel: mapnet_pallas.1
$region0: #{mapnet_pallas.1}
  #allocation0 [shape = 'u32[]', space=smem, size = 0x4, offset = 0x4, fixed_abs, tag = 'smem constant byte address 0x4 - core index']
  #allocation1 [shape = 'u32[144,128]{1,0:T(1,128)}', space=vmem, size = 0x12000, scoped, tag = 'internal scratch']
  %s0 = inlined_call_operand.vmem [shape: f32[64,4], index: 0, kind: input, shape index: {}]
  %s1 = inlined_call_operand.vmem [shape: f32[10,128], index: 1, kind: input, shape index: {}]
  %s2 = inlined_call_operand.hbm [shape: bf16[2,128,128], index: 2, kind: input, shape index: {}]
  %s3 = inlined_call_operand.hbm [shape: bf16[6,64,64], index: 3, kind: input, shape index: {}]
  %s4 = inlined_call_operand.vmem [shape: bf16[128,128], index: 4, kind: input, shape index: {}]
  %s5 = inlined_call_operand.hbm [shape: bf16[4,8,128,128], index: 5, kind: input, shape index: {}]
  %s6 = inlined_call_operand.hbm [shape: f32[4,4,128], index: 6, kind: input, shape index: {}]
  %s7 = inlined_call_operand.hbm [shape: f32[64,128], index: 7, kind: output, shape index: {}]
  %s8 = sld [smem:[#allocation0]]
  $region81: #{mapnet_pallas.1} parent=0
    _
  %s10 = ssub.s32 1, %s8
  %s11 = scalar_select 0, %s10, %s8
  $region1: #{mapnet_pallas.1} parent=0
    #allocation2 [shape = 'u8[65536]{0}', space=vmem, size = 0x10000, scoped, tag = 'input window, operand 2, single buffered']
    #allocation3 [shape = 's32[2]{0}', space=sflag, size = 0x8, scoped, tag = 'scoped memory for mapnet_pallas.1']
    #allocation4 [shape = 's32[2]{0}', space=sflag, size = 0x8, scoped, tag = 'scoped memory for mapnet_pallas.1']
    #allocation5 [shape = 'u8[98304]{0}', space=vmem, size = 0x18000, scoped, tag = 'input window, operand 3, single buffered']
    #allocation6 [shape = 's32[1]{0}', space=sflag, size = 0x4, scoped, tag = 'scoped memory for mapnet_pallas.1']
    #allocation7 [shape = 'u8[524288]{0}', space=vmem, size = 0x80000, scoped, tag = 'input window, operand 5']
    #allocation8 [shape = 'u8[4096]{0}', space=vmem, size = 0x1000, scoped, tag = 'input window, operand 6']
    #allocation9 [shape = 'u8[32768]{0}', space=vmem, size = 0x8000, scoped, tag = 'output window, operand 0, single buffered']
    %12 = vsyncpa [#allocation3], 0
    %13 = vsyncpa [#allocation6], 0
    %14 = vsyncpa [#allocation4], 0
    loop: start=0, step=1, limit=6
    $region2: #{mapnet_pallas.1} parent=1 // loop_pre_header
      _
    $region3: #{mapnet_pallas.1} parent=1 // loop_header
      %s16 = sphi 0, %s20
      %p17 = scmp.ge.s32.totalorder %s16, 6
      %s24 = sphi 0, %s24
      %s26 = sphi 0, %s24
      %s27 = sphi 0, %s26
      %s41 = sphi 0, %s27
      %s45 = sphi 0, %s45
      %s47 = sphi 0, %s45
      %s48 = sphi 0, %s47
      %s62 = sphi 0, %s48
      %s66 = sphi 0, %s66
      %s68 = sphi 0, %s66
      %s69 = sphi 0, %s68
      %s83 = sphi 0, %s69
      %s87 = sphi 0, %s87
      %s89 = sphi 0, %s87
      %s90 = sphi 0, %s89
      %s104 = sphi 0, %s90
      %s108 = sphi 0, %s108
      %s110 = sphi 0, %s108
      %s111 = sphi 0, %s110
      %s125 = sphi 0, %s111
      %s131 = sphi 0, %s133
      %s134 = sphi 0, %s131
      %s135 = sphi 0, %s134
      %s151 = sphi 0, %s135
      %s157 = sphi 0, %s159
      %s160 = sphi 0, %s157
      %s161 = sphi 0, %s160
      %s177 = sphi 0, %s161
      %s181 = sphi 0, %s181
      %s183 = sphi 0, %s181
      %s184 = sphi 0, %s183
      %s198 = sphi 0, %s184
    $region4: #{mapnet_pallas.1} parent=1 // loop_header_branch
      %19 = sbr.rel (%p17) target = $region8
    $region5: #{mapnet_pallas.1} parent=1 // loop_body
      %s21 = ssub.s32 %s16, 1
      %s22 = ssub.s32 %s16, 2
      %s23 = sadd.s32 %s16, 1
      %s25 = sadd.s32 %s24, 1
      %p28 = scmp.eq.s32.totalorder %s16, 3
      %p29 = scmp.ne.s32.totalorder %s24, %s26
      %p30 = scmp.eq.s32.totalorder %s16, 0
      %p31 = por %p29, %p30
      %p32 = scmp.ne.s32.totalorder %s24, %s26
      %p33 = scmp.eq.s32.totalorder %s21, 3
      %p34 = por %p32, %p33
      %p35 = scmp.ne.s32.totalorder %s26, %s27
      %p36 = scmp.eq.s32.totalorder %s21, 0
      %p37 = por %p35, %p36
      %p38 = scmp.ne.s32.totalorder %s26, %s27
      %p39 = scmp.eq.s32.totalorder %s22, 3
      %p40 = por %p38, %p39
      %p42 = scmp.ne.s32.totalorder %s27, %s41
      %p43 = scmp.eq.s32.totalorder %s22, 0
      %p44 = por %p42, %p43
      %s46 = sadd.s32 %s45, 1
      %p49 = scmp.eq.s32.totalorder %s16, 3
      %p50 = scmp.ne.s32.totalorder %s45, %s47
      %p51 = scmp.eq.s32.totalorder %s16, 0
      %p52 = por %p50, %p51
      %p53 = scmp.ne.s32.totalorder %s45, %s47
      %p54 = scmp.eq.s32.totalorder %s21, 3
      %p55 = por %p53, %p54
      %p56 = scmp.ne.s32.totalorder %s47, %s48
      %p57 = scmp.eq.s32.totalorder %s21, 0
      %p58 = por %p56, %p57
      %p59 = scmp.ne.s32.totalorder %s47, %s48
      %p60 = scmp.eq.s32.totalorder %s22, 3
      %p61 = por %p59, %p60
      %p63 = scmp.ne.s32.totalorder %s48, %s62
      %p64 = scmp.eq.s32.totalorder %s22, 0
      %p65 = por %p63, %p64
      %s67 = sadd.s32 %s66, 1
      %p70 = scmp.eq.s32.totalorder %s16, 3
      %p71 = scmp.ne.s32.totalorder %s66, %s68
      %p72 = scmp.eq.s32.totalorder %s16, 0
      %p73 = por %p71, %p72
      %p74 = scmp.ne.s32.totalorder %s66, %s68
      %p75 = scmp.eq.s32.totalorder %s21, 3
      %p76 = por %p74, %p75
      %p77 = scmp.ne.s32.totalorder %s68, %s69
      %p78 = scmp.eq.s32.totalorder %s21, 0
      %p79 = por %p77, %p78
      %p80 = scmp.ne.s32.totalorder %s68, %s69
      %p81 = scmp.eq.s32.totalorder %s22, 3
      %p82 = por %p80, %p81
      %p84 = scmp.ne.s32.totalorder %s69, %s83
      %p85 = scmp.eq.s32.totalorder %s22, 0
      %p86 = por %p84, %p85
      %s88 = sadd.s32 %s87, 1
      %p91 = scmp.eq.s32.totalorder %s16, 3
      %p92 = scmp.ne.s32.totalorder %s87, %s89
      %p93 = scmp.eq.s32.totalorder %s16, 0
      %p94 = por %p92, %p93
      %p95 = scmp.ne.s32.totalorder %s87, %s89
      %p96 = scmp.eq.s32.totalorder %s21, 3
      %p97 = por %p95, %p96
      %p98 = scmp.ne.s32.totalorder %s89, %s90
      %p99 = scmp.eq.s32.totalorder %s21, 0
      %p100 = por %p98, %p99
      %p101 = scmp.ne.s32.totalorder %s89, %s90
      %p102 = scmp.eq.s32.totalorder %s22, 3
      %p103 = por %p101, %p102
      %p105 = scmp.ne.s32.totalorder %s90, %s104
      %p106 = scmp.eq.s32.totalorder %s22, 0
      %p107 = por %p105, %p106
      %s109 = sadd.s32 %s108, 1
      %p112 = scmp.eq.s32.totalorder %s16, 3
      %p113 = scmp.ne.s32.totalorder %s108, %s110
      %p114 = scmp.eq.s32.totalorder %s16, 0
      %p115 = por %p113, %p114
      %p116 = scmp.ne.s32.totalorder %s108, %s110
      %p117 = scmp.eq.s32.totalorder %s21, 3
      %p118 = por %p116, %p117
      %p119 = scmp.ne.s32.totalorder %s110, %s111
      %p120 = scmp.eq.s32.totalorder %s21, 0
      %p121 = por %p119, %p120
      %p122 = scmp.ne.s32.totalorder %s110, %s111
      %p123 = scmp.eq.s32.totalorder %s22, 3
      %p124 = por %p122, %p123
      %p126 = scmp.ne.s32.totalorder %s111, %s125
      %p127 = scmp.eq.s32.totalorder %s22, 0
      %p128 = por %p126, %p127
      %s129 = ssub.s32 %s16, %s23
      %p130 = scmp.eq.s32.totalorder %s129, 0
      %s132 = sadd.s32 %s131, 1
      %s133 = scalar_select %p130, %s131, %s132
      %p136 = pneg %p130
      %p137 = scmp.eq.s32.totalorder %s16, 3
      %p138 = por %p136, %p137
      %p139 = scmp.ne.s32.totalorder %s131, %s134
      %p140 = scmp.eq.s32.totalorder %s16, 0
      %p141 = por %p139, %p140
      %p142 = scmp.ne.s32.totalorder %s131, %s134
      %p143 = scmp.eq.s32.totalorder %s21, 3
      %p144 = por %p142, %p143
      %p145 = scmp.ne.s32.totalorder %s134, %s135
      %p146 = scmp.eq.s32.totalorder %s21, 0
      %p147 = por %p145, %p146
      %p148 = scmp.ne.s32.totalorder %s134, %s135
      %p149 = scmp.eq.s32.totalorder %s22, 3
      %p150 = por %p148, %p149
      %p152 = scmp.ne.s32.totalorder %s135, %s151
      %p153 = scmp.eq.s32.totalorder %s22, 0
      %p154 = por %p152, %p153
      %s155 = ssub.s32 %s16, %s23
      %p156 = scmp.eq.s32.totalorder %s155, 0
      %s158 = sadd.s32 %s157, 1
      %s159 = scalar_select %p156, %s157, %s158
      %p162 = pneg %p156
      %p163 = scmp.eq.s32.totalorder %s16, 3
      %p164 = por %p162, %p163
      %p165 = scmp.ne.s32.totalorder %s157, %s160
      %p166 = scmp.eq.s32.totalorder %s16, 0
      %p167 = por %p165, %p166
      %p168 = scmp.ne.s32.totalorder %s157, %s160
      %p169 = scmp.eq.s32.totalorder %s21, 3
      %p170 = por %p168, %p169
      %p171 = scmp.ne.s32.totalorder %s160, %s161
      %p172 = scmp.eq.s32.totalorder %s21, 0
      %p173 = por %p171, %p172
      %p174 = scmp.ne.s32.totalorder %s160, %s161
      %p175 = scmp.eq.s32.totalorder %s22, 3
      %p176 = por %p174, %p175
      %p178 = scmp.ne.s32.totalorder %s161, %s177
      %p179 = scmp.eq.s32.totalorder %s22, 0
      %p180 = por %p178, %p179
      %s182 = sadd.s32 %s181, 1
      %p185 = scmp.eq.s32.totalorder %s16, 3
      %p186 = scmp.ne.s32.totalorder %s181, %s183
      %p187 = scmp.eq.s32.totalorder %s16, 0
      %p188 = por %p186, %p187
      %p189 = scmp.ne.s32.totalorder %s181, %s183
      %p190 = scmp.eq.s32.totalorder %s21, 3
      %p191 = por %p189, %p190
      %p192 = scmp.ne.s32.totalorder %s183, %s184
      %p193 = scmp.eq.s32.totalorder %s21, 0
      %p194 = por %p192, %p193
      %p195 = scmp.ne.s32.totalorder %s183, %s184
      %p196 = scmp.eq.s32.totalorder %s22, 3
      %p197 = por %p195, %p196
      %p199 = scmp.ne.s32.totalorder %s184, %s198
      %p200 = scmp.eq.s32.totalorder %s22, 0
      %p201 = por %p199, %p200
      %p202 = scmp.le.s32.totalorder 1, %s16
      %p203 = scmp.lt.s32.totalorder %s16, 5
      %p204 = pnand %p202, %p203
      %p205 = pneg %p204
      // Predicated region
      $region9: #{mapnet_pallas.1} parent=5 // pred_check
        _
      $region10: #{mapnet_pallas.1} parent=5 // pred_check_branch
        %207 = sbr.rel (%p204) target = $region12
      $region11: #{mapnet_pallas.1} parent=5 // pred_region
        %s208 = ssub.s32 %s16, 1
        // Predicated region
        $region13: #{mapnet_pallas.1} parent=11 // pred_check
          %p209 = pneg %p37
        $region14: #{mapnet_pallas.1} parent=11 // pred_check_branch
          %211 = sbr.rel (%p209) target = $region16
        $region15: #{mapnet_pallas.1} parent=11 // pred_region
          _
        $region16: #{mapnet_pallas.1} parent=11 // pred_fallthru
          _
        // Predicated region
        $region17: #{mapnet_pallas.1} parent=11 // pred_check
          %p212 = pneg %p58
        $region18: #{mapnet_pallas.1} parent=11 // pred_check_branch
          %214 = sbr.rel (%p212) target = $region20
        $region19: #{mapnet_pallas.1} parent=11 // pred_region
          _
        $region20: #{mapnet_pallas.1} parent=11 // pred_fallthru
          _
        // Predicated region
        $region21: #{mapnet_pallas.1} parent=11 // pred_check
          %p215 = pneg %p79
        $region22: #{mapnet_pallas.1} parent=11 // pred_check_branch
          %217 = sbr.rel (%p215) target = $region24
        $region23: #{mapnet_pallas.1} parent=11 // pred_region
          %s219 = ssub.s32 2048, 2048
          %220 = vsyncadd [#allocation3], %s219
          %s221 = sshll.u32 [#allocation2], 4
          %s222 = int_to_ptr.vmem [resolvable:$true] %s221
          %227 = dma.hbm_to_vmem [thread:$0]  %s2, 2048, %s222, [#allocation3], 64, 64, 4
        $region24: #{mapnet_pallas.1} parent=11 // pred_fallthru
          _
        // Predicated region
        $region25: #{mapnet_pallas.1} parent=11 // pred_check
          %p228 = pneg %p100
        $region26: #{mapnet_pallas.1} parent=11 // pred_check_branch
          %230 = sbr.rel (%p228) target = $region28
        $region27: #{mapnet_pallas.1} parent=11 // pred_region
          %s232 = ssub.s32 3072, 3072
          %233 = vsyncadd [#allocation6], %s232
          %s234 = sshll.u32 [#allocation5], 4
          %s235 = int_to_ptr.vmem [resolvable:$true] %s234
          %240 = dma.hbm_to_vmem [thread:$0]  %s3, 3072, %s235, [#allocation6], 64, 64, 4
        $region28: #{mapnet_pallas.1} parent=11 // pred_fallthru
          _
        // Predicated region
        $region29: #{mapnet_pallas.1} parent=11 // pred_check
          %p241 = pneg %p121
        $region30: #{mapnet_pallas.1} parent=11 // pred_check_branch
          %243 = sbr.rel (%p241) target = $region32
        $region31: #{mapnet_pallas.1} parent=11 // pred_region
          _
        $region32: #{mapnet_pallas.1} parent=11 // pred_fallthru
          _
      $region12: #{mapnet_pallas.1} parent=5 // pred_fallthru
        _
      %p244 = scmp.lt.s32.totalorder %s16, 4
      // Predicated region
      $region33: #{mapnet_pallas.1} parent=5 // pred_check
        %p245 = pneg %p244
      $region34: #{mapnet_pallas.1} parent=5 // pred_check_branch
        %247 = sbr.rel (%p245) target = $region36
      $region35: #{mapnet_pallas.1} parent=5 // pred_region
        // Predicated region
        $region37: #{mapnet_pallas.1} parent=35 // pred_check
          %p248 = pneg %p141
        $region38: #{mapnet_pallas.1} parent=35 // pred_check_branch
          %250 = sbr.rel (%p248) target = $region40
        $region39: #{mapnet_pallas.1} parent=35 // pred_region
          %s251 = sand.u32 %s16, 1
          %s252 = scalar_lea.sflag [#allocation3], %s251
          %s253 = sand.u32 %s131, 1
          %s254 = smul.addr %s253, 512
          %s255 = scalar_lea.vmem [#allocation7], %s254
          %s257 = ssub.s32 8192, 8192
          %258 = vsyncadd %s252, %s257
          %s259 = smul.addr %s16, 128
          %s260 = smul.addr %s259, 64
          %s261 = scalar_lea.hbm %s5, %s260
          %s262 = sshll.u32 %s255, 4
          %s263 = int_to_ptr.vmem [resolvable:$true] %s262
          %268 = dma.hbm_to_vmem [thread:$0]  %s261, 8192, %s263, %s252, 64, 64, 4
        $region40: #{mapnet_pallas.1} parent=35 // pred_fallthru
          _
        // Predicated region
        $region41: #{mapnet_pallas.1} parent=35 // pred_check
          %p269 = pneg %p167
        $region42: #{mapnet_pallas.1} parent=35 // pred_check_branch
          %271 = sbr.rel (%p269) target = $region44
        $region43: #{mapnet_pallas.1} parent=35 // pred_region
          %s272 = sand.u32 %s16, 1
          %s273 = scalar_lea.sflag [#allocation3], %s272
          %s274 = sand.u32 %s157, 1
          %s275 = smul.addr %s274, 4
          %s276 = scalar_lea.vmem [#allocation8], %s275
          %s278 = ssub.s32 64, 64
          %279 = vsyncadd %s273, %s278
          %s280 = smul.addr %s16, 64
          %s281 = scalar_lea.hbm %s6, %s280
          %s283 = sshll.u32 %s276, 4
          %s284 = int_to_ptr.vmem [resolvable:$true] %s283
          %286 = dma.hbm_to_vmem [thread:$0]  %s281, 64, %s284, %s273
        $region44: #{mapnet_pallas.1} parent=35 // pred_fallthru
          _
      $region36: #{mapnet_pallas.1} parent=5 // pred_fallthru
        _
      %p287 = scmp.le.s32.totalorder 1, %s16
      %p288 = scmp.lt.s32.totalorder %s16, 5
      %p289 = pnand %p287, %p288
      %p290 = pneg %p289
      // Predicated region
      $region45: #{mapnet_pallas.1} parent=5 // pred_check
        _
      $region46: #{mapnet_pallas.1} parent=5 // pred_check_branch
        %292 = sbr.rel (%p289) target = $region48
      $region47: #{mapnet_pallas.1} parent=5 // pred_region
        %s293 = ssub.s32 %s16, 1
        // Predicated region
        $region49: #{mapnet_pallas.1} parent=47 // pred_check
          %p294 = pneg %p79
        $region50: #{mapnet_pallas.1} parent=47 // pred_check_branch
          %296 = sbr.rel (%p294) target = $region52
        $region51: #{mapnet_pallas.1} parent=47 // pred_region
          %297 = dma.done [#allocation3], 2048
        $region52: #{mapnet_pallas.1} parent=47 // pred_fallthru
          _
        // Predicated region
        $region53: #{mapnet_pallas.1} parent=47 // pred_check
          %p298 = pneg %p100
        $region54: #{mapnet_pallas.1} parent=47 // pred_check_branch
          %300 = sbr.rel (%p298) target = $region56
        $region55: #{mapnet_pallas.1} parent=47 // pred_region
          %301 = dma.done [#allocation6], 3072
        $region56: #{mapnet_pallas.1} parent=47 // pred_fallthru
          _
        %s302 = sand.u32 %s21, 1
        %s303 = scalar_lea.sflag [#allocation3], %s302
        %s304 = sand.u32 %s134, 1
        %s305 = smul.addr %s304, 512
        %s306 = scalar_lea.vmem [#allocation7], %s305
        // Predicated region
        $region57: #{mapnet_pallas.1} parent=47 // pred_check
          %p307 = pneg %p147
        $region58: #{mapnet_pallas.1} parent=47 // pred_check_branch
          %309 = sbr.rel (%p307) target = $region60
        $region59: #{mapnet_pallas.1} parent=47 // pred_region
          %310 = dma.done %s303, 8192
        $region60: #{mapnet_pallas.1} parent=47 // pred_fallthru
          _
        %s311 = sand.u32 %s21, 1
        %s312 = scalar_lea.sflag [#allocation3], %s311
        %s313 = sand.u32 %s160, 1
        %s314 = smul.addr %s313, 4
        %s315 = scalar_lea.vmem [#allocation8], %s314
        // Predicated region
        $region61: #{mapnet_pallas.1} parent=47 // pred_check
          %p316 = pneg %p173
        $region62: #{mapnet_pallas.1} parent=47 // pred_check_branch
          %318 = sbr.rel (%p316) target = $region64
        $region63: #{mapnet_pallas.1} parent=47 // pred_region
          %319 = dma.done %s312, 64
        $region64: #{mapnet_pallas.1} parent=47 // pred_fallthru
          _
        %p320 = pneg %p37
        %p321 = pneg %p34
        %p322 = pneg %p58
        %p323 = pneg %p55
        %p324 = pneg %p79
        %p325 = pneg %p76
        %p326 = pneg %p100
        %p327 = pneg %p97
        %p328 = pneg %p121
        %p329 = pneg %p118
        %s330 = sand.u32 %s21, 1
        %s331 = scalar_lea.sflag [#allocation3], %s330
        %s332 = sand.u32 %s134, 1
        %s333 = smul.addr %s332, 512
        %s334 = scalar_lea.vmem [#allocation7], %s333
        %p335 = pneg %p147
        %p336 = pneg %p144
        %s337 = sand.u32 %s21, 1
        %s338 = scalar_lea.sflag [#allocation3], %s337
        %s339 = sand.u32 %s160, 1
        %s340 = smul.addr %s339, 4
        %s341 = scalar_lea.vmem [#allocation8], %s340
        %p342 = pneg %p173
        %p343 = pneg %p170
        %p344 = pneg %p194
        %p345 = pneg %p191
        %p347 = scmp.eq.s32.totalorder %s21, 0
        // Predicated region
        $region65: #{mapnet_pallas.1} parent=47 // pred_check
          %p348 = pneg %p347
        $region66: #{mapnet_pallas.1} parent=47 // pred_check_branch
          %350 = sbr.rel (%p348) target = $region68
        $region67: #{mapnet_pallas.1} parent=47 // pred_region
          %v351 = vld [vmem:[%s0] sm:$0xff]
          %v352 = vld [vmem:[%s0 + $0x8] sm:$0xff]
          %v353 = vld [vmem:[%s0 + $0x10] sm:$0xff]
          %v354 = vld [vmem:[%s0 + $0x18] sm:$0xff]
          %v355 = vld [vmem:[%s0 + $0x20] sm:$0xff]
          %v356 = vld [vmem:[%s0 + $0x28] sm:$0xff]
          %v357 = vld [vmem:[%s0 + $0x30] sm:$0xff]
          %v358 = vld [vmem:[%s0 + $0x38] sm:$0xff]
          %v359 = vld [vmem:[%s1 + $0x6] sm:$0x1]
          %361 = vset.pattern.permute.xlu0 0
          %362 = vperm.xlu0 %361, %v351
          %v363 = vpop.permute.xlu0 %362
          %366 = vset.pattern.permute.xlu0 0
          %367 = vperm.xlu0 %366, %v352
          %v368 = vpop.permute.xlu0 %367
          %371 = vset.pattern.permute.xlu0 0
          %372 = vperm.xlu0 %371, %v353
          %v373 = vpop.permute.xlu0 %372
          %376 = vset.pattern.permute.xlu0 0
          %377 = vperm.xlu0 %376, %v354
          %v378 = vpop.permute.xlu0 %377
          %381 = vset.pattern.permute.xlu0 0
          %382 = vperm.xlu0 %381, %v355
          %v383 = vpop.permute.xlu0 %382
          %386 = vset.pattern.permute.xlu0 0
          %387 = vperm.xlu0 %386, %v356
          %v388 = vpop.permute.xlu0 %387
          %391 = vset.pattern.permute.xlu0 0
          %392 = vperm.xlu0 %391, %v357
          %v393 = vpop.permute.xlu0 %392
          %396 = vset.pattern.permute.xlu0 0
          %397 = vperm.xlu0 %396, %v358
          %v398 = vpop.permute.xlu0 %397
          %v400 = vlaneseq
          %v401 = vshrl.u32 %v400, 7
          %v402 = vsub.s32 0, %v401
          %v403 = vrot.slane %v359, %v402
          %v404 = vmul.f32 %v363, %v403
          %v405 = vmul.f32 %v368, %v403
          %v406 = vmul.f32 %v373, %v403
          %v407 = vmul.f32 %v378, %v403
          %v408 = vmul.f32 %v383, %v403
          %v409 = vmul.f32 %v388, %v403
          %v410 = vmul.f32 %v393, %v403
          %v411 = vmul.f32 %v398, %v403
          %v412 = vld [vmem:[%s1 + $0x7] sm:$0x1]
          %413 = vset.pattern.permute.xlu0 1
          %414 = vperm.xlu0 %413, %v351
          %v415 = vpop.permute.xlu0 %414
          %417 = vset.pattern.permute.xlu0 1
          %418 = vperm.xlu0 %417, %v352
          %v419 = vpop.permute.xlu0 %418
          %421 = vset.pattern.permute.xlu0 1
          %422 = vperm.xlu0 %421, %v353
          %v423 = vpop.permute.xlu0 %422
          %425 = vset.pattern.permute.xlu0 1
          %426 = vperm.xlu0 %425, %v354
          %v427 = vpop.permute.xlu0 %426
          %429 = vset.pattern.permute.xlu0 1
          %430 = vperm.xlu0 %429, %v355
          %v431 = vpop.permute.xlu0 %430
          %433 = vset.pattern.permute.xlu0 1
          %434 = vperm.xlu0 %433, %v356
          %v435 = vpop.permute.xlu0 %434
          %437 = vset.pattern.permute.xlu0 1
          %438 = vperm.xlu0 %437, %v357
          %v439 = vpop.permute.xlu0 %438
          %441 = vset.pattern.permute.xlu0 1
          %442 = vperm.xlu0 %441, %v358
          %v443 = vpop.permute.xlu0 %442
          %v445 = vlaneseq
          %v446 = vshrl.u32 %v445, 7
          %v447 = vsub.s32 0, %v446
          %v448 = vrot.slane %v412, %v447
          %v449 = vmul.f32 %v415, %v448
          %v450 = vmul.f32 %v419, %v448
          %v451 = vmul.f32 %v423, %v448
          %v452 = vmul.f32 %v427, %v448
          %v453 = vmul.f32 %v431, %v448
          %v454 = vmul.f32 %v435, %v448
          %v455 = vmul.f32 %v439, %v448
          %v456 = vmul.f32 %v443, %v448
          %v457 = vadd.f32 %v404, %v449
          %v458 = vadd.f32 %v405, %v450
          %v459 = vadd.f32 %v406, %v451
          %v460 = vadd.f32 %v407, %v452
          %v461 = vadd.f32 %v408, %v453
          %v462 = vadd.f32 %v409, %v454
          %v463 = vadd.f32 %v410, %v455
          %v464 = vadd.f32 %v411, %v456
          %v465 = vld [vmem:[%s1] sm:$0x1]
          %v466 = vlaneseq
          %v467 = vshrl.u32 %v466, 7
          %v468 = vsub.s32 0, %v467
          %v469 = vrot.slane %v465, %v468
          %v470 = vadd.f32 %v457, %v469
          %v471 = vadd.f32 %v458, %v469
          %v472 = vadd.f32 %v459, %v469
          %v473 = vadd.f32 %v460, %v469
          %v474 = vadd.f32 %v461, %v469
          %v475 = vadd.f32 %v462, %v469
          %v476 = vadd.f32 %v463, %v469
          %v477 = vadd.f32 %v464, %v469
          %v478 = vmax.f32 %v470, 0.0
          %v479 = vmax.f32 %v471, 0.0
          %v480 = vmax.f32 %v472, 0.0
          %v481 = vmax.f32 %v473, 0.0
          %v482 = vmax.f32 %v474, 0.0
          %v483 = vmax.f32 %v475, 0.0
          %v484 = vmax.f32 %v476, 0.0
          %v485 = vmax.f32 %v477, 0.0
          %v486 = vld [vmem:[#allocation2] sm:$0xf]
          %v487 = vld [vmem:[#allocation2 + $0x4] sm:$0xf]
          %v488 = vld [vmem:[#allocation2 + $0x8] sm:$0xf]
          %v489 = vld [vmem:[#allocation2 + $0xc] sm:$0xf]
          %v490 = vld [vmem:[#allocation2 + $0x10] sm:$0xf]
          %v491 = vld [vmem:[#allocation2 + $0x14] sm:$0xf]
          %v492 = vld [vmem:[#allocation2 + $0x18] sm:$0xf]
          %v493 = vld [vmem:[#allocation2 + $0x1c] sm:$0xf]
          %v494 = vld [vmem:[#allocation2 + $0x20] sm:$0xf]
          %v495 = vld [vmem:[#allocation2 + $0x24] sm:$0xf]
          %v496 = vld [vmem:[#allocation2 + $0x28] sm:$0xf]
          %v497 = vld [vmem:[#allocation2 + $0x2c] sm:$0xf]
          %v498 = vld [vmem:[#allocation2 + $0x30] sm:$0xf]
          %v499 = vld [vmem:[#allocation2 + $0x34] sm:$0xf]
          %v500 = vld [vmem:[#allocation2 + $0x38] sm:$0xf]
          %v501 = vld [vmem:[#allocation2 + $0x3c] sm:$0xf]
          %v502 = vpack.c.bf16 %v479, %v478
          %v503 = vpack.c.bf16 %v481, %v480
          %v504 = vpack.c.bf16 %v483, %v482
          %v505 = vpack.c.bf16 %v485, %v484
          %v522 = vunpack.c.l.b16 %v486
          %v523 = vunpack.c.l.b16 %v487
          %v524 = vunpack.c.l.b16 %v488
          %v525 = vunpack.c.l.b16 %v489
          %v526 = vunpack.c.l.b16 %v490
          %v527 = vunpack.c.l.b16 %v491
          %v528 = vunpack.c.l.b16 %v492
          %v529 = vunpack.c.l.b16 %v493
          %v530 = vunpack.c.l.b16 %v494
          %v531 = vunpack.c.l.b16 %v495
          %v532 = vunpack.c.l.b16 %v496
          %v533 = vunpack.c.l.b16 %v497
          %v534 = vunpack.c.l.b16 %v498
          %v535 = vunpack.c.l.b16 %v499
          %v536 = vunpack.c.l.b16 %v500
          %v537 = vunpack.c.l.b16 %v501
          %v538 = vpack.c.b16 %v523, %v522
          %v539 = vpack.c.b16 %v525, %v524
          %v540 = vpack.c.b16 %v527, %v526
          %v541 = vpack.c.b16 %v529, %v528
          %v542 = vpack.c.b16 %v531, %v530
          %v543 = vpack.c.b16 %v533, %v532
          %v544 = vpack.c.b16 %v535, %v534
          %v545 = vpack.c.b16 %v537, %v536
          %554 = vmatprep.subr.bf16.mxu0 0
          %555 = vmatpush1.bf16.msra.mxu0 %v538
          %556 = vmatprep.subr.bf16.mxu0 0
          %557 = vmatpush1.bf16.msra.mxu0 %v539
          %558 = vmatprep.subr.bf16.mxu0 0
          %559 = vmatpush1.bf16.msra.mxu0 %v540
          %560 = vmatprep.subr.bf16.mxu0 0
          %561 = vmatpush1.bf16.msra.mxu0 %v541
          %562 = vmatprep.subr.bf16.mxu0 0
          %563 = vmatpush1.bf16.msra.mxu0 %v542
          %564 = vmatprep.subr.bf16.mxu0 0
          %565 = vmatpush1.bf16.msra.mxu0 %v543
          %566 = vmatprep.subr.bf16.mxu0 0
          %567 = vmatpush1.bf16.msra.mxu0 %v544
          %568 = vmatprep.subr.bf16.mxu0 0
          %569 = vmatpush1.bf16.msra.mxu0 %v545
          %570 = vmatprep.subr.bf16.mxu0 0
          %571 = vmatpush1.bf16.msra.mxu0 0
          %572 = vmatprep.subr.bf16.mxu0 0
          %573 = vmatpush1.bf16.msra.mxu0 0
          %574 = vmatprep.subr.bf16.mxu0 0
          %575 = vmatpush1.bf16.msra.mxu0 0
          %576 = vmatprep.subr.bf16.mxu0 0
          %577 = vmatpush1.bf16.msra.mxu0 0
          %578 = vmatprep.subr.bf16.mxu0 0
          %579 = vmatpush1.bf16.msra.mxu0 0
          %580 = vmatprep.subr.bf16.mxu0 0
          %581 = vmatpush1.bf16.msra.mxu0 0
          %582 = vmatprep.subr.bf16.mxu0 0
          %583 = vmatpush1.bf16.msra.mxu0 0
          %584 = vmatprep.subr.bf16.mxu0 0
          %585 = vmatpush1.bf16.msra.mxu0 0
          %586 = vmatprep.mubr.bf16.mxu0 0
          %587 = vmatmul.mubr.bf16.gmra.mrb[0].mxu0 %v502
          %v588 = vpop.f32.mrb[0].mxu0
          %v589 = vadd.f32 0.0, %v588
          %v590 = vpop.f32.mrb[0].mxu0
          %v591 = vpop.f32.mrb[0].mxu0
          %v592 = vadd.f32 0.0, %v591
          %v593 = vpop.f32.mrb[0].mxu0
          %594 = vmatprep.mubr.bf16.mxu0 0
          %595 = vmatmul.mubr.bf16.gmra.mrb[0].mxu0 %v503
          %v596 = vpop.f32.mrb[0].mxu0
          %v597 = vadd.f32 0.0, %v596
          %v598 = vpop.f32.mrb[0].mxu0
          %v599 = vpop.f32.mrb[0].mxu0
          %v600 = vadd.f32 0.0, %v599
          %v601 = vpop.f32.mrb[0].mxu0
          %602 = vmatprep.mubr.bf16.mxu0 0
          %603 = vmatmul.mubr.bf16.gmra.mrb[0].mxu0 %v504
          %v604 = vpop.f32.mrb[0].mxu0
          %v605 = vadd.f32 0.0, %v604
          %v606 = vpop.f32.mrb[0].mxu0
          %v607 = vpop.f32.mrb[0].mxu0
          %v608 = vadd.f32 0.0, %v607
          %v609 = vpop.f32.mrb[0].mxu0
          %610 = vmatprep.mubr.bf16.mxu0 0
          %611 = vmatmul.mubr.bf16.gmra.mrb[0].mxu0 %v505
          %v612 = vpop.f32.mrb[0].mxu0
          %v613 = vadd.f32 0.0, %v612
          %v614 = vpop.f32.mrb[0].mxu0
          %v615 = vpop.f32.mrb[0].mxu0
          %v616 = vadd.f32 0.0, %v615
          %v617 = vpop.f32.mrb[0].mxu0
          %618 = vdwg.mxu0
          %v619 = vld [vmem:[%s1 + $0x1] sm:$0x1]
          %v620 = vld [vmem:[%s1 + $0x2] sm:$0x1]
          %621 = vadd.xlane.f32.xlu0 %v589
          %v622 = vpop.xlane.xlu0 %621
          %623 = vadd.xlane.f32.xlu0 %v592
          %v624 = vpop.xlane.xlu0 %623
          %625 = vadd.xlane.f32.xlu0 %v597
          %v626 = vpop.xlane.xlu0 %625
          %627 = vadd.xlane.f32.xlu0 %v600
          %v628 = vpop.xlane.xlu0 %627
          %629 = vadd.xlane.f32.xlu0 %v605
          %v630 = vpop.xlane.xlu0 %629
          %631 = vadd.xlane.f32.xlu0 %v608
          %v632 = vpop.xlane.xlu0 %631
          %633 = vadd.xlane.f32.xlu0 %v613
          %v634 = vpop.xlane.xlu0 %633
          %635 = vadd.xlane.f32.xlu0 %v616
          %v636 = vpop.xlane.xlu0 %635
          %v637 = vrcp.pop 128.0
          %v638 = vmul.f32 %v622, %v637
          %v639 = vmul.f32 %v624, %v637
          %v640 = vmul.f32 %v626, %v637
          %v641 = vmul.f32 %v628, %v637
          %v642 = vmul.f32 %v630, %v637
          %v643 = vmul.f32 %v632, %v637
          %v644 = vmul.f32 %v634, %v637
          %v645 = vmul.f32 %v636, %v637
          %v646 = vsub.f32 %v589, %v638
          %v647 = vsub.f32 %v592, %v639
          %v648 = vsub.f32 %v597, %v640
          %v649 = vsub.f32 %v600, %v641
          %v650 = vsub.f32 %v605, %v642
          %v651 = vsub.f32 %v608, %v643
          %v652 = vsub.f32 %v613, %v644
          %v653 = vsub.f32 %v616, %v645
          %v654 = vmul.f32 %v646, %v646
          %v655 = vmul.f32 %v647, %v647
          %v656 = vmul.f32 %v648, %v648
          %v657 = vmul.f32 %v649, %v649
          %v658 = vmul.f32 %v650, %v650
          %v659 = vmul.f32 %v651, %v651
          %v660 = vmul.f32 %v652, %v652
          %v661 = vmul.f32 %v653, %v653
          %662 = vadd.xlane.f32.xlu0 %v654
          %v663 = vpop.xlane.xlu0 %662
          %664 = vadd.xlane.f32.xlu0 %v655
          %v665 = vpop.xlane.xlu0 %664
          %666 = vadd.xlane.f32.xlu0 %v656
          %v667 = vpop.xlane.xlu0 %666
          %668 = vadd.xlane.f32.xlu0 %v657
          %v669 = vpop.xlane.xlu0 %668
          %670 = vadd.xlane.f32.xlu0 %v658
          %v671 = vpop.xlane.xlu0 %670
          %672 = vadd.xlane.f32.xlu0 %v659
          %v673 = vpop.xlane.xlu0 %672
          %674 = vadd.xlane.f32.xlu0 %v660
          %v675 = vpop.xlane.xlu0 %674
          %676 = vadd.xlane.f32.xlu0 %v661
          %v677 = vpop.xlane.xlu0 %676
          %v678 = vmul.f32 %v663, %v637
          %v679 = vmul.f32 %v665, %v637
          %v680 = vmul.f32 %v667, %v637
          %v681 = vmul.f32 %v669, %v637
          %v682 = vmul.f32 %v671, %v637
          %v683 = vmul.f32 %v673, %v637
          %v684 = vmul.f32 %v675, %v637
          %v685 = vmul.f32 %v677, %v637
          %v686 = vadd.f32 %v678, 1e-05
          %v687 = vadd.f32 %v679, 1e-05
          %v688 = vadd.f32 %v680, 1e-05
          %v689 = vadd.f32 %v681, 1e-05
          %v690 = vadd.f32 %v682, 1e-05
          %v691 = vadd.f32 %v683, 1e-05
          %v692 = vadd.f32 %v684, 1e-05
          %v693 = vadd.f32 %v685, 1e-05
          %v694 = vrsqrt.pop %v686
          %v695 = vrsqrt.pop %v687
          %v696 = vrsqrt.pop %v688
          %v697 = vrsqrt.pop %v689
          %v698 = vrsqrt.pop %v690
          %v699 = vrsqrt.pop %v691
          %v700 = vrsqrt.pop %v692
          %v701 = vrsqrt.pop %v693
          %v702 = vmul.f32 %v646, %v694
          %v703 = vmul.f32 %v647, %v695
          %v704 = vmul.f32 %v648, %v696
          %v705 = vmul.f32 %v649, %v697
          %v706 = vmul.f32 %v650, %v698
          %v707 = vmul.f32 %v651, %v699
          %v708 = vmul.f32 %v652, %v700
          %v709 = vmul.f32 %v653, %v701
          %v710 = vlaneseq
          %v711 = vshrl.u32 %v710, 7
          %v712 = vsub.s32 0, %v711
          %v713 = vrot.slane %v619, %v712
          %v714 = vmul.f32 %v702, %v713
          %v715 = vmul.f32 %v703, %v713
          %v716 = vmul.f32 %v704, %v713
          %v717 = vmul.f32 %v705, %v713
          %v718 = vmul.f32 %v706, %v713
          %v719 = vmul.f32 %v707, %v713
          %v720 = vmul.f32 %v708, %v713
          %v721 = vmul.f32 %v709, %v713
          %v722 = vlaneseq
          %v723 = vshrl.u32 %v722, 7
          %v724 = vsub.s32 0, %v723
          %v725 = vrot.slane %v620, %v724
          %v726 = vadd.f32 %v714, %v725
          %v727 = vadd.f32 %v715, %v725
          %v728 = vadd.f32 %v716, %v725
          %v729 = vadd.f32 %v717, %v725
          %v730 = vadd.f32 %v718, %v725
          %v731 = vadd.f32 %v719, %v725
          %v732 = vadd.f32 %v720, %v725
          %v733 = vadd.f32 %v721, %v725
          %v734 = vld [vmem:[%s1 + $0x8] sm:$0x1]
          %735 = vset.pattern.permute.xlu0 2
          %736 = vperm.xlu0 %735, %v351
          %v737 = vpop.permute.xlu0 %736
          %739 = vset.pattern.permute.xlu0 2
          %740 = vperm.xlu0 %739, %v352
          %v741 = vpop.permute.xlu0 %740
          %743 = vset.pattern.permute.xlu0 2
          %744 = vperm.xlu0 %743, %v353
          %v745 = vpop.permute.xlu0 %744
          %747 = vset.pattern.permute.xlu0 2
          %748 = vperm.xlu0 %747, %v354
          %v749 = vpop.permute.xlu0 %748
          %751 = vset.pattern.permute.xlu0 2
          %752 = vperm.xlu0 %751, %v355
          %v753 = vpop.permute.xlu0 %752
          %755 = vset.pattern.permute.xlu0 2
          %756 = vperm.xlu0 %755, %v356
          %v757 = vpop.permute.xlu0 %756
          %759 = vset.pattern.permute.xlu0 2
          %760 = vperm.xlu0 %759, %v357
          %v761 = vpop.permute.xlu0 %760
          %763 = vset.pattern.permute.xlu0 2
          %764 = vperm.xlu0 %763, %v358
          %v765 = vpop.permute.xlu0 %764
          %v767 = vlaneseq
          %v768 = vshrl.u32 %v767, 7
          %v769 = vsub.s32 0, %v768
          %v770 = vrot.slane %v734, %v769
          %v771 = vmul.f32 %v737, %v770
          %v772 = vmul.f32 %v741, %v770
          %v773 = vmul.f32 %v745, %v770
          %v774 = vmul.f32 %v749, %v770
          %v775 = vmul.f32 %v753, %v770
          %v776 = vmul.f32 %v757, %v770
          %v777 = vmul.f32 %v761, %v770
          %v778 = vmul.f32 %v765, %v770
          %v779 = vld [vmem:[%s1 + $0x9] sm:$0x1]
          %780 = vset.pattern.permute.xlu0 3
          %781 = vperm.xlu0 %780, %v351
          %v782 = vpop.permute.xlu0 %781
          %784 = vset.pattern.permute.xlu0 3
          %785 = vperm.xlu0 %784, %v352
          %v786 = vpop.permute.xlu0 %785
          %788 = vset.pattern.permute.xlu0 3
          %789 = vperm.xlu0 %788, %v353
          %v790 = vpop.permute.xlu0 %789
          %792 = vset.pattern.permute.xlu0 3
          %793 = vperm.xlu0 %792, %v354
          %v794 = vpop.permute.xlu0 %793
          %796 = vset.pattern.permute.xlu0 3
          %797 = vperm.xlu0 %796, %v355
          %v798 = vpop.permute.xlu0 %797
          %800 = vset.pattern.permute.xlu0 3
          %801 = vperm.xlu0 %800, %v356
          %v802 = vpop.permute.xlu0 %801
          %804 = vset.pattern.permute.xlu0 3
          %805 = vperm.xlu0 %804, %v357
          %v806 = vpop.permute.xlu0 %805
          %808 = vset.pattern.permute.xlu0 3
          %809 = vperm.xlu0 %808, %v358
          %v810 = vpop.permute.xlu0 %809
          %v812 = vlaneseq
          %v813 = vshrl.u32 %v812, 7
          %v814 = vsub.s32 0, %v813
          %v815 = vrot.slane %v779, %v814
          %v816 = vmul.f32 %v782, %v815
          %v817 = vmul.f32 %v786, %v815
          %v818 = vmul.f32 %v790, %v815
          %v819 = vmul.f32 %v794, %v815
          %v820 = vmul.f32 %v798, %v815
          %v821 = vmul.f32 %v802, %v815
          %v822 = vmul.f32 %v806, %v815
          %v823 = vmul.f32 %v810, %v815
          %v824 = vadd.f32 %v771, %v816
          %v825 = vadd.f32 %v772, %v817
          %v826 = vadd.f32 %v773, %v818
          %v827 = vadd.f32 %v774, %v819
          %v828 = vadd.f32 %v775, %v820
          %v829 = vadd.f32 %v776, %v821
          %v830 = vadd.f32 %v777, %v822
          %v831 = vadd.f32 %v778, %v823
          %v832 = vld [vmem:[%s1 + $0x3] sm:$0x1]
          %v833 = vlaneseq
          %v834 = vshrl.u32 %v833, 7
          %v835 = vsub.s32 0, %v834
          %v836 = vrot.slane %v832, %v835
          %v837 = vadd.f32 %v824, %v836
          %v838 = vadd.f32 %v825, %v836
          %v839 = vadd.f32 %v826, %v836
          %v840 = vadd.f32 %v827, %v836
          %v841 = vadd.f32 %v828, %v836
          %v842 = vadd.f32 %v829, %v836
          %v843 = vadd.f32 %v830, %v836
          %v844 = vadd.f32 %v831, %v836
          %v845 = vmax.f32 %v837, 0.0
          %v846 = vmax.f32 %v838, 0.0
          %v847 = vmax.f32 %v839, 0.0
          %v848 = vmax.f32 %v840, 0.0
          %v849 = vmax.f32 %v841, 0.0
          %v850 = vmax.f32 %v842, 0.0
          %v851 = vmax.f32 %v843, 0.0
          %v852 = vmax.f32 %v844, 0.0
          %s853 = scalar_lea.vmem [#allocation2], 64
          %v854 = vld [vmem:[%s853] sm:$0xf]
          %v855 = vld [vmem:[%s853 + $0x4] sm:$0xf]
          %v856 = vld [vmem:[%s853 + $0x8] sm:$0xf]
          %v857 = vld [vmem:[%s853 + $0xc] sm:$0xf]
          %v858 = vld [vmem:[%s853 + $0x10] sm:$0xf]
          %v859 = vld [vmem:[%s853 + $0x14] sm:$0xf]
          %v860 = vld [vmem:[%s853 + $0x18] sm:$0xf]
          %v861 = vld [vmem:[%s853 + $0x1c] sm:$0xf]
          %v862 = vld [vmem:[%s853 + $0x20] sm:$0xf]
          %v863 = vld [vmem:[%s853 + $0x24] sm:$0xf]
          %v864 = vld [vmem:[%s853 + $0x28] sm:$0xf]
          %v865 = vld [vmem:[%s853 + $0x2c] sm:$0xf]
          %v866 = vld [vmem:[%s853 + $0x30] sm:$0xf]
          %v867 = vld [vmem:[%s853 + $0x34] sm:$0xf]
          %v868 = vld [vmem:[%s853 + $0x38] sm:$0xf]
          %v869 = vld [vmem:[%s853 + $0x3c] sm:$0xf]
          %v870 = vpack.c.bf16 %v846, %v845
          %v871 = vpack.c.bf16 %v848, %v847
          %v872 = vpack.c.bf16 %v850, %v849
          %v873 = vpack.c.bf16 %v852, %v851
          %v890 = vunpack.c.l.b16 %v854
          %v891 = vunpack.c.l.b16 %v855
          %v892 = vunpack.c.l.b16 %v856
          %v893 = vunpack.c.l.b16 %v857
          %v894 = vunpack.c.l.b16 %v858
          %v895 = vunpack.c.l.b16 %v859
          %v896 = vunpack.c.l.b16 %v860
          %v897 = vunpack.c.l.b16 %v861
          %v898 = vunpack.c.l.b16 %v862
          %v899 = vunpack.c.l.b16 %v863
          %v900 = vunpack.c.l.b16 %v864
          %v901 = vunpack.c.l.b16 %v865
          %v902 = vunpack.c.l.b16 %v866
          %v903 = vunpack.c.l.b16 %v867
          %v904 = vunpack.c.l.b16 %v868
          %v905 = vunpack.c.l.b16 %v869
          %v906 = vpack.c.b16 %v891, %v890
          %v907 = vpack.c.b16 %v893, %v892
          %v908 = vpack.c.b16 %v895, %v894
          %v909 = vpack.c.b16 %v897, %v896
          %v910 = vpack.c.b16 %v899, %v898
          %v911 = vpack.c.b16 %v901, %v900
          %v912 = vpack.c.b16 %v903, %v902
          %v913 = vpack.c.b16 %v905, %v904
          %922 = vmatprep.subr.bf16.mxu0 0
          %923 = vmatpush1.bf16.msra.mxu0 %v906
          %924 = vmatprep.subr.bf16.mxu0 0
          %925 = vmatpush1.bf16.msra.mxu0 %v907
          %926 = vmatprep.subr.bf16.mxu0 0
          %927 = vmatpush1.bf16.msra.mxu0 %v908
          %928 = vmatprep.subr.bf16.mxu0 0
          %929 = vmatpush1.bf16.msra.mxu0 %v909
          %930 = vmatprep.subr.bf16.mxu0 0
          %931 = vmatpush1.bf16.msra.mxu0 %v910
          %932 = vmatprep.subr.bf16.mxu0 0
          %933 = vmatpush1.bf16.msra.mxu0 %v911
          %934 = vmatprep.subr.bf16.mxu0 0
          %935 = vmatpush1.bf16.msra.mxu0 %v912
          %936 = vmatprep.subr.bf16.mxu0 0
          %937 = vmatpush1.bf16.msra.mxu0 %v913
          %938 = vmatprep.subr.bf16.mxu0 0
          %939 = vmatpush1.bf16.msra.mxu0 0
          %940 = vmatprep.subr.bf16.mxu0 0
          %941 = vmatpush1.bf16.msra.mxu0 0
          %942 = vmatprep.subr.bf16.mxu0 0
          %943 = vmatpush1.bf16.msra.mxu0 0
          %944 = vmatprep.subr.bf16.mxu0 0
          %945 = vmatpush1.bf16.msra.mxu0 0
          %946 = vmatprep.subr.bf16.mxu0 0
          %947 = vmatpush1.bf16.msra.mxu0 0
          %948 = vmatprep.subr.bf16.mxu0 0
          %949 = vmatpush1.bf16.msra.mxu0 0
          %950 = vmatprep.subr.bf16.mxu0 0
          %951 = vmatpush1.bf16.msra.mxu0 0
          %952 = vmatprep.subr.bf16.mxu0 0
          %953 = vmatpush1.bf16.msra.mxu0 0
          %954 = vmatprep.mubr.bf16.mxu0 0
          %955 = vmatmul.mubr.bf16.gmra.mrb[0].mxu0 %v870
          %v956 = vpop.f32.mrb[0].mxu0
          %v957 = vadd.f32 0.0, %v956
          %v958 = vpop.f32.mrb[0].mxu0
          %v959 = vpop.f32.mrb[0].mxu0
          %v960 = vadd.f32 0.0, %v959
          %v961 = vpop.f32.mrb[0].mxu0
          %962 = vmatprep.mubr.bf16.mxu0 0
          %963 = vmatmul.mubr.bf16.gmra.mrb[0].mxu0 %v871
          %v964 = vpop.f32.mrb[0].mxu0
          %v965 = vadd.f32 0.0, %v964
          %v966 = vpop.f32.mrb[0].mxu0
          %v967 = vpop.f32.mrb[0].mxu0
          %v968 = vadd.f32 0.0, %v967
          %v969 = vpop.f32.mrb[0].mxu0
          %970 = vmatprep.mubr.bf16.mxu0 0
          %971 = vmatmul.mubr.bf16.gmra.mrb[0].mxu0 %v872
          %v972 = vpop.f32.mrb[0].mxu0
          %v973 = vadd.f32 0.0, %v972
          %v974 = vpop.f32.mrb[0].mxu0
          %v975 = vpop.f32.mrb[0].mxu0
          %v976 = vadd.f32 0.0, %v975
          %v977 = vpop.f32.mrb[0].mxu0
          %978 = vmatprep.mubr.bf16.mxu0 0
          %979 = vmatmul.mubr.bf16.gmra.mrb[0].mxu0 %v873
          %v980 = vpop.f32.mrb[0].mxu0
          %v981 = vadd.f32 0.0, %v980
          %v982 = vpop.f32.mrb[0].mxu0
          %v983 = vpop.f32.mrb[0].mxu0
          %v984 = vadd.f32 0.0, %v983
          %v985 = vpop.f32.mrb[0].mxu0
          %986 = vdwg.mxu0
          %v987 = vld [vmem:[%s1 + $0x4] sm:$0x1]
          %v988 = vld [vmem:[%s1 + $0x5] sm:$0x1]
          %989 = vadd.xlane.f32.xlu0 %v957
          %v990 = vpop.xlane.xlu0 %989
          %991 = vadd.xlane.f32.xlu0 %v960
          %v992 = vpop.xlane.xlu0 %991
          %993 = vadd.xlane.f32.xlu0 %v965
          %v994 = vpop.xlane.xlu0 %993
          %995 = vadd.xlane.f32.xlu0 %v968
          %v996 = vpop.xlane.xlu0 %995
          %997 = vadd.xlane.f32.xlu0 %v973
          %v998 = vpop.xlane.xlu0 %997
          %999 = vadd.xlane.f32.xlu0 %v976
          %v1000 = vpop.xlane.xlu0 %999
          %1001 = vadd.xlane.f32.xlu0 %v981
          %v1002 = vpop.xlane.xlu0 %1001
          %1003 = vadd.xlane.f32.xlu0 %v984
          %v1004 = vpop.xlane.xlu0 %1003
          %v1005 = vmul.f32 %v990, %v637
          %v1006 = vmul.f32 %v992, %v637
          %v1007 = vmul.f32 %v994, %v637
          %v1008 = vmul.f32 %v996, %v637
          %v1009 = vmul.f32 %v998, %v637
          %v1010 = vmul.f32 %v1000, %v637
          %v1011 = vmul.f32 %v1002, %v637
          %v1012 = vmul.f32 %v1004, %v637
          %v1013 = vsub.f32 %v957, %v1005
          %v1014 = vsub.f32 %v960, %v1006
          %v1015 = vsub.f32 %v965, %v1007
          %v1016 = vsub.f32 %v968, %v1008
          %v1017 = vsub.f32 %v973, %v1009
          %v1018 = vsub.f32 %v976, %v1010
          %v1019 = vsub.f32 %v981, %v1011
          %v1020 = vsub.f32 %v984, %v1012
          %v1021 = vmul.f32 %v1013, %v1013
          %v1022 = vmul.f32 %v1014, %v1014
          %v1023 = vmul.f32 %v1015, %v1015
          %v1024 = vmul.f32 %v1016, %v1016
          %v1025 = vmul.f32 %v1017, %v1017
          %v1026 = vmul.f32 %v1018, %v1018
          %v1027 = vmul.f32 %v1019, %v1019
          %v1028 = vmul.f32 %v1020, %v1020
          %1029 = vadd.xlane.f32.xlu0 %v1021
          %v1030 = vpop.xlane.xlu0 %1029
          %1031 = vadd.xlane.f32.xlu0 %v1022
          %v1032 = vpop.xlane.xlu0 %1031
          %1033 = vadd.xlane.f32.xlu0 %v1023
          %v1034 = vpop.xlane.xlu0 %1033
          %1035 = vadd.xlane.f32.xlu0 %v1024
          %v1036 = vpop.xlane.xlu0 %1035
          %1037 = vadd.xlane.f32.xlu0 %v1025
          %v1038 = vpop.xlane.xlu0 %1037
          %1039 = vadd.xlane.f32.xlu0 %v1026
          %v1040 = vpop.xlane.xlu0 %1039
          %1041 = vadd.xlane.f32.xlu0 %v1027
          %v1042 = vpop.xlane.xlu0 %1041
          %1043 = vadd.xlane.f32.xlu0 %v1028
          %v1044 = vpop.xlane.xlu0 %1043
          %v1045 = vmul.f32 %v1030, %v637
          %v1046 = vmul.f32 %v1032, %v637
          %v1047 = vmul.f32 %v1034, %v637
          %v1048 = vmul.f32 %v1036, %v637
          %v1049 = vmul.f32 %v1038, %v637
          %v1050 = vmul.f32 %v1040, %v637
          %v1051 = vmul.f32 %v1042, %v637
          %v1052 = vmul.f32 %v1044, %v637
          %v1053 = vadd.f32 %v1045, 1e-05
          %v1054 = vadd.f32 %v1046, 1e-05
          %v1055 = vadd.f32 %v1047, 1e-05
          %v1056 = vadd.f32 %v1048, 1e-05
          %v1057 = vadd.f32 %v1049, 1e-05
          %v1058 = vadd.f32 %v1050, 1e-05
          %v1059 = vadd.f32 %v1051, 1e-05
          %v1060 = vadd.f32 %v1052, 1e-05
          %v1061 = vrsqrt.pop %v1053
          %v1062 = vrsqrt.pop %v1054
          %v1063 = vrsqrt.pop %v1055
          %v1064 = vrsqrt.pop %v1056
          %v1065 = vrsqrt.pop %v1057
          %v1066 = vrsqrt.pop %v1058
          %v1067 = vrsqrt.pop %v1059
          %v1068 = vrsqrt.pop %v1060
          %v1069 = vmul.f32 %v1013, %v1061
          %v1070 = vmul.f32 %v1014, %v1062
          %v1071 = vmul.f32 %v1015, %v1063
          %v1072 = vmul.f32 %v1016, %v1064
          %v1073 = vmul.f32 %v1017, %v1065
          %v1074 = vmul.f32 %v1018, %v1066
          %v1075 = vmul.f32 %v1019, %v1067
          %v1076 = vmul.f32 %v1020, %v1068
          %v1077 = vlaneseq
          %v1078 = vshrl.u32 %v1077, 7
          %v1079 = vsub.s32 0, %v1078
          %v1080 = vrot.slane %v987, %v1079
          %v1081 = vmul.f32 %v1069, %v1080
          %v1082 = vmul.f32 %v1070, %v1080
          %v1083 = vmul.f32 %v1071, %v1080
          %v1084 = vmul.f32 %v1072, %v1080
          %v1085 = vmul.f32 %v1073, %v1080
          %v1086 = vmul.f32 %v1074, %v1080
          %v1087 = vmul.f32 %v1075, %v1080
          %v1088 = vmul.f32 %v1076, %v1080
          %v1089 = vlaneseq
          %v1090 = vshrl.u32 %v1089, 7
          %v1091 = vsub.s32 0, %v1090
          %v1092 = vrot.slane %v988, %v1091
          %v1093 = vadd.f32 %v1081, %v1092
          %v1094 = vadd.f32 %v1082, %v1092
          %v1095 = vadd.f32 %v1083, %v1092
          %v1096 = vadd.f32 %v1084, %v1092
          %v1097 = vadd.f32 %v1085, %v1092
          %v1098 = vadd.f32 %v1086, %v1092
          %v1099 = vadd.f32 %v1087, %v1092
          %v1100 = vadd.f32 %v1088, %v1092
          %v1101 = vadd.f32 %v726, %v1093
          %v1102 = vadd.f32 %v727, %v1094
          %v1103 = vadd.f32 %v728, %v1095
          %v1104 = vadd.f32 %v729, %v1096
          %v1105 = vadd.f32 %v730, %v1097
          %v1106 = vadd.f32 %v731, %v1098
          %v1107 = vadd.f32 %v732, %v1099
          %v1108 = vadd.f32 %v733, %v1100
          %v1109 = vmax.f32 %v1101, 0.0
          %v1110 = vmax.f32 %v1102, 0.0
          %v1111 = vmax.f32 %v1103, 0.0
          %v1112 = vmax.f32 %v1104, 0.0
          %v1113 = vmax.f32 %v1105, 0.0
          %v1114 = vmax.f32 %v1106, 0.0
          %v1115 = vmax.f32 %v1107, 0.0
          %v1116 = vmax.f32 %v1108, 0.0
          %1117 = vst [vmem:[#allocation9] sm:$0xff] %v1109
          %1118 = vst [vmem:[#allocation9 + $0x8] sm:$0xff] %v1110
          %1119 = vst [vmem:[#allocation9 + $0x10] sm:$0xff] %v1111
          %1120 = vst [vmem:[#allocation9 + $0x18] sm:$0xff] %v1112
          %1121 = vst [vmem:[#allocation9 + $0x20] sm:$0xff] %v1113
          %1122 = vst [vmem:[#allocation9 + $0x28] sm:$0xff] %v1114
          %1123 = vst [vmem:[#allocation9 + $0x30] sm:$0xff] %v1115
          %1124 = vst [vmem:[#allocation9 + $0x38] sm:$0xff] %v1116
        $region68: #{mapnet_pallas.1} parent=47 // pred_fallthru
          _
        %v1125 = vld [vmem:[#allocation9] sm:$0xff]
        %v1126 = vld [vmem:[#allocation9 + $0x8] sm:$0xff]
        %v1127 = vld [vmem:[#allocation9 + $0x10] sm:$0xff]
        %v1128 = vld [vmem:[#allocation9 + $0x18] sm:$0xff]
        %v1129 = vld [vmem:[#allocation9 + $0x20] sm:$0xff]
        %v1130 = vld [vmem:[#allocation9 + $0x28] sm:$0xff]
        %v1131 = vld [vmem:[#allocation9 + $0x30] sm:$0xff]
        %v1132 = vld [vmem:[#allocation9 + $0x38] sm:$0xff]
        %v1133 = vpack.c.bf16 %v1126, %v1125
        %v1134 = vpack.c.bf16 %v1128, %v1127
        %v1135 = vpack.c.bf16 %v1130, %v1129
        %v1136 = vpack.c.bf16 %v1132, %v1131
        %v1137 = vld [vmem:[%s306] sm:$0xf]
        %v1138 = vld [vmem:[%s306 + $0x4] sm:$0xf]
        %v1139 = vld [vmem:[%s306 + $0x8] sm:$0xf]
        %v1140 = vld [vmem:[%s306 + $0xc] sm:$0xf]
        %v1141 = vld [vmem:[%s306 + $0x10] sm:$0xf]
        %v1142 = vld [vmem:[%s306 + $0x14] sm:$0xf]
        %v1143 = vld [vmem:[%s306 + $0x18] sm:$0xf]
        %v1144 = vld [vmem:[%s306 + $0x1c] sm:$0xf]
        %v1145 = vld [vmem:[%s306 + $0x20] sm:$0xf]
        %v1146 = vld [vmem:[%s306 + $0x24] sm:$0xf]
        %v1147 = vld [vmem:[%s306 + $0x28] sm:$0xf]
        %v1148 = vld [vmem:[%s306 + $0x2c] sm:$0xf]
        %v1149 = vld [vmem:[%s306 + $0x30] sm:$0xf]
        %v1150 = vld [vmem:[%s306 + $0x34] sm:$0xf]
        %v1151 = vld [vmem:[%s306 + $0x38] sm:$0xf]
        %v1152 = vld [vmem:[%s306 + $0x3c] sm:$0xf]
        %s1153 = scalar_lea.vmem %s306, 64 [#allocation7]
        %v1154 = vld [vmem:[%s1153] sm:$0xf]
        %v1155 = vld [vmem:[%s1153 + $0x4] sm:$0xf]
        %v1156 = vld [vmem:[%s1153 + $0x8] sm:$0xf]
        %v1157 = vld [vmem:[%s1153 + $0xc] sm:$0xf]
        %v1158 = vld [vmem:[%s1153 + $0x10] sm:$0xf]
        %v1159 = vld [vmem:[%s1153 + $0x14] sm:$0xf]
        %v1160 = vld [vmem:[%s1153 + $0x18] sm:$0xf]
        %v1161 = vld [vmem:[%s1153 + $0x1c] sm:$0xf]
        %v1162 = vld [vmem:[%s1153 + $0x20] sm:$0xf]
        %v1163 = vld [vmem:[%s1153 + $0x24] sm:$0xf]
        %v1164 = vld [vmem:[%s1153 + $0x28] sm:$0xf]
        %v1165 = vld [vmem:[%s1153 + $0x2c] sm:$0xf]
        %v1166 = vld [vmem:[%s1153 + $0x30] sm:$0xf]
        %v1167 = vld [vmem:[%s1153 + $0x34] sm:$0xf]
        %v1168 = vld [vmem:[%s1153 + $0x38] sm:$0xf]
        %v1169 = vld [vmem:[%s1153 + $0x3c] sm:$0xf]
        %v1186 = vunpack.c.l.b16 %v1154
        %v1187 = vunpack.c.l.b16 %v1155
        %v1188 = vunpack.c.l.b16 %v1156
        %v1189 = vunpack.c.l.b16 %v1157
        %v1190 = vunpack.c.l.b16 %v1158
        %v1191 = vunpack.c.l.b16 %v1159
        %v1192 = vunpack.c.l.b16 %v1160
        %v1193 = vunpack.c.l.b16 %v1161
        %v1194 = vunpack.c.l.b16 %v1162
        %v1195 = vunpack.c.l.b16 %v1163
        %v1196 = vunpack.c.l.b16 %v1164
        %v1197 = vunpack.c.l.b16 %v1165
        %v1198 = vunpack.c.l.b16 %v1166
        %v1199 = vunpack.c.l.b16 %v1167
        %v1200 = vunpack.c.l.b16 %v1168
        %v1201 = vunpack.c.l.b16 %v1169
        %v1202 = vpack.c.b16 %v1187, %v1186
        %v1203 = vpack.c.b16 %v1189, %v1188
        %v1204 = vpack.c.b16 %v1191, %v1190
        %v1205 = vpack.c.b16 %v1193, %v1192
        %v1206 = vpack.c.b16 %v1195, %v1194
        %v1207 = vpack.c.b16 %v1197, %v1196
        %v1208 = vpack.c.b16 %v1199, %v1198
        %v1209 = vpack.c.b16 %v1201, %v1200
        %1218 = vmatprep.subr.bf16.mxu0 0
        %1219 = vmatpush1.bf16.msra.mxu0 %v1202
        %1220 = vmatprep.subr.bf16.mxu0 0
        %1221 = vmatpush1.bf16.msra.mxu0 %v1203
        %1222 = vmatprep.subr.bf16.mxu0 0
        %1223 = vmatpush1.bf16.msra.mxu0 %v1204
        %1224 = vmatprep.subr.bf16.mxu0 0
        %1225 = vmatpush1.bf16.msra.mxu0 %v1205
        %1226 = vmatprep.subr.bf16.mxu0 0
        %1227 = vmatpush1.bf16.msra.mxu0 %v1206
        %1228 = vmatprep.subr.bf16.mxu0 0
        %1229 = vmatpush1.bf16.msra.mxu0 %v1207
        %1230 = vmatprep.subr.bf16.mxu0 0
        %1231 = vmatpush1.bf16.msra.mxu0 %v1208
        %1232 = vmatprep.subr.bf16.mxu0 0
        %1233 = vmatpush1.bf16.msra.mxu0 %v1209
        %1234 = vmatprep.subr.bf16.mxu0 0
        %1235 = vmatpush1.bf16.msra.mxu0 0
        %1236 = vmatprep.subr.bf16.mxu0 0
        %1237 = vmatpush1.bf16.msra.mxu0 0
        %1238 = vmatprep.subr.bf16.mxu0 0
        %1239 = vmatpush1.bf16.msra.mxu0 0
        %1240 = vmatprep.subr.bf16.mxu0 0
        %1241 = vmatpush1.bf16.msra.mxu0 0
        %1242 = vmatprep.subr.bf16.mxu0 0
        %1243 = vmatpush1.bf16.msra.mxu0 0
        %1244 = vmatprep.subr.bf16.mxu0 0
        %1245 = vmatpush1.bf16.msra.mxu0 0
        %1246 = vmatprep.subr.bf16.mxu0 0
        %1247 = vmatpush1.bf16.msra.mxu0 0
        %1248 = vmatprep.subr.bf16.mxu0 0
        %1249 = vmatpush1.bf16.msra.mxu0 0
        %1250 = vmatprep.mubr.bf16.mxu0 0
        %1251 = vmatmul.mubr.bf16.gmra.mrb[0].mxu0 %v1133
        %v1252 = vpop.f32.mrb[0].mxu0
        %v1253 = vadd.f32 0.0, %v1252
        %v1254 = vpop.f32.mrb[0].mxu0
        %v1255 = vpop.f32.mrb[0].mxu0
        %v1256 = vadd.f32 0.0, %v1255
        %v1257 = vpop.f32.mrb[0].mxu0
        %1258 = vmatprep.mubr.bf16.mxu0 0
        %1259 = vmatmul.mubr.bf16.gmra.mrb[0].mxu0 %v1134
        %v1260 = vpop.f32.mrb[0].mxu0
        %v1261 = vadd.f32 0.0, %v1260
        %v1262 = vpop.f32.mrb[0].mxu0
        %v1263 = vpop.f32.mrb[0].mxu0
        %v1264 = vadd.f32 0.0, %v1263
        %v1265 = vpop.f32.mrb[0].mxu0
        %1266 = vmatprep.mubr.bf16.mxu0 0
        %1267 = vmatmul.mubr.bf16.gmra.mrb[0].mxu0 %v1135
        %v1268 = vpop.f32.mrb[0].mxu0
        %v1269 = vadd.f32 0.0, %v1268
        %v1270 = vpop.f32.mrb[0].mxu0
        %v1271 = vpop.f32.mrb[0].mxu0
        %v1272 = vadd.f32 0.0, %v1271
        %v1273 = vpop.f32.mrb[0].mxu0
        %1274 = vmatprep.mubr.bf16.mxu0 0
        %1275 = vmatmul.mubr.bf16.gmra.mrb[0].mxu0 %v1136
        %v1276 = vpop.f32.mrb[0].mxu0
        %v1277 = vadd.f32 0.0, %v1276
        %v1278 = vpop.f32.mrb[0].mxu0
        %v1279 = vpop.f32.mrb[0].mxu0
        %v1280 = vadd.f32 0.0, %v1279
        %v1281 = vpop.f32.mrb[0].mxu0
        %1282 = vdwg.mxu0
        %v1283 = vld [vmem:[#allocation5] sm:$0xf]
        %v1284 = vld [vmem:[#allocation5 + $0x4] sm:$0xf]
        %v1285 = vld [vmem:[#allocation5 + $0x8] sm:$0xf]
        %v1286 = vld [vmem:[#allocation5 + $0xc] sm:$0xf]
        %v1287 = vld [vmem:[#allocation5 + $0x10] sm:$0xf]
        %v1288 = vld [vmem:[#allocation5 + $0x14] sm:$0xf]
        %v1289 = vld [vmem:[#allocation5 + $0x18] sm:$0xf]
        %v1290 = vld [vmem:[#allocation5 + $0x1c] sm:$0xf]
        %v1291 = vpack.c.bf16 %v1256, %v1253
        %v1292 = vpack.c.bf16 %v1264, %v1261
        %v1293 = vpack.c.bf16 %v1272, %v1269
        %v1294 = vpack.c.bf16 %v1280, %v1277
        %v1303 = vunpack.c.l.b16 %v1283
        %v1304 = vunpack.c.l.b16 %v1284
        %v1305 = vunpack.c.l.b16 %v1285
        %v1306 = vunpack.c.l.b16 %v1286
        %v1307 = vunpack.c.l.b16 %v1287
        %v1308 = vunpack.c.l.b16 %v1288
        %v1309 = vunpack.c.l.b16 %v1289
        %v1310 = vunpack.c.l.b16 %v1290
        %v1311 = vpack.c.b16 %v1304, %v1303
        %v1312 = vpack.c.b16 %v1306, %v1305
        %v1313 = vpack.c.b16 %v1308, %v1307
        %v1314 = vpack.c.b16 %v1310, %v1309
        %vm1315 = vcmask 523264
        %v1317 = vsel %vm1315, %v1311, 0
        %v1320 = vsel %vm1315, %v1312, 0
        %v1323 = vsel %vm1315, %v1313, 0
        %v1326 = vsel %vm1315, %v1314, 0
        %1328 = vmatprep.subr.bf16.mxu0 0
        %1329 = vmatpush1.bf16.msra.mxu0 %v1291
        %1330 = vmatprep.subr.bf16.mxu0 0
        %1331 = vmatpush1.bf16.msra.mxu0 %v1292
        %1332 = vmatprep.subr.bf16.mxu0 0
        %1333 = vmatpush1.bf16.msra.mxu0 %v1293
        %1334 = vmatprep.subr.bf16.mxu0 0
        %1335 = vmatpush1.bf16.msra.mxu0 %v1294
        %1336 = vmatprep.subr.bf16.mxu0 0
        %1337 = vmatpush1.bf16.msra.mxu0 0
        %1338 = vmatprep.subr.bf16.mxu0 0
        %1339 = vmatpush1.bf16.msra.mxu0 0
        %1340 = vmatprep.subr.bf16.mxu0 0
        %1341 = vmatpush1.bf16.msra.mxu0 0
        %1342 = vmatprep.subr.bf16.mxu0 0
        %1343 = vmatpush1.bf16.msra.mxu0 0
        %1344 = vmatprep.subr.bf16.mxu0 0
        %1345 = vmatpush1.bf16.msra.mxu0 0
        %1346 = vmatprep.subr.bf16.mxu0 0
        %1347 = vmatpush1.bf16.msra.mxu0 0
        %1348 = vmatprep.subr.bf16.mxu0 0
        %1349 = vmatpush1.bf16.msra.mxu0 0
        %1350 = vmatprep.subr.bf16.mxu0 0
        %1351 = vmatpush1.bf16.msra.mxu0 0
        %1352 = vmatprep.subr.bf16.mxu0 0
        %1353 = vmatpush1.bf16.msra.mxu0 0
        %1354 = vmatprep.subr.bf16.mxu0 0
        %1355 = vmatpush1.bf16.msra.mxu0 0
        %1356 = vmatprep.subr.bf16.mxu0 0
        %1357 = vmatpush1.bf16.msra.mxu0 0
        %1358 = vmatprep.subr.bf16.mxu0 0
        %1359 = vmatpush1.bf16.msra.mxu0 0
        %1360 = vmatprep.mubr.bf16.mxu0 0
        %1361 = vmatmul.mubr.bf16.gmra.mrb[0].mxu0 %v1317
        %v1362 = vpop.f32.mrb[0].mxu0
        %v1363 = vadd.f32 0.0, %v1362
        %v1364 = vpop.f32.mrb[0].mxu0
        %v1365 = vpop.f32.mrb[0].mxu0
        %v1366 = vadd.f32 0.0, %v1365
        %v1367 = vpop.f32.mrb[0].mxu0
        %1368 = vmatprep.mubr.bf16.mxu0 0
        %1369 = vmatmul.mubr.bf16.gmra.mrb[0].mxu0 %v1320
        %v1370 = vpop.f32.mrb[0].mxu0
        %v1371 = vadd.f32 0.0, %v1370
        %v1372 = vpop.f32.mrb[0].mxu0
        %v1373 = vpop.f32.mrb[0].mxu0
        %v1374 = vadd.f32 0.0, %v1373
        %v1375 = vpop.f32.mrb[0].mxu0
        %1376 = vmatprep.mubr.bf16.mxu0 0
        %1377 = vmatmul.mubr.bf16.gmra.mrb[0].mxu0 %v1323
        %v1378 = vpop.f32.mrb[0].mxu0
        %v1379 = vadd.f32 0.0, %v1378
        %v1380 = vpop.f32.mrb[0].mxu0
        %v1381 = vpop.f32.mrb[0].mxu0
        %v1382 = vadd.f32 0.0, %v1381
        %v1383 = vpop.f32.mrb[0].mxu0
        %1384 = vmatprep.mubr.bf16.mxu0 0
        %1385 = vmatmul.mubr.bf16.gmra.mrb[0].mxu0 %v1326
        %v1386 = vpop.f32.mrb[0].mxu0
        %v1387 = vadd.f32 0.0, %v1386
        %v1388 = vpop.f32.mrb[0].mxu0
        %v1389 = vpop.f32.mrb[0].mxu0
        %v1390 = vadd.f32 0.0, %v1389
        %v1391 = vpop.f32.mrb[0].mxu0
        %1392 = vdwg.mxu0
        %v1409 = vunpack.c.l.b16 %v1137
        %v1410 = vunpack.c.l.b16 %v1138
        %v1411 = vunpack.c.l.b16 %v1139
        %v1412 = vunpack.c.l.b16 %v1140
        %v1413 = vunpack.c.l.b16 %v1141
        %v1414 = vunpack.c.l.b16 %v1142
        %v1415 = vunpack.c.l.b16 %v1143
        %v1416 = vunpack.c.l.b16 %v1144
        %v1417 = vunpack.c.l.b16 %v1145
        %v1418 = vunpack.c.l.b16 %v1146
        %v1419 = vunpack.c.l.b16 %v1147
        %v1420 = vunpack.c.l.b16 %v1148
        %v1421 = vunpack.c.l.b16 %v1149
        %v1422 = vunpack.c.l.b16 %v1150
        %v1423 = vunpack.c.l.b16 %v1151
        %v1424 = vunpack.c.l.b16 %v1152
        %v1425 = vpack.c.b16 %v1410, %v1409
        %v1426 = vpack.c.b16 %v1412, %v1411
        %v1427 = vpack.c.b16 %v1414, %v1413
        %v1428 = vpack.c.b16 %v1416, %v1415
        %v1429 = vpack.c.b16 %v1418, %v1417
        %v1430 = vpack.c.b16 %v1420, %v1419
        %v1431 = vpack.c.b16 %v1422, %v1421
        %v1432 = vpack.c.b16 %v1424, %v1423
        %1441 = vmatprep.subr.bf16.mxu0 0
        %1442 = vmatpush1.bf16.msra.mxu0 %v1425
        %1443 = vmatprep.subr.bf16.mxu0 0
        %1444 = vmatpush1.bf16.msra.mxu0 %v1426
        %1445 = vmatprep.subr.bf16.mxu0 0
        %1446 = vmatpush1.bf16.msra.mxu0 %v1427
        %1447 = vmatprep.subr.bf16.mxu0 0
        %1448 = vmatpush1.bf16.msra.mxu0 %v1428
        %1449 = vmatprep.subr.bf16.mxu0 0
        %1450 = vmatpush1.bf16.msra.mxu0 %v1429
        %1451 = vmatprep.subr.bf16.mxu0 0
        %1452 = vmatpush1.bf16.msra.mxu0 %v1430
        %1453 = vmatprep.subr.bf16.mxu0 0
        %1454 = vmatpush1.bf16.msra.mxu0 %v1431
        %1455 = vmatprep.subr.bf16.mxu0 0
        %1456 = vmatpush1.bf16.msra.mxu0 %v1432
        %1457 = vmatprep.subr.bf16.mxu0 0
        %1458 = vmatpush1.bf16.msra.mxu0 0
        %1459 = vmatprep.subr.bf16.mxu0 0
        %1460 = vmatpush1.bf16.msra.mxu0 0
        %1461 = vmatprep.subr.bf16.mxu0 0
        %1462 = vmatpush1.bf16.msra.mxu0 0
        %1463 = vmatprep.subr.bf16.mxu0 0
        %1464 = vmatpush1.bf16.msra.mxu0 0
        %1465 = vmatprep.subr.bf16.mxu0 0
        %1466 = vmatpush1.bf16.msra.mxu0 0
        %1467 = vmatprep.subr.bf16.mxu0 0
        %1468 = vmatpush1.bf16.msra.mxu0 0
        %1469 = vmatprep.subr.bf16.mxu0 0
        %1470 = vmatpush1.bf16.msra.mxu0 0
        %1471 = vmatprep.subr.bf16.mxu0 0
        %1472 = vmatpush1.bf16.msra.mxu0 0
        %1473 = vmatprep.mubr.bf16.mxu0 0
        %1474 = vmatmul.mubr.bf16.gmra.mrb[0].mxu0 %v1133
        %v1475 = vpop.f32.mrb[0].mxu0
        %v1476 = vadd.f32 %v1363, %v1475
        %v1477 = vpop.f32.mrb[0].mxu0
        %v1478 = vpop.f32.mrb[0].mxu0
        %v1479 = vadd.f32 %v1366, %v1478
        %v1480 = vpop.f32.mrb[0].mxu0
        %1481 = vmatprep.mubr.bf16.mxu0 0
        %1482 = vmatmul.mubr.bf16.gmra.mrb[0].mxu0 %v1134
        %v1483 = vpop.f32.mrb[0].mxu0
        %v1484 = vadd.f32 %v1371, %v1483
        %v1485 = vpop.f32.mrb[0].mxu0
        %v1486 = vpop.f32.mrb[0].mxu0
        %v1487 = vadd.f32 %v1374, %v1486
        %v1488 = vpop.f32.mrb[0].mxu0
        %1489 = vmatprep.mubr.bf16.mxu0 0
        %1490 = vmatmul.mubr.bf16.gmra.mrb[0].mxu0 %v1135
        %v1491 = vpop.f32.mrb[0].mxu0
        %v1492 = vadd.f32 %v1379, %v1491
        %v1493 = vpop.f32.mrb[0].mxu0
        %v1494 = vpop.f32.mrb[0].mxu0
        %v1495 = vadd.f32 %v1382, %v1494
        %v1496 = vpop.f32.mrb[0].mxu0
        %1497 = vmatprep.mubr.bf16.mxu0 0
        %1498 = vmatmul.mubr.bf16.gmra.mrb[0].mxu0 %v1136
        %v1499 = vpop.f32.mrb[0].mxu0
        %v1500 = vadd.f32 %v1387, %v1499
        %v1501 = vpop.f32.mrb[0].mxu0
        %v1502 = vpop.f32.mrb[0].mxu0
        %v1503 = vadd.f32 %v1390, %v1502
        %v1504 = vpop.f32.mrb[0].mxu0
        %1505 = vdwg.mxu0
        %s1506 = scalar_lea.vmem %s306, 128 [#allocation7]
        %v1507 = vld [vmem:[%s1506] sm:$0xf]
        %v1508 = vld [vmem:[%s1506 + $0x4] sm:$0xf]
        %v1509 = vld [vmem:[%s1506 + $0x8] sm:$0xf]
        %v1510 = vld [vmem:[%s1506 + $0xc] sm:$0xf]
        %v1511 = vld [vmem:[%s1506 + $0x10] sm:$0xf]
        %v1512 = vld [vmem:[%s1506 + $0x14] sm:$0xf]
        %v1513 = vld [vmem:[%s1506 + $0x18] sm:$0xf]
        %v1514 = vld [vmem:[%s1506 + $0x1c] sm:$0xf]
        %v1515 = vld [vmem:[%s1506 + $0x20] sm:$0xf]
        %v1516 = vld [vmem:[%s1506 + $0x24] sm:$0xf]
        %v1517 = vld [vmem:[%s1506 + $0x28] sm:$0xf]
        %v1518 = vld [vmem:[%s1506 + $0x2c] sm:$0xf]
        %v1519 = vld [vmem:[%s1506 + $0x30] sm:$0xf]
        %v1520 = vld [vmem:[%s1506 + $0x34] sm:$0xf]
        %v1521 = vld [vmem:[%s1506 + $0x38] sm:$0xf]
        %v1522 = vld [vmem:[%s1506 + $0x3c] sm:$0xf]
        %v1539 = vunpack.c.l.b16 %v1507
        %v1540 = vunpack.c.l.b16 %v1508
        %v1541 = vunpack.c.l.b16 %v1509
        %v1542 = vunpack.c.l.b16 %v1510
        %v1543 = vunpack.c.l.b16 %v1511
        %v1544 = vunpack.c.l.b16 %v1512
        %v1545 = vunpack.c.l.b16 %v1513
        %v1546 = vunpack.c.l.b16 %v1514
        %v1547 = vunpack.c.l.b16 %v1515
        %v1548 = vunpack.c.l.b16 %v1516
        %v1549 = vunpack.c.l.b16 %v1517
        %v1550 = vunpack.c.l.b16 %v1518
        %v1551 = vunpack.c.l.b16 %v1519
        %v1552 = vunpack.c.l.b16 %v1520
        %v1553 = vunpack.c.l.b16 %v1521
        %v1554 = vunpack.c.l.b16 %v1522
        %v1555 = vpack.c.b16 %v1540, %v1539
        %v1556 = vpack.c.b16 %v1542, %v1541
        %v1557 = vpack.c.b16 %v1544, %v1543
        %v1558 = vpack.c.b16 %v1546, %v1545
        %v1559 = vpack.c.b16 %v1548, %v1547
        %v1560 = vpack.c.b16 %v1550, %v1549
        %v1561 = vpack.c.b16 %v1552, %v1551
        %v1562 = vpack.c.b16 %v1554, %v1553
        %1571 = vmatprep.subr.bf16.mxu0 0
        %1572 = vmatpush1.bf16.msra.mxu0 %v1555
        %1573 = vmatprep.subr.bf16.mxu0 0
        %1574 = vmatpush1.bf16.msra.mxu0 %v1556
        %1575 = vmatprep.subr.bf16.mxu0 0
        %1576 = vmatpush1.bf16.msra.mxu0 %v1557
        %1577 = vmatprep.subr.bf16.mxu0 0
        %1578 = vmatpush1.bf16.msra.mxu0 %v1558
        %1579 = vmatprep.subr.bf16.mxu0 0
        %1580 = vmatpush1.bf16.msra.mxu0 %v1559
        %1581 = vmatprep.subr.bf16.mxu0 0
        %1582 = vmatpush1.bf16.msra.mxu0 %v1560
        %1583 = vmatprep.subr.bf16.mxu0 0
        %1584 = vmatpush1.bf16.msra.mxu0 %v1561
        %1585 = vmatprep.subr.bf16.mxu0 0
        %1586 = vmatpush1.bf16.msra.mxu0 %v1562
        %1587 = vmatprep.subr.bf16.mxu0 0
        %1588 = vmatpush1.bf16.msra.mxu0 0
        %1589 = vmatprep.subr.bf16.mxu0 0
        %1590 = vmatpush1.bf16.msra.mxu0 0
        %1591 = vmatprep.subr.bf16.mxu0 0
        %1592 = vmatpush1.bf16.msra.mxu0 0
        %1593 = vmatprep.subr.bf16.mxu0 0
        %1594 = vmatpush1.bf16.msra.mxu0 0
        %1595 = vmatprep.subr.bf16.mxu0 0
        %1596 = vmatpush1.bf16.msra.mxu0 0
        %1597 = vmatprep.subr.bf16.mxu0 0
        %1598 = vmatpush1.bf16.msra.mxu0 0
        %1599 = vmatprep.subr.bf16.mxu0 0
        %1600 = vmatpush1.bf16.msra.mxu0 0
        %1601 = vmatprep.subr.bf16.mxu0 0
        %1602 = vmatpush1.bf16.msra.mxu0 0
        %1603 = vmatprep.mubr.bf16.mxu0 0
        %1604 = vmatmul.mubr.bf16.gmra.mrb[0].mxu0 %v1133
        %v1605 = vpop.f32.mrb[0].mxu0
        %v1606 = vadd.f32 0.0, %v1605
        %v1607 = vpop.f32.mrb[0].mxu0
        %v1608 = vpop.f32.mrb[0].mxu0
        %v1609 = vadd.f32 0.0, %v1608
        %v1610 = vpop.f32.mrb[0].mxu0
        %1611 = vmatprep.mubr.bf16.mxu0 0
        %1612 = vmatmul.mubr.bf16.gmra.mrb[0].mxu0 %v1134
        %v1613 = vpop.f32.mrb[0].mxu0
        %v1614 = vadd.f32 0.0, %v1613
        %v1615 = vpop.f32.mrb[0].mxu0
        %v1616 = vpop.f32.mrb[0].mxu0
        %v1617 = vadd.f32 0.0, %v1616
        %v1618 = vpop.f32.mrb[0].mxu0
        %1619 = vmatprep.mubr.bf16.mxu0 0
        %1620 = vmatmul.mubr.bf16.gmra.mrb[0].mxu0 %v1135
        %v1621 = vpop.f32.mrb[0].mxu0
        %v1622 = vadd.f32 0.0, %v1621
        %v1623 = vpop.f32.mrb[0].mxu0
        %v1624 = vpop.f32.mrb[0].mxu0
        %v1625 = vadd.f32 0.0, %v1624
        %v1626 = vpop.f32.mrb[0].mxu0
        %1627 = vmatprep.mubr.bf16.mxu0 0
        %1628 = vmatmul.mubr.bf16.gmra.mrb[0].mxu0 %v1136
        %v1629 = vpop.f32.mrb[0].mxu0
        %v1630 = vadd.f32 0.0, %v1629
        %v1631 = vpop.f32.mrb[0].mxu0
        %v1632 = vpop.f32.mrb[0].mxu0
        %v1633 = vadd.f32 0.0, %v1632
        %v1634 = vpop.f32.mrb[0].mxu0
        %1635 = vdwg.mxu0
        %s1636 = scalar_lea.vmem [#allocation5], 32
        %v1637 = vld [vmem:[%s1636] sm:$0xf]
        %v1638 = vld [vmem:[%s1636 + $0x4] sm:$0xf]
        %v1639 = vld [vmem:[%s1636 + $0x8] sm:$0xf]
        %v1640 = vld [vmem:[%s1636 + $0xc] sm:$0xf]
        %v1641 = vld [vmem:[%s1636 + $0x10] sm:$0xf]
        %v1642 = vld [vmem:[%s1636 + $0x14] sm:$0xf]
        %v1643 = vld [vmem:[%s1636 + $0x18] sm:$0xf]
        %v1644 = vld [vmem:[%s1636 + $0x1c] sm:$0xf]
        %v1645 = vpack.c.bf16 %v1609, %v1606
        %v1646 = vpack.c.bf16 %v1617, %v1614
        %v1647 = vpack.c.bf16 %v1625, %v1622
        %v1648 = vpack.c.bf16 %v1633, %v1630
        %v1657 = vunpack.c.l.b16 %v1637
        %v1658 = vunpack.c.l.b16 %v1638
        %v1659 = vunpack.c.l.b16 %v1639
        %v1660 = vunpack.c.l.b16 %v1640
        %v1661 = vunpack.c.l.b16 %v1641
        %v1662 = vunpack.c.l.b16 %v1642
        %v1663 = vunpack.c.l.b16 %v1643
        %v1664 = vunpack.c.l.b16 %v1644
        %v1665 = vpack.c.b16 %v1658, %v1657
        %v1666 = vpack.c.b16 %v1660, %v1659
        %v1667 = vpack.c.b16 %v1662, %v1661
        %v1668 = vpack.c.b16 %v1664, %v1663
        %v1670 = vsel %vm1315, %v1665, 0
        %v1673 = vsel %vm1315, %v1666, 0
        %v1676 = vsel %vm1315, %v1667, 0
        %v1679 = vsel %vm1315, %v1668, 0
        %1681 = vmatprep.subr.bf16.mxu0 0
        %1682 = vmatpush1.bf16.msra.mxu0 %v1645
        %1683 = vmatprep.subr.bf16.mxu0 0
        %1684 = vmatpush1.bf16.msra.mxu0 %v1646
        %1685 = vmatprep.subr.bf16.mxu0 0
        %1686 = vmatpush1.bf16.msra.mxu0 %v1647
        %1687 = vmatprep.subr.bf16.mxu0 0
        %1688 = vmatpush1.bf16.msra.mxu0 %v1648
        %1689 = vmatprep.subr.bf16.mxu0 0
        %1690 = vmatpush1.bf16.msra.mxu0 0
        %1691 = vmatprep.subr.bf16.mxu0 0
        %1692 = vmatpush1.bf16.msra.mxu0 0
        %1693 = vmatprep.subr.bf16.mxu0 0
        %1694 = vmatpush1.bf16.msra.mxu0 0
        %1695 = vmatprep.subr.bf16.mxu0 0
        %1696 = vmatpush1.bf16.msra.mxu0 0
        %1697 = vmatprep.subr.bf16.mxu0 0
        %1698 = vmatpush1.bf16.msra.mxu0 0
        %1699 = vmatprep.subr.bf16.mxu0 0
        %1700 = vmatpush1.bf16.msra.mxu0 0
        %1701 = vmatprep.subr.bf16.mxu0 0
        %1702 = vmatpush1.bf16.msra.mxu0 0
        %1703 = vmatprep.subr.bf16.mxu0 0
        %1704 = vmatpush1.bf16.msra.mxu0 0
        %1705 = vmatprep.subr.bf16.mxu0 0
        %1706 = vmatpush1.bf16.msra.mxu0 0
        %1707 = vmatprep.subr.bf16.mxu0 0
        %1708 = vmatpush1.bf16.msra.mxu0 0
        %1709 = vmatprep.subr.bf16.mxu0 0
        %1710 = vmatpush1.bf16.msra.mxu0 0
        %1711 = vmatprep.subr.bf16.mxu0 0
        %1712 = vmatpush1.bf16.msra.mxu0 0
        %1713 = vmatprep.mubr.bf16.mxu0 0
        %1714 = vmatmul.mubr.bf16.gmra.mrb[0].mxu0 %v1670
        %v1715 = vpop.f32.mrb[0].mxu0
        %v1716 = vadd.f32 0.0, %v1715
        %v1717 = vpop.f32.mrb[0].mxu0
        %v1718 = vpop.f32.mrb[0].mxu0
        %v1719 = vadd.f32 0.0, %v1718
        %v1720 = vpop.f32.mrb[0].mxu0
        %1721 = vmatprep.mubr.bf16.mxu0 0
        %1722 = vmatmul.mubr.bf16.gmra.mrb[0].mxu0 %v1673
        %v1723 = vpop.f32.mrb[0].mxu0
        %v1724 = vadd.f32 0.0, %v1723
        %v1725 = vpop.f32.mrb[0].mxu0
        %v1726 = vpop.f32.mrb[0].mxu0
        %v1727 = vadd.f32 0.0, %v1726
        %v1728 = vpop.f32.mrb[0].mxu0
        %1729 = vmatprep.mubr.bf16.mxu0 0
        %1730 = vmatmul.mubr.bf16.gmra.mrb[0].mxu0 %v1676
        %v1731 = vpop.f32.mrb[0].mxu0
        %v1732 = vadd.f32 0.0, %v1731
        %v1733 = vpop.f32.mrb[0].mxu0
        %v1734 = vpop.f32.mrb[0].mxu0
        %v1735 = vadd.f32 0.0, %v1734
        %v1736 = vpop.f32.mrb[0].mxu0
        %1737 = vmatprep.mubr.bf16.mxu0 0
        %1738 = vmatmul.mubr.bf16.gmra.mrb[0].mxu0 %v1679
        %v1739 = vpop.f32.mrb[0].mxu0
        %v1740 = vadd.f32 0.0, %v1739
        %v1741 = vpop.f32.mrb[0].mxu0
        %v1742 = vpop.f32.mrb[0].mxu0
        %v1743 = vadd.f32 0.0, %v1742
        %v1744 = vpop.f32.mrb[0].mxu0
        %1745 = vdwg.mxu0
        %v1746 = vadd.f32 %v1476, %v1716
        %v1747 = vadd.f32 %v1479, %v1719
        %v1748 = vadd.f32 %v1484, %v1724
        %v1749 = vadd.f32 %v1487, %v1727
        %v1750 = vadd.f32 %v1492, %v1732
        %v1751 = vadd.f32 %v1495, %v1735
        %v1752 = vadd.f32 %v1500, %v1740
        %v1753 = vadd.f32 %v1503, %v1743
        %s1754 = scalar_lea.vmem %s306, 192 [#allocation7]
        %v1755 = vld [vmem:[%s1754] sm:$0xf]
        %v1756 = vld [vmem:[%s1754 + $0x4] sm:$0xf]
        %v1757 = vld [vmem:[%s1754 + $0x8] sm:$0xf]
        %v1758 = vld [vmem:[%s1754 + $0xc] sm:$0xf]
        %v1759 = vld [vmem:[%s1754 + $0x10] sm:$0xf]
        %v1760 = vld [vmem:[%s1754 + $0x14] sm:$0xf]
        %v1761 = vld [vmem:[%s1754 + $0x18] sm:$0xf]
        %v1762 = vld [vmem:[%s1754 + $0x1c] sm:$0xf]
        %v1763 = vld [vmem:[%s1754 + $0x20] sm:$0xf]
        %v1764 = vld [vmem:[%s1754 + $0x24] sm:$0xf]
        %v1765 = vld [vmem:[%s1754 + $0x28] sm:$0xf]
        %v1766 = vld [vmem:[%s1754 + $0x2c] sm:$0xf]
        %v1767 = vld [vmem:[%s1754 + $0x30] sm:$0xf]
        %v1768 = vld [vmem:[%s1754 + $0x34] sm:$0xf]
        %v1769 = vld [vmem:[%s1754 + $0x38] sm:$0xf]
        %v1770 = vld [vmem:[%s1754 + $0x3c] sm:$0xf]
        %v1787 = vunpack.c.l.b16 %v1755
        %v1788 = vunpack.c.l.b16 %v1756
        %v1789 = vunpack.c.l.b16 %v1757
        %v1790 = vunpack.c.l.b16 %v1758
        %v1791 = vunpack.c.l.b16 %v1759
        %v1792 = vunpack.c.l.b16 %v1760
        %v1793 = vunpack.c.l.b16 %v1761
        %v1794 = vunpack.c.l.b16 %v1762
        %v1795 = vunpack.c.l.b16 %v1763
        %v1796 = vunpack.c.l.b16 %v1764
        %v1797 = vunpack.c.l.b16 %v1765
        %v1798 = vunpack.c.l.b16 %v1766
        %v1799 = vunpack.c.l.b16 %v1767
        %v1800 = vunpack.c.l.b16 %v1768
        %v1801 = vunpack.c.l.b16 %v1769
        %v1802 = vunpack.c.l.b16 %v1770
        %v1803 = vpack.c.b16 %v1788, %v1787
        %v1804 = vpack.c.b16 %v1790, %v1789
        %v1805 = vpack.c.b16 %v1792, %v1791
        %v1806 = vpack.c.b16 %v1794, %v1793
        %v1807 = vpack.c.b16 %v1796, %v1795
        %v1808 = vpack.c.b16 %v1798, %v1797
        %v1809 = vpack.c.b16 %v1800, %v1799
        %v1810 = vpack.c.b16 %v1802, %v1801
        %1819 = vmatprep.subr.bf16.mxu0 0
        %1820 = vmatpush1.bf16.msra.mxu0 %v1803
        %1821 = vmatprep.subr.bf16.mxu0 0
        %1822 = vmatpush1.bf16.msra.mxu0 %v1804
        %1823 = vmatprep.subr.bf16.mxu0 0
        %1824 = vmatpush1.bf16.msra.mxu0 %v1805
        %1825 = vmatprep.subr.bf16.mxu0 0
        %1826 = vmatpush1.bf16.msra.mxu0 %v1806
        %1827 = vmatprep.subr.bf16.mxu0 0
        %1828 = vmatpush1.bf16.msra.mxu0 %v1807
        %1829 = vmatprep.subr.bf16.mxu0 0
        %1830 = vmatpush1.bf16.msra.mxu0 %v1808
        %1831 = vmatprep.subr.bf16.mxu0 0
        %1832 = vmatpush1.bf16.msra.mxu0 %v1809
        %1833 = vmatprep.subr.bf16.mxu0 0
        %1834 = vmatpush1.bf16.msra.mxu0 %v1810
        %1835 = vmatprep.subr.bf16.mxu0 0
        %1836 = vmatpush1.bf16.msra.mxu0 0
        %1837 = vmatprep.subr.bf16.mxu0 0
        %1838 = vmatpush1.bf16.msra.mxu0 0
        %1839 = vmatprep.subr.bf16.mxu0 0
        %1840 = vmatpush1.bf16.msra.mxu0 0
        %1841 = vmatprep.subr.bf16.mxu0 0
        %1842 = vmatpush1.bf16.msra.mxu0 0
        %1843 = vmatprep.subr.bf16.mxu0 0
        %1844 = vmatpush1.bf16.msra.mxu0 0
        %1845 = vmatprep.subr.bf16.mxu0 0
        %1846 = vmatpush1.bf16.msra.mxu0 0
        %1847 = vmatprep.subr.bf16.mxu0 0
        %1848 = vmatpush1.bf16.msra.mxu0 0
        %1849 = vmatprep.subr.bf16.mxu0 0
        %1850 = vmatpush1.bf16.msra.mxu0 0
        %1851 = vmatprep.mubr.bf16.mxu0 0
        %1852 = vmatmul.mubr.bf16.gmra.mrb[0].mxu0 %v1133
        %v1853 = vpop.f32.mrb[0].mxu0
        %v1854 = vadd.f32 0.0, %v1853
        %v1855 = vpop.f32.mrb[0].mxu0
        %v1856 = vpop.f32.mrb[0].mxu0
        %v1857 = vadd.f32 0.0, %v1856
        %v1858 = vpop.f32.mrb[0].mxu0
        %1859 = vmatprep.mubr.bf16.mxu0 0
        %1860 = vmatmul.mubr.bf16.gmra.mrb[0].mxu0 %v1134
        %v1861 = vpop.f32.mrb[0].mxu0
        %v1862 = vadd.f32 0.0, %v1861
        %v1863 = vpop.f32.mrb[0].mxu0
        %v1864 = vpop.f32.mrb[0].mxu0
        %v1865 = vadd.f32 0.0, %v1864
        %v1866 = vpop.f32.mrb[0].mxu0
        %1867 = vmatprep.mubr.bf16.mxu0 0
        %1868 = vmatmul.mubr.bf16.gmra.mrb[0].mxu0 %v1135
        %v1869 = vpop.f32.mrb[0].mxu0
        %v1870 = vadd.f32 0.0, %v1869
        %v1871 = vpop.f32.mrb[0].mxu0
        %v1872 = vpop.f32.mrb[0].mxu0
        %v1873 = vadd.f32 0.0, %v1872
        %v1874 = vpop.f32.mrb[0].mxu0
        %1875 = vmatprep.mubr.bf16.mxu0 0
        %1876 = vmatmul.mubr.bf16.gmra.mrb[0].mxu0 %v1136
        %v1877 = vpop.f32.mrb[0].mxu0
        %v1878 = vadd.f32 0.0, %v1877
        %v1879 = vpop.f32.mrb[0].mxu0
        %v1880 = vpop.f32.mrb[0].mxu0
        %v1881 = vadd.f32 0.0, %v1880
        %v1882 = vpop.f32.mrb[0].mxu0
        %1883 = vdwg.mxu0
        %s1884 = scalar_lea.vmem [#allocation5], 64
        %v1885 = vld [vmem:[%s1884] sm:$0xf]
        %v1886 = vld [vmem:[%s1884 + $0x4] sm:$0xf]
        %v1887 = vld [vmem:[%s1884 + $0x8] sm:$0xf]
        %v1888 = vld [vmem:[%s1884 + $0xc] sm:$0xf]
        %v1889 = vld [vmem:[%s1884 + $0x10] sm:$0xf]
        %v1890 = vld [vmem:[%s1884 + $0x14] sm:$0xf]
        %v1891 = vld [vmem:[%s1884 + $0x18] sm:$0xf]
        %v1892 = vld [vmem:[%s1884 + $0x1c] sm:$0xf]
        %v1893 = vpack.c.bf16 %v1857, %v1854
        %v1894 = vpack.c.bf16 %v1865, %v1862
        %v1895 = vpack.c.bf16 %v1873, %v1870
        %v1896 = vpack.c.bf16 %v1881, %v1878
        %v1905 = vunpack.c.l.b16 %v1885
        %v1906 = vunpack.c.l.b16 %v1886
        %v1907 = vunpack.c.l.b16 %v1887
        %v1908 = vunpack.c.l.b16 %v1888
        %v1909 = vunpack.c.l.b16 %v1889
        %v1910 = vunpack.c.l.b16 %v1890
        %v1911 = vunpack.c.l.b16 %v1891
        %v1912 = vunpack.c.l.b16 %v1892
        %v1913 = vpack.c.b16 %v1906, %v1905
        %v1914 = vpack.c.b16 %v1908, %v1907
        %v1915 = vpack.c.b16 %v1910, %v1909
        %v1916 = vpack.c.b16 %v1912, %v1911
        %v1918 = vsel %vm1315, %v1913, 0
        %v1921 = vsel %vm1315, %v1914, 0
        %v1924 = vsel %vm1315, %v1915, 0
        %v1927 = vsel %vm1315, %v1916, 0
        %1929 = vmatprep.subr.bf16.mxu0 0
        %1930 = vmatpush1.bf16.msra.mxu0 %v1893
        %1931 = vmatprep.subr.bf16.mxu0 0
        %1932 = vmatpush1.bf16.msra.mxu0 %v1894
        %1933 = vmatprep.subr.bf16.mxu0 0
        %1934 = vmatpush1.bf16.msra.mxu0 %v1895
        %1935 = vmatprep.subr.bf16.mxu0 0
        %1936 = vmatpush1.bf16.msra.mxu0 %v1896
        %1937 = vmatprep.subr.bf16.mxu0 0
        %1938 = vmatpush1.bf16.msra.mxu0 0
        %1939 = vmatprep.subr.bf16.mxu0 0
        %1940 = vmatpush1.bf16.msra.mxu0 0
        %1941 = vmatprep.subr.bf16.mxu0 0
        %1942 = vmatpush1.bf16.msra.mxu0 0
        %1943 = vmatprep.subr.bf16.mxu0 0
        %1944 = vmatpush1.bf16.msra.mxu0 0
        %1945 = vmatprep.subr.bf16.mxu0 0
        %1946 = vmatpush1.bf16.msra.mxu0 0
        %1947 = vmatprep.subr.bf16.mxu0 0
        %1948 = vmatpush1.bf16.msra.mxu0 0
        %1949 = vmatprep.subr.bf16.mxu0 0
        %1950 = vmatpush1.bf16.msra.mxu0 0
        %1951 = vmatprep.subr.bf16.mxu0 0
        %1952 = vmatpush1.bf16.msra.mxu0 0
        %1953 = vmatprep.subr.bf16.mxu0 0
        %1954 = vmatpush1.bf16.msra.mxu0 0
        %1955 = vmatprep.subr.bf16.mxu0 0
        %1956 = vmatpush1.bf16.msra.mxu0 0
        %1957 = vmatprep.subr.bf16.mxu0 0
        %1958 = vmatpush1.bf16.msra.mxu0 0
        %1959 = vmatprep.subr.bf16.mxu0 0
        %1960 = vmatpush1.bf16.msra.mxu0 0
        %1961 = vmatprep.mubr.bf16.mxu0 0
        %1962 = vmatmul.mubr.bf16.gmra.mrb[0].mxu0 %v1918
        %v1963 = vpop.f32.mrb[0].mxu0
        %v1964 = vadd.f32 0.0, %v1963
        %v1965 = vpop.f32.mrb[0].mxu0
        %v1966 = vpop.f32.mrb[0].mxu0
        %v1967 = vadd.f32 0.0, %v1966
        %v1968 = vpop.f32.mrb[0].mxu0
        %1969 = vmatprep.mubr.bf16.mxu0 0
        %1970 = vmatmul.mubr.bf16.gmra.mrb[0].mxu0 %v1921
        %v1971 = vpop.f32.mrb[0].mxu0
        %v1972 = vadd.f32 0.0, %v1971
        %v1973 = vpop.f32.mrb[0].mxu0
        %v1974 = vpop.f32.mrb[0].mxu0
        %v1975 = vadd.f32 0.0, %v1974
        %v1976 = vpop.f32.mrb[0].mxu0
        %1977 = vmatprep.mubr.bf16.mxu0 0
        %1978 = vmatmul.mubr.bf16.gmra.mrb[0].mxu0 %v1924
        %v1979 = vpop.f32.mrb[0].mxu0
        %v1980 = vadd.f32 0.0, %v1979
        %v1981 = vpop.f32.mrb[0].mxu0
        %v1982 = vpop.f32.mrb[0].mxu0
        %v1983 = vadd.f32 0.0, %v1982
        %v1984 = vpop.f32.mrb[0].mxu0
        %1985 = vmatprep.mubr.bf16.mxu0 0
        %1986 = vmatmul.mubr.bf16.gmra.mrb[0].mxu0 %v1927
        %v1987 = vpop.f32.mrb[0].mxu0
        %v1988 = vadd.f32 0.0, %v1987
        %v1989 = vpop.f32.mrb[0].mxu0
        %v1990 = vpop.f32.mrb[0].mxu0
        %v1991 = vadd.f32 0.0, %v1990
        %v1992 = vpop.f32.mrb[0].mxu0
        %1993 = vdwg.mxu0
        %v1994 = vadd.f32 %v1746, %v1964
        %v1995 = vadd.f32 %v1747, %v1967
        %v1996 = vadd.f32 %v1748, %v1972
        %v1997 = vadd.f32 %v1749, %v1975
        %v1998 = vadd.f32 %v1750, %v1980
        %v1999 = vadd.f32 %v1751, %v1983
        %v2000 = vadd.f32 %v1752, %v1988
        %v2001 = vadd.f32 %v1753, %v1991
        %s2002 = scalar_lea.vmem %s306, 256 [#allocation7]
        %v2003 = vld [vmem:[%s2002] sm:$0xf]
        %v2004 = vld [vmem:[%s2002 + $0x4] sm:$0xf]
        %v2005 = vld [vmem:[%s2002 + $0x8] sm:$0xf]
        %v2006 = vld [vmem:[%s2002 + $0xc] sm:$0xf]
        %v2007 = vld [vmem:[%s2002 + $0x10] sm:$0xf]
        %v2008 = vld [vmem:[%s2002 + $0x14] sm:$0xf]
        %v2009 = vld [vmem:[%s2002 + $0x18] sm:$0xf]
        %v2010 = vld [vmem:[%s2002 + $0x1c] sm:$0xf]
        %v2011 = vld [vmem:[%s2002 + $0x20] sm:$0xf]
        %v2012 = vld [vmem:[%s2002 + $0x24] sm:$0xf]
        %v2013 = vld [vmem:[%s2002 + $0x28] sm:$0xf]
        %v2014 = vld [vmem:[%s2002 + $0x2c] sm:$0xf]
        %v2015 = vld [vmem:[%s2002 + $0x30] sm:$0xf]
        %v2016 = vld [vmem:[%s2002 + $0x34] sm:$0xf]
        %v2017 = vld [vmem:[%s2002 + $0x38] sm:$0xf]
        %v2018 = vld [vmem:[%s2002 + $0x3c] sm:$0xf]
        %v2035 = vunpack.c.l.b16 %v2003
        %v2036 = vunpack.c.l.b16 %v2004
        %v2037 = vunpack.c.l.b16 %v2005
        %v2038 = vunpack.c.l.b16 %v2006
        %v2039 = vunpack.c.l.b16 %v2007
        %v2040 = vunpack.c.l.b16 %v2008
        %v2041 = vunpack.c.l.b16 %v2009
        %v2042 = vunpack.c.l.b16 %v2010
        %v2043 = vunpack.c.l.b16 %v2011
        %v2044 = vunpack.c.l.b16 %v2012
        %v2045 = vunpack.c.l.b16 %v2013
        %v2046 = vunpack.c.l.b16 %v2014
        %v2047 = vunpack.c.l.b16 %v2015
        %v2048 = vunpack.c.l.b16 %v2016
        %v2049 = vunpack.c.l.b16 %v2017
        %v2050 = vunpack.c.l.b16 %v2018
        %v2051 = vpack.c.b16 %v2036, %v2035
        %v2052 = vpack.c.b16 %v2038, %v2037
        %v2053 = vpack.c.b16 %v2040, %v2039
        %v2054 = vpack.c.b16 %v2042, %v2041
        %v2055 = vpack.c.b16 %v2044, %v2043
        %v2056 = vpack.c.b16 %v2046, %v2045
        %v2057 = vpack.c.b16 %v2048, %v2047
        %v2058 = vpack.c.b16 %v2050, %v2049
        %2067 = vmatprep.subr.bf16.mxu0 0
        %2068 = vmatpush1.bf16.msra.mxu0 %v2051
        %2069 = vmatprep.subr.bf16.mxu0 0
        %2070 = vmatpush1.bf16.msra.mxu0 %v2052
        %2071 = vmatprep.subr.bf16.mxu0 0
        %2072 = vmatpush1.bf16.msra.mxu0 %v2053
        %2073 = vmatprep.subr.bf16.mxu0 0
        %2074 = vmatpush1.bf16.msra.mxu0 %v2054
        %2075 = vmatprep.subr.bf16.mxu0 0
        %2076 = vmatpush1.bf16.msra.mxu0 %v2055
        %2077 = vmatprep.subr.bf16.mxu0 0
        %2078 = vmatpush1.bf16.msra.mxu0 %v2056
        %2079 = vmatprep.subr.bf16.mxu0 0
        %2080 = vmatpush1.bf16.msra.mxu0 %v2057
        %2081 = vmatprep.subr.bf16.mxu0 0
        %2082 = vmatpush1.bf16.msra.mxu0 %v2058
        %2083 = vmatprep.subr.bf16.mxu0 0
        %2084 = vmatpush1.bf16.msra.mxu0 0
        %2085 = vmatprep.subr.bf16.mxu0 0
        %2086 = vmatpush1.bf16.msra.mxu0 0
        %2087 = vmatprep.subr.bf16.mxu0 0
        %2088 = vmatpush1.bf16.msra.mxu0 0
        %2089 = vmatprep.subr.bf16.mxu0 0
        %2090 = vmatpush1.bf16.msra.mxu0 0
        %2091 = vmatprep.subr.bf16.mxu0 0
        %2092 = vmatpush1.bf16.msra.mxu0 0
        %2093 = vmatprep.subr.bf16.mxu0 0
        %2094 = vmatpush1.bf16.msra.mxu0 0
        %2095 = vmatprep.subr.bf16.mxu0 0
        %2096 = vmatpush1.bf16.msra.mxu0 0
        %2097 = vmatprep.subr.bf16.mxu0 0
        %2098 = vmatpush1.bf16.msra.mxu0 0
        %2099 = vmatprep.mubr.bf16.mxu0 0
        %2100 = vmatmul.mubr.bf16.gmra.mrb[0].mxu0 %v1133
        %v2101 = vpop.f32.mrb[0].mxu0
        %v2102 = vadd.f32 0.0, %v2101
        %v2103 = vpop.f32.mrb[0].mxu0
        %v2104 = vpop.f32.mrb[0].mxu0
        %v2105 = vadd.f32 0.0, %v2104
        %v2106 = vpop.f32.mrb[0].mxu0
        %2107 = vmatprep.mubr.bf16.mxu0 0
        %2108 = vmatmul.mubr.bf16.gmra.mrb[0].mxu0 %v1134
        %v2109 = vpop.f32.mrb[0].mxu0
        %v2110 = vadd.f32 0.0, %v2109
        %v2111 = vpop.f32.mrb[0].mxu0
        %v2112 = vpop.f32.mrb[0].mxu0
        %v2113 = vadd.f32 0.0, %v2112
        %v2114 = vpop.f32.mrb[0].mxu0
        %2115 = vmatprep.mubr.bf16.mxu0 0
        %2116 = vmatmul.mubr.bf16.gmra.mrb[0].mxu0 %v1135
        %v2117 = vpop.f32.mrb[0].mxu0
        %v2118 = vadd.f32 0.0, %v2117
        %v2119 = vpop.f32.mrb[0].mxu0
        %v2120 = vpop.f32.mrb[0].mxu0
        %v2121 = vadd.f32 0.0, %v2120
        %v2122 = vpop.f32.mrb[0].mxu0
        %2123 = vmatprep.mubr.bf16.mxu0 0
        %2124 = vmatmul.mubr.bf16.gmra.mrb[0].mxu0 %v1136
        %v2125 = vpop.f32.mrb[0].mxu0
        %v2126 = vadd.f32 0.0, %v2125
        %v2127 = vpop.f32.mrb[0].mxu0
        %v2128 = vpop.f32.mrb[0].mxu0
        %v2129 = vadd.f32 0.0, %v2128
        %v2130 = vpop.f32.mrb[0].mxu0
        %2131 = vdwg.mxu0
        %s2132 = scalar_lea.vmem [#allocation5], 96
        %v2133 = vld [vmem:[%s2132] sm:$0xf]
        %v2134 = vld [vmem:[%s2132 + $0x4] sm:$0xf]
        %v2135 = vld [vmem:[%s2132 + $0x8] sm:$0xf]
        %v2136 = vld [vmem:[%s2132 + $0xc] sm:$0xf]
        %v2137 = vld [vmem:[%s2132 + $0x10] sm:$0xf]
        %v2138 = vld [vmem:[%s2132 + $0x14] sm:$0xf]
        %v2139 = vld [vmem:[%s2132 + $0x18] sm:$0xf]
        %v2140 = vld [vmem:[%s2132 + $0x1c] sm:$0xf]
        %v2141 = vpack.c.bf16 %v2105, %v2102
        %v2142 = vpack.c.bf16 %v2113, %v2110
        %v2143 = vpack.c.bf16 %v2121, %v2118
        %v2144 = vpack.c.bf16 %v2129, %v2126
        %v2153 = vunpack.c.l.b16 %v2133
        %v2154 = vunpack.c.l.b16 %v2134
        %v2155 = vunpack.c.l.b16 %v2135
        %v2156 = vunpack.c.l.b16 %v2136
        %v2157 = vunpack.c.l.b16 %v2137
        %v2158 = vunpack.c.l.b16 %v2138
        %v2159 = vunpack.c.l.b16 %v2139
        %v2160 = vunpack.c.l.b16 %v2140
        %v2161 = vpack.c.b16 %v2154, %v2153
        %v2162 = vpack.c.b16 %v2156, %v2155
        %v2163 = vpack.c.b16 %v2158, %v2157
        %v2164 = vpack.c.b16 %v2160, %v2159
        %v2166 = vsel %vm1315, %v2161, 0
        %v2169 = vsel %vm1315, %v2162, 0
        %v2172 = vsel %vm1315, %v2163, 0
        %v2175 = vsel %vm1315, %v2164, 0
        %2177 = vmatprep.subr.bf16.mxu0 0
        %2178 = vmatpush1.bf16.msra.mxu0 %v2141
        %2179 = vmatprep.subr.bf16.mxu0 0
        %2180 = vmatpush1.bf16.msra.mxu0 %v2142
        %2181 = vmatprep.subr.bf16.mxu0 0
        %2182 = vmatpush1.bf16.msra.mxu0 %v2143
        %2183 = vmatprep.subr.bf16.mxu0 0
        %2184 = vmatpush1.bf16.msra.mxu0 %v2144
        %2185 = vmatprep.subr.bf16.mxu0 0
        %2186 = vmatpush1.bf16.msra.mxu0 0
        %2187 = vmatprep.subr.bf16.mxu0 0
        %2188 = vmatpush1.bf16.msra.mxu0 0
        %2189 = vmatprep.subr.bf16.mxu0 0
        %2190 = vmatpush1.bf16.msra.mxu0 0
        %2191 = vmatprep.subr.bf16.mxu0 0
        %2192 = vmatpush1.bf16.msra.mxu0 0
        %2193 = vmatprep.subr.bf16.mxu0 0
        %2194 = vmatpush1.bf16.msra.mxu0 0
        %2195 = vmatprep.subr.bf16.mxu0 0
        %2196 = vmatpush1.bf16.msra.mxu0 0
        %2197 = vmatprep.subr.bf16.mxu0 0
        %2198 = vmatpush1.bf16.msra.mxu0 0
        %2199 = vmatprep.subr.bf16.mxu0 0
        %2200 = vmatpush1.bf16.msra.mxu0 0
        %2201 = vmatprep.subr.bf16.mxu0 0
        %2202 = vmatpush1.bf16.msra.mxu0 0
        %2203 = vmatprep.subr.bf16.mxu0 0
        %2204 = vmatpush1.bf16.msra.mxu0 0
        %2205 = vmatprep.subr.bf16.mxu0 0
        %2206 = vmatpush1.bf16.msra.mxu0 0
        %2207 = vmatprep.subr.bf16.mxu0 0
        %2208 = vmatpush1.bf16.msra.mxu0 0
        %2209 = vmatprep.mubr.bf16.mxu0 0
        %2210 = vmatmul.mubr.bf16.gmra.mrb[0].mxu0 %v2166
        %v2211 = vpop.f32.mrb[0].mxu0
        %v2212 = vadd.f32 0.0, %v2211
        %v2213 = vpop.f32.mrb[0].mxu0
        %v2214 = vpop.f32.mrb[0].mxu0
        %v2215 = vadd.f32 0.0, %v2214
        %v2216 = vpop.f32.mrb[0].mxu0
        %2217 = vmatprep.mubr.bf16.mxu0 0
        %2218 = vmatmul.mubr.bf16.gmra.mrb[0].mxu0 %v2169
        %v2219 = vpop.f32.mrb[0].mxu0
        %v2220 = vadd.f32 0.0, %v2219
        %v2221 = vpop.f32.mrb[0].mxu0
        %v2222 = vpop.f32.mrb[0].mxu0
        %v2223 = vadd.f32 0.0, %v2222
        %v2224 = vpop.f32.mrb[0].mxu0
        %2225 = vmatprep.mubr.bf16.mxu0 0
        %2226 = vmatmul.mubr.bf16.gmra.mrb[0].mxu0 %v2172
        %v2227 = vpop.f32.mrb[0].mxu0
        %v2228 = vadd.f32 0.0, %v2227
        %v2229 = vpop.f32.mrb[0].mxu0
        %v2230 = vpop.f32.mrb[0].mxu0
        %v2231 = vadd.f32 0.0, %v2230
        %v2232 = vpop.f32.mrb[0].mxu0
        %2233 = vmatprep.mubr.bf16.mxu0 0
        %2234 = vmatmul.mubr.bf16.gmra.mrb[0].mxu0 %v2175
        %v2235 = vpop.f32.mrb[0].mxu0
        %v2236 = vadd.f32 0.0, %v2235
        %v2237 = vpop.f32.mrb[0].mxu0
        %v2238 = vpop.f32.mrb[0].mxu0
        %v2239 = vadd.f32 0.0, %v2238
        %v2240 = vpop.f32.mrb[0].mxu0
        %2241 = vdwg.mxu0
        %v2242 = vadd.f32 %v1994, %v2212
        %v2243 = vadd.f32 %v1995, %v2215
        %v2244 = vadd.f32 %v1996, %v2220
        %v2245 = vadd.f32 %v1997, %v2223
        %v2246 = vadd.f32 %v1998, %v2228
        %v2247 = vadd.f32 %v1999, %v2231
        %v2248 = vadd.f32 %v2000, %v2236
        %v2249 = vadd.f32 %v2001, %v2239
        %s2250 = scalar_lea.vmem %s306, 320 [#allocation7]
        %v2251 = vld [vmem:[%s2250] sm:$0xf]
        %v2252 = vld [vmem:[%s2250 + $0x4] sm:$0xf]
        %v2253 = vld [vmem:[%s2250 + $0x8] sm:$0xf]
        %v2254 = vld [vmem:[%s2250 + $0xc] sm:$0xf]
        %v2255 = vld [vmem:[%s2250 + $0x10] sm:$0xf]
        %v2256 = vld [vmem:[%s2250 + $0x14] sm:$0xf]
        %v2257 = vld [vmem:[%s2250 + $0x18] sm:$0xf]
        %v2258 = vld [vmem:[%s2250 + $0x1c] sm:$0xf]
        %v2259 = vld [vmem:[%s2250 + $0x20] sm:$0xf]
        %v2260 = vld [vmem:[%s2250 + $0x24] sm:$0xf]
        %v2261 = vld [vmem:[%s2250 + $0x28] sm:$0xf]
        %v2262 = vld [vmem:[%s2250 + $0x2c] sm:$0xf]
        %v2263 = vld [vmem:[%s2250 + $0x30] sm:$0xf]
        %v2264 = vld [vmem:[%s2250 + $0x34] sm:$0xf]
        %v2265 = vld [vmem:[%s2250 + $0x38] sm:$0xf]
        %v2266 = vld [vmem:[%s2250 + $0x3c] sm:$0xf]
        %v2283 = vunpack.c.l.b16 %v2251
        %v2284 = vunpack.c.l.b16 %v2252
        %v2285 = vunpack.c.l.b16 %v2253
        %v2286 = vunpack.c.l.b16 %v2254
        %v2287 = vunpack.c.l.b16 %v2255
        %v2288 = vunpack.c.l.b16 %v2256
        %v2289 = vunpack.c.l.b16 %v2257
        %v2290 = vunpack.c.l.b16 %v2258
        %v2291 = vunpack.c.l.b16 %v2259
        %v2292 = vunpack.c.l.b16 %v2260
        %v2293 = vunpack.c.l.b16 %v2261
        %v2294 = vunpack.c.l.b16 %v2262
        %v2295 = vunpack.c.l.b16 %v2263
        %v2296 = vunpack.c.l.b16 %v2264
        %v2297 = vunpack.c.l.b16 %v2265
        %v2298 = vunpack.c.l.b16 %v2266
        %v2299 = vpack.c.b16 %v2284, %v2283
        %v2300 = vpack.c.b16 %v2286, %v2285
        %v2301 = vpack.c.b16 %v2288, %v2287
        %v2302 = vpack.c.b16 %v2290, %v2289
        %v2303 = vpack.c.b16 %v2292, %v2291
        %v2304 = vpack.c.b16 %v2294, %v2293
        %v2305 = vpack.c.b16 %v2296, %v2295
        %v2306 = vpack.c.b16 %v2298, %v2297
        %2315 = vmatprep.subr.bf16.mxu0 0
        %2316 = vmatpush1.bf16.msra.mxu0 %v2299
        %2317 = vmatprep.subr.bf16.mxu0 0
        %2318 = vmatpush1.bf16.msra.mxu0 %v2300
        %2319 = vmatprep.subr.bf16.mxu0 0
        %2320 = vmatpush1.bf16.msra.mxu0 %v2301
        %2321 = vmatprep.subr.bf16.mxu0 0
        %2322 = vmatpush1.bf16.msra.mxu0 %v2302
        %2323 = vmatprep.subr.bf16.mxu0 0
        %2324 = vmatpush1.bf16.msra.mxu0 %v2303
        %2325 = vmatprep.subr.bf16.mxu0 0
        %2326 = vmatpush1.bf16.msra.mxu0 %v2304
        %2327 = vmatprep.subr.bf16.mxu0 0
        %2328 = vmatpush1.bf16.msra.mxu0 %v2305
        %2329 = vmatprep.subr.bf16.mxu0 0
        %2330 = vmatpush1.bf16.msra.mxu0 %v2306
        %2331 = vmatprep.subr.bf16.mxu0 0
        %2332 = vmatpush1.bf16.msra.mxu0 0
        %2333 = vmatprep.subr.bf16.mxu0 0
        %2334 = vmatpush1.bf16.msra.mxu0 0
        %2335 = vmatprep.subr.bf16.mxu0 0
        %2336 = vmatpush1.bf16.msra.mxu0 0
        %2337 = vmatprep.subr.bf16.mxu0 0
        %2338 = vmatpush1.bf16.msra.mxu0 0
        %2339 = vmatprep.subr.bf16.mxu0 0
        %2340 = vmatpush1.bf16.msra.mxu0 0
        %2341 = vmatprep.subr.bf16.mxu0 0
        %2342 = vmatpush1.bf16.msra.mxu0 0
        %2343 = vmatprep.subr.bf16.mxu0 0
        %2344 = vmatpush1.bf16.msra.mxu0 0
        %2345 = vmatprep.subr.bf16.mxu0 0
        %2346 = vmatpush1.bf16.msra.mxu0 0
        %2347 = vmatprep.mubr.bf16.mxu0 0
        %2348 = vmatmul.mubr.bf16.gmra.mrb[0].mxu0 %v1133
        %v2349 = vpop.f32.mrb[0].mxu0
        %v2350 = vadd.f32 0.0, %v2349
        %v2351 = vpop.f32.mrb[0].mxu0
        %v2352 = vpop.f32.mrb[0].mxu0
        %v2353 = vadd.f32 0.0, %v2352
        %v2354 = vpop.f32.mrb[0].mxu0
        %2355 = vmatprep.mubr.bf16.mxu0 0
        %2356 = vmatmul.mubr.bf16.gmra.mrb[0].mxu0 %v1134
        %v2357 = vpop.f32.mrb[0].mxu0
        %v2358 = vadd.f32 0.0, %v2357
        %v2359 = vpop.f32.mrb[0].mxu0
        %v2360 = vpop.f32.mrb[0].mxu0
        %v2361 = vadd.f32 0.0, %v2360
        %v2362 = vpop.f32.mrb[0].mxu0
        %2363 = vmatprep.mubr.bf16.mxu0 0
        %2364 = vmatmul.mubr.bf16.gmra.mrb[0].mxu0 %v1135
        %v2365 = vpop.f32.mrb[0].mxu0
        %v2366 = vadd.f32 0.0, %v2365
        %v2367 = vpop.f32.mrb[0].mxu0
        %v2368 = vpop.f32.mrb[0].mxu0
        %v2369 = vadd.f32 0.0, %v2368
        %v2370 = vpop.f32.mrb[0].mxu0
        %2371 = vmatprep.mubr.bf16.mxu0 0
        %2372 = vmatmul.mubr.bf16.gmra.mrb[0].mxu0 %v1136
        %v2373 = vpop.f32.mrb[0].mxu0
        %v2374 = vadd.f32 0.0, %v2373
        %v2375 = vpop.f32.mrb[0].mxu0
        %v2376 = vpop.f32.mrb[0].mxu0
        %v2377 = vadd.f32 0.0, %v2376
        %v2378 = vpop.f32.mrb[0].mxu0
        %2379 = vdwg.mxu0
        %s2380 = scalar_lea.vmem [#allocation5], 128
        %v2381 = vld [vmem:[%s2380] sm:$0xf]
        %v2382 = vld [vmem:[%s2380 + $0x4] sm:$0xf]
        %v2383 = vld [vmem:[%s2380 + $0x8] sm:$0xf]
        %v2384 = vld [vmem:[%s2380 + $0xc] sm:$0xf]
        %v2385 = vld [vmem:[%s2380 + $0x10] sm:$0xf]
        %v2386 = vld [vmem:[%s2380 + $0x14] sm:$0xf]
        %v2387 = vld [vmem:[%s2380 + $0x18] sm:$0xf]
        %v2388 = vld [vmem:[%s2380 + $0x1c] sm:$0xf]
        %v2389 = vpack.c.bf16 %v2353, %v2350
        %v2390 = vpack.c.bf16 %v2361, %v2358
        %v2391 = vpack.c.bf16 %v2369, %v2366
        %v2392 = vpack.c.bf16 %v2377, %v2374
        %v2401 = vunpack.c.l.b16 %v2381
        %v2402 = vunpack.c.l.b16 %v2382
        %v2403 = vunpack.c.l.b16 %v2383
        %v2404 = vunpack.c.l.b16 %v2384
        %v2405 = vunpack.c.l.b16 %v2385
        %v2406 = vunpack.c.l.b16 %v2386
        %v2407 = vunpack.c.l.b16 %v2387
        %v2408 = vunpack.c.l.b16 %v2388
        %v2409 = vpack.c.b16 %v2402, %v2401
        %v2410 = vpack.c.b16 %v2404, %v2403
        %v2411 = vpack.c.b16 %v2406, %v2405
        %v2412 = vpack.c.b16 %v2408, %v2407
        %v2414 = vsel %vm1315, %v2409, 0
        %v2417 = vsel %vm1315, %v2410, 0
        %v2420 = vsel %vm1315, %v2411, 0
        %v2423 = vsel %vm1315, %v2412, 0
        %2425 = vmatprep.subr.bf16.mxu0 0
        %2426 = vmatpush1.bf16.msra.mxu0 %v2389
        %2427 = vmatprep.subr.bf16.mxu0 0
        %2428 = vmatpush1.bf16.msra.mxu0 %v2390
        %2429 = vmatprep.subr.bf16.mxu0 0
        %2430 = vmatpush1.bf16.msra.mxu0 %v2391
        %2431 = vmatprep.subr.bf16.mxu0 0
        %2432 = vmatpush1.bf16.msra.mxu0 %v2392
        %2433 = vmatprep.subr.bf16.mxu0 0
        %2434 = vmatpush1.bf16.msra.mxu0 0
        %2435 = vmatprep.subr.bf16.mxu0 0
        %2436 = vmatpush1.bf16.msra.mxu0 0
        %2437 = vmatprep.subr.bf16.mxu0 0
        %2438 = vmatpush1.bf16.msra.mxu0 0
        %2439 = vmatprep.subr.bf16.mxu0 0
        %2440 = vmatpush1.bf16.msra.mxu0 0
        %2441 = vmatprep.subr.bf16.mxu0 0
        %2442 = vmatpush1.bf16.msra.mxu0 0
        %2443 = vmatprep.subr.bf16.mxu0 0
        %2444 = vmatpush1.bf16.msra.mxu0 0
        %2445 = vmatprep.subr.bf16.mxu0 0
        %2446 = vmatpush1.bf16.msra.mxu0 0
        %2447 = vmatprep.subr.bf16.mxu0 0
        %2448 = vmatpush1.bf16.msra.mxu0 0
        %2449 = vmatprep.subr.bf16.mxu0 0
        %2450 = vmatpush1.bf16.msra.mxu0 0
        %2451 = vmatprep.subr.bf16.mxu0 0
        %2452 = vmatpush1.bf16.msra.mxu0 0
        %2453 = vmatprep.subr.bf16.mxu0 0
        %2454 = vmatpush1.bf16.msra.mxu0 0
        %2455 = vmatprep.subr.bf16.mxu0 0
        %2456 = vmatpush1.bf16.msra.mxu0 0
        %2457 = vmatprep.mubr.bf16.mxu0 0
        %2458 = vmatmul.mubr.bf16.gmra.mrb[0].mxu0 %v2414
        %v2459 = vpop.f32.mrb[0].mxu0
        %v2460 = vadd.f32 0.0, %v2459
        %v2461 = vpop.f32.mrb[0].mxu0
        %v2462 = vpop.f32.mrb[0].mxu0
        %v2463 = vadd.f32 0.0, %v2462
        %v2464 = vpop.f32.mrb[0].mxu0
        %2465 = vmatprep.mubr.bf16.mxu0 0
        %2466 = vmatmul.mubr.bf16.gmra.mrb[0].mxu0 %v2417
        %v2467 = vpop.f32.mrb[0].mxu0
        %v2468 = vadd.f32 0.0, %v2467
        %v2469 = vpop.f32.mrb[0].mxu0
        %v2470 = vpop.f32.mrb[0].mxu0
        %v2471 = vadd.f32 0.0, %v2470
        %v2472 = vpop.f32.mrb[0].mxu0
        %2473 = vmatprep.mubr.bf16.mxu0 0
        %2474 = vmatmul.mubr.bf16.gmra.mrb[0].mxu0 %v2420
        %v2475 = vpop.f32.mrb[0].mxu0
        %v2476 = vadd.f32 0.0, %v2475
        %v2477 = vpop.f32.mrb[0].mxu0
        %v2478 = vpop.f32.mrb[0].mxu0
        %v2479 = vadd.f32 0.0, %v2478
        %v2480 = vpop.f32.mrb[0].mxu0
        %2481 = vmatprep.mubr.bf16.mxu0 0
        %2482 = vmatmul.mubr.bf16.gmra.mrb[0].mxu0 %v2423
        %v2483 = vpop.f32.mrb[0].mxu0
        %v2484 = vadd.f32 0.0, %v2483
        %v2485 = vpop.f32.mrb[0].mxu0
        %v2486 = vpop.f32.mrb[0].mxu0
        %v2487 = vadd.f32 0.0, %v2486
        %v2488 = vpop.f32.mrb[0].mxu0
        %2489 = vdwg.mxu0
        %v2490 = vadd.f32 %v2242, %v2460
        %v2491 = vadd.f32 %v2243, %v2463
        %v2492 = vadd.f32 %v2244, %v2468
        %v2493 = vadd.f32 %v2245, %v2471
        %v2494 = vadd.f32 %v2246, %v2476
        %v2495 = vadd.f32 %v2247, %v2479
        %v2496 = vadd.f32 %v2248, %v2484
        %v2497 = vadd.f32 %v2249, %v2487
        %s2498 = scalar_lea.vmem %s306, 384 [#allocation7]
        %v2499 = vld [vmem:[%s2498] sm:$0xf]
        %v2500 = vld [vmem:[%s2498 + $0x4] sm:$0xf]
        %v2501 = vld [vmem:[%s2498 + $0x8] sm:$0xf]
        %v2502 = vld [vmem:[%s2498 + $0xc] sm:$0xf]
        %v2503 = vld [vmem:[%s2498 + $0x10] sm:$0xf]
        %v2504 = vld [vmem:[%s2498 + $0x14] sm:$0xf]
        %v2505 = vld [vmem:[%s2498 + $0x18] sm:$0xf]
        %v2506 = vld [vmem:[%s2498 + $0x1c] sm:$0xf]
        %v2507 = vld [vmem:[%s2498 + $0x20] sm:$0xf]
        %v2508 = vld [vmem:[%s2498 + $0x24] sm:$0xf]
        %v2509 = vld [vmem:[%s2498 + $0x28] sm:$0xf]
        %v2510 = vld [vmem:[%s2498 + $0x2c] sm:$0xf]
        %v2511 = vld [vmem:[%s2498 + $0x30] sm:$0xf]
        %v2512 = vld [vmem:[%s2498 + $0x34] sm:$0xf]
        %v2513 = vld [vmem:[%s2498 + $0x38] sm:$0xf]
        %v2514 = vld [vmem:[%s2498 + $0x3c] sm:$0xf]
        %v2531 = vunpack.c.l.b16 %v2499
        %v2532 = vunpack.c.l.b16 %v2500
        %v2533 = vunpack.c.l.b16 %v2501
        %v2534 = vunpack.c.l.b16 %v2502
        %v2535 = vunpack.c.l.b16 %v2503
        %v2536 = vunpack.c.l.b16 %v2504
        %v2537 = vunpack.c.l.b16 %v2505
        %v2538 = vunpack.c.l.b16 %v2506
        %v2539 = vunpack.c.l.b16 %v2507
        %v2540 = vunpack.c.l.b16 %v2508
        %v2541 = vunpack.c.l.b16 %v2509
        %v2542 = vunpack.c.l.b16 %v2510
        %v2543 = vunpack.c.l.b16 %v2511
        %v2544 = vunpack.c.l.b16 %v2512
        %v2545 = vunpack.c.l.b16 %v2513
        %v2546 = vunpack.c.l.b16 %v2514
        %v2547 = vpack.c.b16 %v2532, %v2531
        %v2548 = vpack.c.b16 %v2534, %v2533
        %v2549 = vpack.c.b16 %v2536, %v2535
        %v2550 = vpack.c.b16 %v2538, %v2537
        %v2551 = vpack.c.b16 %v2540, %v2539
        %v2552 = vpack.c.b16 %v2542, %v2541
        %v2553 = vpack.c.b16 %v2544, %v2543
        %v2554 = vpack.c.b16 %v2546, %v2545
        %2563 = vmatprep.subr.bf16.mxu0 0
        %2564 = vmatpush1.bf16.msra.mxu0 %v2547
        %2565 = vmatprep.subr.bf16.mxu0 0
        %2566 = vmatpush1.bf16.msra.mxu0 %v2548
        %2567 = vmatprep.subr.bf16.mxu0 0
        %2568 = vmatpush1.bf16.msra.mxu0 %v2549
        %2569 = vmatprep.subr.bf16.mxu0 0
        %2570 = vmatpush1.bf16.msra.mxu0 %v2550
        %2571 = vmatprep.subr.bf16.mxu0 0
        %2572 = vmatpush1.bf16.msra.mxu0 %v2551
        %2573 = vmatprep.subr.bf16.mxu0 0
        %2574 = vmatpush1.bf16.msra.mxu0 %v2552
        %2575 = vmatprep.subr.bf16.mxu0 0
        %2576 = vmatpush1.bf16.msra.mxu0 %v2553
        %2577 = vmatprep.subr.bf16.mxu0 0
        %2578 = vmatpush1.bf16.msra.mxu0 %v2554
        %2579 = vmatprep.subr.bf16.mxu0 0
        %2580 = vmatpush1.bf16.msra.mxu0 0
        %2581 = vmatprep.subr.bf16.mxu0 0
        %2582 = vmatpush1.bf16.msra.mxu0 0
        %2583 = vmatprep.subr.bf16.mxu0 0
        %2584 = vmatpush1.bf16.msra.mxu0 0
        %2585 = vmatprep.subr.bf16.mxu0 0
        %2586 = vmatpush1.bf16.msra.mxu0 0
        %2587 = vmatprep.subr.bf16.mxu0 0
        %2588 = vmatpush1.bf16.msra.mxu0 0
        %2589 = vmatprep.subr.bf16.mxu0 0
        %2590 = vmatpush1.bf16.msra.mxu0 0
        %2591 = vmatprep.subr.bf16.mxu0 0
        %2592 = vmatpush1.bf16.msra.mxu0 0
        %2593 = vmatprep.subr.bf16.mxu0 0
        %2594 = vmatpush1.bf16.msra.mxu0 0
        %2595 = vmatprep.mubr.bf16.mxu0 0
        %2596 = vmatmul.mubr.bf16.gmra.mrb[0].mxu0 %v1133
        %v2597 = vpop.f32.mrb[0].mxu0
        %v2598 = vadd.f32 0.0, %v2597
        %v2599 = vpop.f32.mrb[0].mxu0
        %v2600 = vpop.f32.mrb[0].mxu0
        %v2601 = vadd.f32 0.0, %v2600
        %v2602 = vpop.f32.mrb[0].mxu0
        %2603 = vmatprep.mubr.bf16.mxu0 0
        %2604 = vmatmul.mubr.bf16.gmra.mrb[0].mxu0 %v1134
        %v2605 = vpop.f32.mrb[0].mxu0
        %v2606 = vadd.f32 0.0, %v2605
        %v2607 = vpop.f32.mrb[0].mxu0
        %v2608 = vpop.f32.mrb[0].mxu0
        %v2609 = vadd.f32 0.0, %v2608
        %v2610 = vpop.f32.mrb[0].mxu0
        %2611 = vmatprep.mubr.bf16.mxu0 0
        %2612 = vmatmul.mubr.bf16.gmra.mrb[0].mxu0 %v1135
        %v2613 = vpop.f32.mrb[0].mxu0
        %v2614 = vadd.f32 0.0, %v2613
        %v2615 = vpop.f32.mrb[0].mxu0
        %v2616 = vpop.f32.mrb[0].mxu0
        %v2617 = vadd.f32 0.0, %v2616
        %v2618 = vpop.f32.mrb[0].mxu0
        %2619 = vmatprep.mubr.bf16.mxu0 0
        %2620 = vmatmul.mubr.bf16.gmra.mrb[0].mxu0 %v1136
        %v2621 = vpop.f32.mrb[0].mxu0
        %v2622 = vadd.f32 0.0, %v2621
        %v2623 = vpop.f32.mrb[0].mxu0
        %v2624 = vpop.f32.mrb[0].mxu0
        %v2625 = vadd.f32 0.0, %v2624
        %v2626 = vpop.f32.mrb[0].mxu0
        %2627 = vdwg.mxu0
        %s2628 = scalar_lea.vmem [#allocation5], 160
        %v2629 = vld [vmem:[%s2628] sm:$0xf]
        %v2630 = vld [vmem:[%s2628 + $0x4] sm:$0xf]
        %v2631 = vld [vmem:[%s2628 + $0x8] sm:$0xf]
        %v2632 = vld [vmem:[%s2628 + $0xc] sm:$0xf]
        %v2633 = vld [vmem:[%s2628 + $0x10] sm:$0xf]
        %v2634 = vld [vmem:[%s2628 + $0x14] sm:$0xf]
        %v2635 = vld [vmem:[%s2628 + $0x18] sm:$0xf]
        %v2636 = vld [vmem:[%s2628 + $0x1c] sm:$0xf]
        %v2637 = vpack.c.bf16 %v2601, %v2598
        %v2638 = vpack.c.bf16 %v2609, %v2606
        %v2639 = vpack.c.bf16 %v2617, %v2614
        %v2640 = vpack.c.bf16 %v2625, %v2622
        %v2649 = vunpack.c.l.b16 %v2629
        %v2650 = vunpack.c.l.b16 %v2630
        %v2651 = vunpack.c.l.b16 %v2631
        %v2652 = vunpack.c.l.b16 %v2632
        %v2653 = vunpack.c.l.b16 %v2633
        %v2654 = vunpack.c.l.b16 %v2634
        %v2655 = vunpack.c.l.b16 %v2635
        %v2656 = vunpack.c.l.b16 %v2636
        %v2657 = vpack.c.b16 %v2650, %v2649
        %v2658 = vpack.c.b16 %v2652, %v2651
        %v2659 = vpack.c.b16 %v2654, %v2653
        %v2660 = vpack.c.b16 %v2656, %v2655
        %v2662 = vsel %vm1315, %v2657, 0
        %v2665 = vsel %vm1315, %v2658, 0
        %v2668 = vsel %vm1315, %v2659, 0
        %v2671 = vsel %vm1315, %v2660, 0
        %2673 = vmatprep.subr.bf16.mxu0 0
        %2674 = vmatpush1.bf16.msra.mxu0 %v2637
        %2675 = vmatprep.subr.bf16.mxu0 0
        %2676 = vmatpush1.bf16.msra.mxu0 %v2638
        %2677 = vmatprep.subr.bf16.mxu0 0
        %2678 = vmatpush1.bf16.msra.mxu0 %v2639
        %2679 = vmatprep.subr.bf16.mxu0 0
        %2680 = vmatpush1.bf16.msra.mxu0 %v2640
        %2681 = vmatprep.subr.bf16.mxu0 0
        %2682 = vmatpush1.bf16.msra.mxu0 0
        %2683 = vmatprep.subr.bf16.mxu0 0
        %2684 = vmatpush1.bf16.msra.mxu0 0
        %2685 = vmatprep.subr.bf16.mxu0 0
        %2686 = vmatpush1.bf16.msra.mxu0 0
        %2687 = vmatprep.subr.bf16.mxu0 0
        %2688 = vmatpush1.bf16.msra.mxu0 0
        %2689 = vmatprep.subr.bf16.mxu0 0
        %2690 = vmatpush1.bf16.msra.mxu0 0
        %2691 = vmatprep.subr.bf16.mxu0 0
        %2692 = vmatpush1.bf16.msra.mxu0 0
        %2693 = vmatprep.subr.bf16.mxu0 0
        %2694 = vmatpush1.bf16.msra.mxu0 0
        %2695 = vmatprep.subr.bf16.mxu0 0
        %2696 = vmatpush1.bf16.msra.mxu0 0
        %2697 = vmatprep.subr.bf16.mxu0 0
        %2698 = vmatpush1.bf16.msra.mxu0 0
        %2699 = vmatprep.subr.bf16.mxu0 0
        %2700 = vmatpush1.bf16.msra.mxu0 0
        %2701 = vmatprep.subr.bf16.mxu0 0
        %2702 = vmatpush1.bf16.msra.mxu0 0
        %2703 = vmatprep.subr.bf16.mxu0 0
        %2704 = vmatpush1.bf16.msra.mxu0 0
        %2705 = vmatprep.mubr.bf16.mxu0 0
        %2706 = vmatmul.mubr.bf16.gmra.mrb[0].mxu0 %v2662
        %v2707 = vpop.f32.mrb[0].mxu0
        %v2708 = vadd.f32 0.0, %v2707
        %v2709 = vpop.f32.mrb[0].mxu0
        %v2710 = vpop.f32.mrb[0].mxu0
        %v2711 = vadd.f32 0.0, %v2710
        %v2712 = vpop.f32.mrb[0].mxu0
        %2713 = vmatprep.mubr.bf16.mxu0 0
        %2714 = vmatmul.mubr.bf16.gmra.mrb[0].mxu0 %v2665
        %v2715 = vpop.f32.mrb[0].mxu0
        %v2716 = vadd.f32 0.0, %v2715
        %v2717 = vpop.f32.mrb[0].mxu0
        %v2718 = vpop.f32.mrb[0].mxu0
        %v2719 = vadd.f32 0.0, %v2718
        %v2720 = vpop.f32.mrb[0].mxu0
        %2721 = vmatprep.mubr.bf16.mxu0 0
        %2722 = vmatmul.mubr.bf16.gmra.mrb[0].mxu0 %v2668
        %v2723 = vpop.f32.mrb[0].mxu0
        %v2724 = vadd.f32 0.0, %v2723
        %v2725 = vpop.f32.mrb[0].mxu0
        %v2726 = vpop.f32.mrb[0].mxu0
        %v2727 = vadd.f32 0.0, %v2726
        %v2728 = vpop.f32.mrb[0].mxu0
        %2729 = vmatprep.mubr.bf16.mxu0 0
        %2730 = vmatmul.mubr.bf16.gmra.mrb[0].mxu0 %v2671
        %v2731 = vpop.f32.mrb[0].mxu0
        %v2732 = vadd.f32 0.0, %v2731
        %v2733 = vpop.f32.mrb[0].mxu0
        %v2734 = vpop.f32.mrb[0].mxu0
        %v2735 = vadd.f32 0.0, %v2734
        %v2736 = vpop.f32.mrb[0].mxu0
        %2737 = vdwg.mxu0
        %v2738 = vadd.f32 %v2490, %v2708
        %v2739 = vadd.f32 %v2491, %v2711
        %v2740 = vadd.f32 %v2492, %v2716
        %v2741 = vadd.f32 %v2493, %v2719
        %v2742 = vadd.f32 %v2494, %v2724
        %v2743 = vadd.f32 %v2495, %v2727
        %v2744 = vadd.f32 %v2496, %v2732
        %v2745 = vadd.f32 %v2497, %v2735
        %v2746 = vld [vmem:[%s315] sm:$0x1]
        %v2747 = vld [vmem:[%s315 + $0x1] sm:$0x1]
        %v2748 = vld [vmem:[%s4] sm:$0xf]
        %v2749 = vld [vmem:[%s4 + $0x4] sm:$0xf]
        %v2750 = vld [vmem:[%s4 + $0x8] sm:$0xf]
        %v2751 = vld [vmem:[%s4 + $0xc] sm:$0xf]
        %v2752 = vld [vmem:[%s4 + $0x10] sm:$0xf]
        %v2753 = vld [vmem:[%s4 + $0x14] sm:$0xf]
        %v2754 = vld [vmem:[%s4 + $0x18] sm:$0xf]
        %v2755 = vld [vmem:[%s4 + $0x1c] sm:$0xf]
        %v2756 = vld [vmem:[%s4 + $0x20] sm:$0xf]
        %v2757 = vld [vmem:[%s4 + $0x24] sm:$0xf]
        %v2758 = vld [vmem:[%s4 + $0x28] sm:$0xf]
        %v2759 = vld [vmem:[%s4 + $0x2c] sm:$0xf]
        %v2760 = vld [vmem:[%s4 + $0x30] sm:$0xf]
        %v2761 = vld [vmem:[%s4 + $0x34] sm:$0xf]
        %v2762 = vld [vmem:[%s4 + $0x38] sm:$0xf]
        %v2763 = vld [vmem:[%s4 + $0x3c] sm:$0xf]
        %v2764 = vpack.c.bf16 %v2739, %v2738
        %v2765 = vpack.c.bf16 %v2741, %v2740
        %v2766 = vpack.c.bf16 %v2743, %v2742
        %v2767 = vpack.c.bf16 %v2745, %v2744
        %v2784 = vunpack.c.l.b16 %v2748
        %v2785 = vunpack.c.l.b16 %v2749
        %v2786 = vunpack.c.l.b16 %v2750
        %v2787 = vunpack.c.l.b16 %v2751
        %v2788 = vunpack.c.l.b16 %v2752
        %v2789 = vunpack.c.l.b16 %v2753
        %v2790 = vunpack.c.l.b16 %v2754
        %v2791 = vunpack.c.l.b16 %v2755
        %v2792 = vunpack.c.l.b16 %v2756
        %v2793 = vunpack.c.l.b16 %v2757
        %v2794 = vunpack.c.l.b16 %v2758
        %v2795 = vunpack.c.l.b16 %v2759
        %v2796 = vunpack.c.l.b16 %v2760
        %v2797 = vunpack.c.l.b16 %v2761
        %v2798 = vunpack.c.l.b16 %v2762
        %v2799 = vunpack.c.l.b16 %v2763
        %v2800 = vpack.c.b16 %v2785, %v2784
        %v2801 = vpack.c.b16 %v2787, %v2786
        %v2802 = vpack.c.b16 %v2789, %v2788
        %v2803 = vpack.c.b16 %v2791, %v2790
        %v2804 = vpack.c.b16 %v2793, %v2792
        %v2805 = vpack.c.b16 %v2795, %v2794
        %v2806 = vpack.c.b16 %v2797, %v2796
        %v2807 = vpack.c.b16 %v2799, %v2798
        %2816 = vmatprep.subr.bf16.mxu0 0
        %2817 = vmatpush1.bf16.msra.mxu0 %v2800
        %2818 = vmatprep.subr.bf16.mxu0 0
        %2819 = vmatpush1.bf16.msra.mxu0 %v2801
        %2820 = vmatprep.subr.bf16.mxu0 0
        %2821 = vmatpush1.bf16.msra.mxu0 %v2802
        %2822 = vmatprep.subr.bf16.mxu0 0
        %2823 = vmatpush1.bf16.msra.mxu0 %v2803
        %2824 = vmatprep.subr.bf16.mxu0 0
        %2825 = vmatpush1.bf16.msra.mxu0 %v2804
        %2826 = vmatprep.subr.bf16.mxu0 0
        %2827 = vmatpush1.bf16.msra.mxu0 %v2805
        %2828 = vmatprep.subr.bf16.mxu0 0
        %2829 = vmatpush1.bf16.msra.mxu0 %v2806
        %2830 = vmatprep.subr.bf16.mxu0 0
        %2831 = vmatpush1.bf16.msra.mxu0 %v2807
        %2832 = vmatprep.subr.bf16.mxu0 0
        %2833 = vmatpush1.bf16.msra.mxu0 0
        %2834 = vmatprep.subr.bf16.mxu0 0
        %2835 = vmatpush1.bf16.msra.mxu0 0
        %2836 = vmatprep.subr.bf16.mxu0 0
        %2837 = vmatpush1.bf16.msra.mxu0 0
        %2838 = vmatprep.subr.bf16.mxu0 0
        %2839 = vmatpush1.bf16.msra.mxu0 0
        %2840 = vmatprep.subr.bf16.mxu0 0
        %2841 = vmatpush1.bf16.msra.mxu0 0
        %2842 = vmatprep.subr.bf16.mxu0 0
        %2843 = vmatpush1.bf16.msra.mxu0 0
        %2844 = vmatprep.subr.bf16.mxu0 0
        %2845 = vmatpush1.bf16.msra.mxu0 0
        %2846 = vmatprep.subr.bf16.mxu0 0
        %2847 = vmatpush1.bf16.msra.mxu0 0
        %2848 = vmatprep.mubr.bf16.mxu0 0
        %2849 = vmatmul.mubr.bf16.gmra.mrb[0].mxu0 %v2764
        %v2850 = vpop.f32.mrb[0].mxu0
        %v2851 = vadd.f32 0.0, %v2850
        %v2852 = vpop.f32.mrb[0].mxu0
        %v2853 = vpop.f32.mrb[0].mxu0
        %v2854 = vadd.f32 0.0, %v2853
        %v2855 = vpop.f32.mrb[0].mxu0
        %2856 = vmatprep.mubr.bf16.mxu0 0
        %2857 = vmatmul.mubr.bf16.gmra.mrb[0].mxu0 %v2765
        %v2858 = vpop.f32.mrb[0].mxu0
        %v2859 = vadd.f32 0.0, %v2858
        %v2860 = vpop.f32.mrb[0].mxu0
        %v2861 = vpop.f32.mrb[0].mxu0
        %v2862 = vadd.f32 0.0, %v2861
        %v2863 = vpop.f32.mrb[0].mxu0
        %2864 = vmatprep.mubr.bf16.mxu0 0
        %2865 = vmatmul.mubr.bf16.gmra.mrb[0].mxu0 %v2766
        %v2866 = vpop.f32.mrb[0].mxu0
        %v2867 = vadd.f32 0.0, %v2866
        %v2868 = vpop.f32.mrb[0].mxu0
        %v2869 = vpop.f32.mrb[0].mxu0
        %v2870 = vadd.f32 0.0, %v2869
        %v2871 = vpop.f32.mrb[0].mxu0
        %2872 = vmatprep.mubr.bf16.mxu0 0
        %2873 = vmatmul.mubr.bf16.gmra.mrb[0].mxu0 %v2767
        %v2874 = vpop.f32.mrb[0].mxu0
        %v2875 = vadd.f32 0.0, %v2874
        %v2876 = vpop.f32.mrb[0].mxu0
        %v2877 = vpop.f32.mrb[0].mxu0
        %v2878 = vadd.f32 0.0, %v2877
        %v2879 = vpop.f32.mrb[0].mxu0
        %2880 = vdwg.mxu0
        %v2881 = vsub.f32 %v2738, %v2851
        %v2882 = vsub.f32 %v2739, %v2854
        %v2883 = vsub.f32 %v2740, %v2859
        %v2884 = vsub.f32 %v2741, %v2862
        %v2885 = vsub.f32 %v2742, %v2867
        %v2886 = vsub.f32 %v2743, %v2870
        %v2887 = vsub.f32 %v2744, %v2875
        %v2888 = vsub.f32 %v2745, %v2878
        %v2889 = vmul.f32 %v2881, %v2881
        %v2890 = vmul.f32 %v2882, %v2882
        %v2891 = vmul.f32 %v2883, %v2883
        %v2892 = vmul.f32 %v2884, %v2884
        %v2893 = vmul.f32 %v2885, %v2885
        %v2894 = vmul.f32 %v2886, %v2886
        %v2895 = vmul.f32 %v2887, %v2887
        %v2896 = vmul.f32 %v2888, %v2888
        %v2897 = vpack.c.bf16 %v2890, %v2889
        %v2898 = vpack.c.bf16 %v2892, %v2891
        %v2899 = vpack.c.bf16 %v2894, %v2893
        %v2900 = vpack.c.bf16 %v2896, %v2895
        %2901 = vmatprep.subr.bf16.mxu0 0
        %2902 = vmatpush1.bf16.msra.mxu0 %v2800
        %2903 = vmatprep.subr.bf16.mxu0 0
        %2904 = vmatpush1.bf16.msra.mxu0 %v2801
        %2905 = vmatprep.subr.bf16.mxu0 0
        %2906 = vmatpush1.bf16.msra.mxu0 %v2802
        %2907 = vmatprep.subr.bf16.mxu0 0
        %2908 = vmatpush1.bf16.msra.mxu0 %v2803
        %2909 = vmatprep.subr.bf16.mxu0 0
        %2910 = vmatpush1.bf16.msra.mxu0 %v2804
        %2911 = vmatprep.subr.bf16.mxu0 0
        %2912 = vmatpush1.bf16.msra.mxu0 %v2805
        %2913 = vmatprep.subr.bf16.mxu0 0
        %2914 = vmatpush1.bf16.msra.mxu0 %v2806
        %2915 = vmatprep.subr.bf16.mxu0 0
        %2916 = vmatpush1.bf16.msra.mxu0 %v2807
        %2917 = vmatprep.subr.bf16.mxu0 0
        %2918 = vmatpush1.bf16.msra.mxu0 0
        %2919 = vmatprep.subr.bf16.mxu0 0
        %2920 = vmatpush1.bf16.msra.mxu0 0
        %2921 = vmatprep.subr.bf16.mxu0 0
        %2922 = vmatpush1.bf16.msra.mxu0 0
        %2923 = vmatprep.subr.bf16.mxu0 0
        %2924 = vmatpush1.bf16.msra.mxu0 0
        %2925 = vmatprep.subr.bf16.mxu0 0
        %2926 = vmatpush1.bf16.msra.mxu0 0
        %2927 = vmatprep.subr.bf16.mxu0 0
        %2928 = vmatpush1.bf16.msra.mxu0 0
        %2929 = vmatprep.subr.bf16.mxu0 0
        %2930 = vmatpush1.bf16.msra.mxu0 0
        %2931 = vmatprep.subr.bf16.mxu0 0
        %2932 = vmatpush1.bf16.msra.mxu0 0
        %2933 = vmatprep.mubr.bf16.mxu0 0
        %2934 = vmatmul.mubr.bf16.gmra.mrb[0].mxu0 %v2897
        %v2935 = vpop.f32.mrb[0].mxu0
        %v2936 = vadd.f32 1e-05, %v2935
        %v2937 = vpop.f32.mrb[0].mxu0
        %v2938 = vpop.f32.mrb[0].mxu0
        %v2939 = vadd.f32 1e-05, %v2938
        %v2940 = vpop.f32.mrb[0].mxu0
        %2941 = vmatprep.mubr.bf16.mxu0 0
        %2942 = vmatmul.mubr.bf16.gmra.mrb[0].mxu0 %v2898
        %v2943 = vpop.f32.mrb[0].mxu0
        %v2944 = vadd.f32 1e-05, %v2943
        %v2945 = vpop.f32.mrb[0].mxu0
        %v2946 = vpop.f32.mrb[0].mxu0
        %v2947 = vadd.f32 1e-05, %v2946
        %v2948 = vpop.f32.mrb[0].mxu0
        %2949 = vmatprep.mubr.bf16.mxu0 0
        %2950 = vmatmul.mubr.bf16.gmra.mrb[0].mxu0 %v2899
        %v2951 = vpop.f32.mrb[0].mxu0
        %v2952 = vadd.f32 1e-05, %v2951
        %v2953 = vpop.f32.mrb[0].mxu0
        %v2954 = vpop.f32.mrb[0].mxu0
        %v2955 = vadd.f32 1e-05, %v2954
        %v2956 = vpop.f32.mrb[0].mxu0
        %2957 = vmatprep.mubr.bf16.mxu0 0
        %2958 = vmatmul.mubr.bf16.gmra.mrb[0].mxu0 %v2900
        %v2959 = vpop.f32.mrb[0].mxu0
        %v2960 = vadd.f32 1e-05, %v2959
        %v2961 = vpop.f32.mrb[0].mxu0
        %v2962 = vpop.f32.mrb[0].mxu0
        %v2963 = vadd.f32 1e-05, %v2962
        %v2964 = vpop.f32.mrb[0].mxu0
        %2965 = vdwg.mxu0
        %v2966 = vrsqrt.pop %v2936
        %v2967 = vrsqrt.pop %v2939
        %v2968 = vrsqrt.pop %v2944
        %v2969 = vrsqrt.pop %v2947
        %v2970 = vrsqrt.pop %v2952
        %v2971 = vrsqrt.pop %v2955
        %v2972 = vrsqrt.pop %v2960
        %v2973 = vrsqrt.pop %v2963
        %v2974 = vmul.f32 %v2881, %v2966
        %v2975 = vmul.f32 %v2882, %v2967
        %v2976 = vmul.f32 %v2883, %v2968
        %v2977 = vmul.f32 %v2884, %v2969
        %v2978 = vmul.f32 %v2885, %v2970
        %v2979 = vmul.f32 %v2886, %v2971
        %v2980 = vmul.f32 %v2887, %v2972
        %v2981 = vmul.f32 %v2888, %v2973
        %v2982 = vlaneseq
        %v2983 = vshrl.u32 %v2982, 7
        %v2984 = vsub.s32 0, %v2983
        %v2985 = vrot.slane %v2746, %v2984
        %v2986 = vmul.f32 %v2974, %v2985
        %v2987 = vmul.f32 %v2975, %v2985
        %v2988 = vmul.f32 %v2976, %v2985
        %v2989 = vmul.f32 %v2977, %v2985
        %v2990 = vmul.f32 %v2978, %v2985
        %v2991 = vmul.f32 %v2979, %v2985
        %v2992 = vmul.f32 %v2980, %v2985
        %v2993 = vmul.f32 %v2981, %v2985
        %v2994 = vlaneseq
        %v2995 = vshrl.u32 %v2994, 7
        %v2996 = vsub.s32 0, %v2995
        %v2997 = vrot.slane %v2747, %v2996
        %v2998 = vadd.f32 %v2986, %v2997
        %v2999 = vadd.f32 %v2987, %v2997
        %v3000 = vadd.f32 %v2988, %v2997
        %v3001 = vadd.f32 %v2989, %v2997
        %v3002 = vadd.f32 %v2990, %v2997
        %v3003 = vadd.f32 %v2991, %v2997
        %v3004 = vadd.f32 %v2992, %v2997
        %v3005 = vadd.f32 %v2993, %v2997
        %v3006 = vmax.f32 %v2998, 0.0
        %v3007 = vmax.f32 %v2999, 0.0
        %v3008 = vmax.f32 %v3000, 0.0
        %v3009 = vmax.f32 %v3001, 0.0
        %v3010 = vmax.f32 %v3002, 0.0
        %v3011 = vmax.f32 %v3003, 0.0
        %v3012 = vmax.f32 %v3004, 0.0
        %v3013 = vmax.f32 %v3005, 0.0
        %s3014 = scalar_lea.vmem %s306, 448 [#allocation7]
        %v3015 = vld [vmem:[%s3014] sm:$0xf]
        %v3016 = vld [vmem:[%s3014 + $0x4] sm:$0xf]
        %v3017 = vld [vmem:[%s3014 + $0x8] sm:$0xf]
        %v3018 = vld [vmem:[%s3014 + $0xc] sm:$0xf]
        %v3019 = vld [vmem:[%s3014 + $0x10] sm:$0xf]
        %v3020 = vld [vmem:[%s3014 + $0x14] sm:$0xf]
        %v3021 = vld [vmem:[%s3014 + $0x18] sm:$0xf]
        %v3022 = vld [vmem:[%s3014 + $0x1c] sm:$0xf]
        %v3023 = vld [vmem:[%s3014 + $0x20] sm:$0xf]
        %v3024 = vld [vmem:[%s3014 + $0x24] sm:$0xf]
        %v3025 = vld [vmem:[%s3014 + $0x28] sm:$0xf]
        %v3026 = vld [vmem:[%s3014 + $0x2c] sm:$0xf]
        %v3027 = vld [vmem:[%s3014 + $0x30] sm:$0xf]
        %v3028 = vld [vmem:[%s3014 + $0x34] sm:$0xf]
        %v3029 = vld [vmem:[%s3014 + $0x38] sm:$0xf]
        %v3030 = vld [vmem:[%s3014 + $0x3c] sm:$0xf]
        %v3031 = vpack.c.bf16 %v3007, %v3006
        %v3032 = vpack.c.bf16 %v3009, %v3008
        %v3033 = vpack.c.bf16 %v3011, %v3010
        %v3034 = vpack.c.bf16 %v3013, %v3012
        %v3051 = vunpack.c.l.b16 %v3015
        %v3052 = vunpack.c.l.b16 %v3016
        %v3053 = vunpack.c.l.b16 %v3017
        %v3054 = vunpack.c.l.b16 %v3018
        %v3055 = vunpack.c.l.b16 %v3019
        %v3056 = vunpack.c.l.b16 %v3020
        %v3057 = vunpack.c.l.b16 %v3021
        %v3058 = vunpack.c.l.b16 %v3022
        %v3059 = vunpack.c.l.b16 %v3023
        %v3060 = vunpack.c.l.b16 %v3024
        %v3061 = vunpack.c.l.b16 %v3025
        %v3062 = vunpack.c.l.b16 %v3026
        %v3063 = vunpack.c.l.b16 %v3027
        %v3064 = vunpack.c.l.b16 %v3028
        %v3065 = vunpack.c.l.b16 %v3029
        %v3066 = vunpack.c.l.b16 %v3030
        %v3067 = vpack.c.b16 %v3052, %v3051
        %v3068 = vpack.c.b16 %v3054, %v3053
        %v3069 = vpack.c.b16 %v3056, %v3055
        %v3070 = vpack.c.b16 %v3058, %v3057
        %v3071 = vpack.c.b16 %v3060, %v3059
        %v3072 = vpack.c.b16 %v3062, %v3061
        %v3073 = vpack.c.b16 %v3064, %v3063
        %v3074 = vpack.c.b16 %v3066, %v3065
        %3083 = vmatprep.subr.bf16.mxu0 0
        %3084 = vmatpush1.bf16.msra.mxu0 %v3067
        %3085 = vmatprep.subr.bf16.mxu0 0
        %3086 = vmatpush1.bf16.msra.mxu0 %v3068
        %3087 = vmatprep.subr.bf16.mxu0 0
        %3088 = vmatpush1.bf16.msra.mxu0 %v3069
        %3089 = vmatprep.subr.bf16.mxu0 0
        %3090 = vmatpush1.bf16.msra.mxu0 %v3070
        %3091 = vmatprep.subr.bf16.mxu0 0
        %3092 = vmatpush1.bf16.msra.mxu0 %v3071
        %3093 = vmatprep.subr.bf16.mxu0 0
        %3094 = vmatpush1.bf16.msra.mxu0 %v3072
        %3095 = vmatprep.subr.bf16.mxu0 0
        %3096 = vmatpush1.bf16.msra.mxu0 %v3073
        %3097 = vmatprep.subr.bf16.mxu0 0
        %3098 = vmatpush1.bf16.msra.mxu0 %v3074
        %3099 = vmatprep.subr.bf16.mxu0 0
        %3100 = vmatpush1.bf16.msra.mxu0 0
        %3101 = vmatprep.subr.bf16.mxu0 0
        %3102 = vmatpush1.bf16.msra.mxu0 0
        %3103 = vmatprep.subr.bf16.mxu0 0
        %3104 = vmatpush1.bf16.msra.mxu0 0
        %3105 = vmatprep.subr.bf16.mxu0 0
        %3106 = vmatpush1.bf16.msra.mxu0 0
        %3107 = vmatprep.subr.bf16.mxu0 0
        %3108 = vmatpush1.bf16.msra.mxu0 0
        %3109 = vmatprep.subr.bf16.mxu0 0
        %3110 = vmatpush1.bf16.msra.mxu0 0
        %3111 = vmatprep.subr.bf16.mxu0 0
        %3112 = vmatpush1.bf16.msra.mxu0 0
        %3113 = vmatprep.subr.bf16.mxu0 0
        %3114 = vmatpush1.bf16.msra.mxu0 0
        %3115 = vmatprep.mubr.bf16.mxu0 0
        %3116 = vmatmul.mubr.bf16.gmra.mrb[0].mxu0 %v3031
        %v3117 = vpop.f32.mrb[0].mxu0
        %v3118 = vadd.f32 0.0, %v3117
        %v3119 = vpop.f32.mrb[0].mxu0
        %v3120 = vpop.f32.mrb[0].mxu0
        %v3121 = vadd.f32 0.0, %v3120
        %v3122 = vpop.f32.mrb[0].mxu0
        %3123 = vmatprep.mubr.bf16.mxu0 0
        %3124 = vmatmul.mubr.bf16.gmra.mrb[0].mxu0 %v3032
        %v3125 = vpop.f32.mrb[0].mxu0
        %v3126 = vadd.f32 0.0, %v3125
        %v3127 = vpop.f32.mrb[0].mxu0
        %v3128 = vpop.f32.mrb[0].mxu0
        %v3129 = vadd.f32 0.0, %v3128
        %v3130 = vpop.f32.mrb[0].mxu0
        %3131 = vmatprep.mubr.bf16.mxu0 0
        %3132 = vmatmul.mubr.bf16.gmra.mrb[0].mxu0 %v3033
        %v3133 = vpop.f32.mrb[0].mxu0
        %v3134 = vadd.f32 0.0, %v3133
        %v3135 = vpop.f32.mrb[0].mxu0
        %v3136 = vpop.f32.mrb[0].mxu0
        %v3137 = vadd.f32 0.0, %v3136
        %v3138 = vpop.f32.mrb[0].mxu0
        %3139 = vmatprep.mubr.bf16.mxu0 0
        %3140 = vmatmul.mubr.bf16.gmra.mrb[0].mxu0 %v3034
        %v3141 = vpop.f32.mrb[0].mxu0
        %v3142 = vadd.f32 0.0, %v3141
        %v3143 = vpop.f32.mrb[0].mxu0
        %v3144 = vpop.f32.mrb[0].mxu0
        %v3145 = vadd.f32 0.0, %v3144
        %v3146 = vpop.f32.mrb[0].mxu0
        %3147 = vdwg.mxu0
        %v3148 = vld [vmem:[%s315 + $0x2] sm:$0x1]
        %v3149 = vld [vmem:[%s315 + $0x3] sm:$0x1]
        %3150 = vadd.xlane.f32.xlu0 %v3118
        %v3151 = vpop.xlane.xlu0 %3150
        %3152 = vadd.xlane.f32.xlu0 %v3121
        %v3153 = vpop.xlane.xlu0 %3152
        %3154 = vadd.xlane.f32.xlu0 %v3126
        %v3155 = vpop.xlane.xlu0 %3154
        %3156 = vadd.xlane.f32.xlu0 %v3129
        %v3157 = vpop.xlane.xlu0 %3156
        %3158 = vadd.xlane.f32.xlu0 %v3134
        %v3159 = vpop.xlane.xlu0 %3158
        %3160 = vadd.xlane.f32.xlu0 %v3137
        %v3161 = vpop.xlane.xlu0 %3160
        %3162 = vadd.xlane.f32.xlu0 %v3142
        %v3163 = vpop.xlane.xlu0 %3162
        %3164 = vadd.xlane.f32.xlu0 %v3145
        %v3165 = vpop.xlane.xlu0 %3164
        %v3166 = vrcp.pop 128.0
        %v3167 = vmul.f32 %v3151, %v3166
        %v3168 = vmul.f32 %v3153, %v3166
        %v3169 = vmul.f32 %v3155, %v3166
        %v3170 = vmul.f32 %v3157, %v3166
        %v3171 = vmul.f32 %v3159, %v3166
        %v3172 = vmul.f32 %v3161, %v3166
        %v3173 = vmul.f32 %v3163, %v3166
        %v3174 = vmul.f32 %v3165, %v3166
        %v3175 = vsub.f32 %v3118, %v3167
        %v3176 = vsub.f32 %v3121, %v3168
        %v3177 = vsub.f32 %v3126, %v3169
        %v3178 = vsub.f32 %v3129, %v3170
        %v3179 = vsub.f32 %v3134, %v3171
        %v3180 = vsub.f32 %v3137, %v3172
        %v3181 = vsub.f32 %v3142, %v3173
        %v3182 = vsub.f32 %v3145, %v3174
        %v3183 = vmul.f32 %v3175, %v3175
        %v3184 = vmul.f32 %v3176, %v3176
        %v3185 = vmul.f32 %v3177, %v3177
        %v3186 = vmul.f32 %v3178, %v3178
        %v3187 = vmul.f32 %v3179, %v3179
        %v3188 = vmul.f32 %v3180, %v3180
        %v3189 = vmul.f32 %v3181, %v3181
        %v3190 = vmul.f32 %v3182, %v3182
        %3191 = vadd.xlane.f32.xlu0 %v3183
        %v3192 = vpop.xlane.xlu0 %3191
        %3193 = vadd.xlane.f32.xlu0 %v3184
        %v3194 = vpop.xlane.xlu0 %3193
        %3195 = vadd.xlane.f32.xlu0 %v3185
        %v3196 = vpop.xlane.xlu0 %3195
        %3197 = vadd.xlane.f32.xlu0 %v3186
        %v3198 = vpop.xlane.xlu0 %3197
        %3199 = vadd.xlane.f32.xlu0 %v3187
        %v3200 = vpop.xlane.xlu0 %3199
        %3201 = vadd.xlane.f32.xlu0 %v3188
        %v3202 = vpop.xlane.xlu0 %3201
        %3203 = vadd.xlane.f32.xlu0 %v3189
        %v3204 = vpop.xlane.xlu0 %3203
        %3205 = vadd.xlane.f32.xlu0 %v3190
        %v3206 = vpop.xlane.xlu0 %3205
        %v3207 = vmul.f32 %v3192, %v3166
        %v3208 = vmul.f32 %v3194, %v3166
        %v3209 = vmul.f32 %v3196, %v3166
        %v3210 = vmul.f32 %v3198, %v3166
        %v3211 = vmul.f32 %v3200, %v3166
        %v3212 = vmul.f32 %v3202, %v3166
        %v3213 = vmul.f32 %v3204, %v3166
        %v3214 = vmul.f32 %v3206, %v3166
        %v3215 = vadd.f32 %v3207, 1e-05
        %v3216 = vadd.f32 %v3208, 1e-05
        %v3217 = vadd.f32 %v3209, 1e-05
        %v3218 = vadd.f32 %v3210, 1e-05
        %v3219 = vadd.f32 %v3211, 1e-05
        %v3220 = vadd.f32 %v3212, 1e-05
        %v3221 = vadd.f32 %v3213, 1e-05
        %v3222 = vadd.f32 %v3214, 1e-05
        %v3223 = vrsqrt.pop %v3215
        %v3224 = vrsqrt.pop %v3216
        %v3225 = vrsqrt.pop %v3217
        %v3226 = vrsqrt.pop %v3218
        %v3227 = vrsqrt.pop %v3219
        %v3228 = vrsqrt.pop %v3220
        %v3229 = vrsqrt.pop %v3221
        %v3230 = vrsqrt.pop %v3222
        %v3231 = vmul.f32 %v3175, %v3223
        %v3232 = vmul.f32 %v3176, %v3224
        %v3233 = vmul.f32 %v3177, %v3225
        %v3234 = vmul.f32 %v3178, %v3226
        %v3235 = vmul.f32 %v3179, %v3227
        %v3236 = vmul.f32 %v3180, %v3228
        %v3237 = vmul.f32 %v3181, %v3229
        %v3238 = vmul.f32 %v3182, %v3230
        %v3239 = vlaneseq
        %v3240 = vshrl.u32 %v3239, 7
        %v3241 = vsub.s32 0, %v3240
        %v3242 = vrot.slane %v3148, %v3241
        %v3243 = vmul.f32 %v3231, %v3242
        %v3244 = vmul.f32 %v3232, %v3242
        %v3245 = vmul.f32 %v3233, %v3242
        %v3246 = vmul.f32 %v3234, %v3242
        %v3247 = vmul.f32 %v3235, %v3242
        %v3248 = vmul.f32 %v3236, %v3242
        %v3249 = vmul.f32 %v3237, %v3242
        %v3250 = vmul.f32 %v3238, %v3242
        %v3251 = vlaneseq
        %v3252 = vshrl.u32 %v3251, 7
        %v3253 = vsub.s32 0, %v3252
        %v3254 = vrot.slane %v3149, %v3253
        %v3255 = vadd.f32 %v3243, %v3254
        %v3256 = vadd.f32 %v3244, %v3254
        %v3257 = vadd.f32 %v3245, %v3254
        %v3258 = vadd.f32 %v3246, %v3254
        %v3259 = vadd.f32 %v3247, %v3254
        %v3260 = vadd.f32 %v3248, %v3254
        %v3261 = vadd.f32 %v3249, %v3254
        %v3262 = vadd.f32 %v3250, %v3254
        %v3263 = vadd.f32 %v3255, %v1125
        %v3264 = vadd.f32 %v3256, %v1126
        %v3265 = vadd.f32 %v3257, %v1127
        %v3266 = vadd.f32 %v3258, %v1128
        %v3267 = vadd.f32 %v3259, %v1129
        %v3268 = vadd.f32 %v3260, %v1130
        %v3269 = vadd.f32 %v3261, %v1131
        %v3270 = vadd.f32 %v3262, %v1132
        %v3271 = vmax.f32 %v3263, 0.0
        %v3272 = vmax.f32 %v3264, 0.0
        %v3273 = vmax.f32 %v3265, 0.0
        %v3274 = vmax.f32 %v3266, 0.0
        %v3275 = vmax.f32 %v3267, 0.0
        %v3276 = vmax.f32 %v3268, 0.0
        %v3277 = vmax.f32 %v3269, 0.0
        %v3278 = vmax.f32 %v3270, 0.0
        %3279 = vst [vmem:[#allocation9] sm:$0xff] %v3271
        %3280 = vst [vmem:[#allocation9 + $0x8] sm:$0xff] %v3272
        %3281 = vst [vmem:[#allocation9 + $0x10] sm:$0xff] %v3273
        %3282 = vst [vmem:[#allocation9 + $0x18] sm:$0xff] %v3274
        %3283 = vst [vmem:[#allocation9 + $0x20] sm:$0xff] %v3275
        %3284 = vst [vmem:[#allocation9 + $0x28] sm:$0xff] %v3276
        %3285 = vst [vmem:[#allocation9 + $0x30] sm:$0xff] %v3277
        %3286 = vst [vmem:[#allocation9 + $0x38] sm:$0xff] %v3278
        // Predicated region
        $region69: #{mapnet_pallas.1} parent=47 // pred_check
          %p3287 = pneg %p191
        $region70: #{mapnet_pallas.1} parent=47 // pred_check_branch
          %3289 = sbr.rel (%p3287) target = $region72
        $region71: #{mapnet_pallas.1} parent=47 // pred_region
          %s3291 = ssub.s32 1024, 1024
          %3292 = vsyncadd [#allocation4], %s3291
          %s3293 = sshll.u32 [#allocation9], 4
          %s3294 = int_to_ptr.vmem [resolvable:$true] %s3293
          %3299 = dma.vmem_to_hbm [thread:$0]  %s3294, 1024, %s7, [#allocation4], 128, 128, 8
        $region72: #{mapnet_pallas.1} parent=47 // pred_fallthru
          _
        // Predicated region
        $region73: #{mapnet_pallas.1} parent=47 // pred_check
          %p3300 = pneg %p191
        $region74: #{mapnet_pallas.1} parent=47 // pred_check_branch
          %3302 = sbr.rel (%p3300) target = $region76
        $region75: #{mapnet_pallas.1} parent=47 // pred_region
          %3303 = dma.done [#allocation4], 1024
        $region76: #{mapnet_pallas.1} parent=47 // pred_fallthru
          _
      $region48: #{mapnet_pallas.1} parent=5 // pred_fallthru
        _
      %p3304 = scmp.le.s32.totalorder 2, %s16
      // Predicated region
      $region77: #{mapnet_pallas.1} parent=5 // pred_check
        %p3305 = pneg %p3304
      $region78: #{mapnet_pallas.1} parent=5 // pred_check_branch
        %3307 = sbr.rel (%p3305) target = $region80
      $region79: #{mapnet_pallas.1} parent=5 // pred_region
        %s3308 = ssub.s32 %s16, 2
      $region80: #{mapnet_pallas.1} parent=5 // pred_fallthru
        _
    $region6: #{mapnet_pallas.1} parent=1 // loop_footer
      %s20 = sadd.s32 1, %s16
    $region7: #{mapnet_pallas.1} parent=1 // loop_footer_branch
      %15 = sbr.rel target = $region3
    $region8: #{mapnet_pallas.1} parent=1 // loop_exit
      _
    %3309 = vsyncpa [#allocation3], 1
    %s3310 = scalar_lea.sflag [#allocation3], 1
    %3311 = vsyncpa %s3310, 1
    %3312 = vsyncpa [#allocation6], 1
    %3313 = vsyncpa [#allocation4], 1
    %s3314 = scalar_lea.sflag [#allocation4], 1
    %3315 = vsyncpa %s3314, 1

</llo_original>
